<compile_context>
chip_gen: v7x
topology: tpu7x:2x2x1
jax: 0.10.0
libtpu: 0.0.40
codegen_flags: <defaults>
</compile_context>

<pallas_src>
import functools

import jax
import jax.numpy as jnp
from jax.experimental import pallas as pl
from jax.experimental.pallas import tpu as pltpu


# ---------------------------------------------------------------------------
# Pallas kernel: one batch tile of the full beta-VAE forward.
# ---------------------------------------------------------------------------
def _beta_vae_kernel(
    x_ref, eps_ref,
    w1_ref, b1_ref,        # encoder hidden
    w23_ref, b23_ref,      # fused [mu | log_sigma] head
    w4_ref, b4_ref,        # decoder hidden
    w5_ref, b5_ref,        # decoder output
    recon_ref, ms_ref,
    *, latent_dim,
):
    L = latent_dim

    # ---- encoder hidden: cast f32 x -> bf16 in-kernel, f32 accumulation ----
    x = x_ref[...].astype(jnp.bfloat16)
    h = jnp.dot(x, w1_ref[...], preferred_element_type=jnp.float32) + b1_ref[...]
    h = jnp.maximum(h, 0.0)                                        # ReLU (f32)

    # ---- fused mu / log-sigma head (single (H, 2L) matmul, not padded) ----
    ms = jnp.dot(h.astype(jnp.bfloat16), w23_ref[...],
                 preferred_element_type=jnp.float32) + b23_ref[...]
    mu = ms[:, :L]
    log_sigma = ms[:, L:]
    # TODO(synk): log_sigma is unclamped to match reference semantics; a large
    # pre-activation can overflow exp() exactly as in the PyTorch module.
    sigma = jnp.exp(log_sigma)

    # reparameterization: z = mu + sigma * eps,  eps ~ N(0, 1)
    z = mu + sigma * eps_ref[...]

    # ---- decoder ----
    d = jnp.dot(z.astype(jnp.bfloat16), w4_ref[...],
                preferred_element_type=jnp.float32) + b4_ref[...]
    d = jnp.maximum(d, 0.0)                                        # ReLU (f32)
    logits = jnp.dot(d.astype(jnp.bfloat16), w5_ref[...],
                     preferred_element_type=jnp.float32) + b5_ref[...]
    # Sigmoid kept in f32 (correct on v5e's f32-only EUP); only the store is
    # bf16 — that is where the HBM-traffic win is.
    recon = jax.nn.sigmoid(logits)

    # ---- outputs ----
    recon_ref[...] = recon.astype(recon_ref.dtype)      # bf16, lane-dense (D)
    ms_ref[...] = ms.astype(ms_ref.dtype)               # raw (mu | log_sigma)


# ---------------------------------------------------------------------------
# Parameter setup (weights kept in bf16 for the MXU, biases in f32).
# ---------------------------------------------------------------------------
def init_params(key, in_dim, hidden_dim, latent_dim):
    """Deterministic synthetic parameters (fan-in scaled normal)."""
    ks = jax.random.split(key, 10)

    def lin(kw, kb, fan_in, fan_out):
        scale = 1.0 / jnp.sqrt(jnp.float32(fan_in))
        w = jax.random.normal(kw, (fan_in, fan_out), jnp.float32) * scale
        b = jax.random.normal(kb, (1, fan_out), jnp.float32) * scale
        return w, b

    w1, b1 = lin(ks[0], ks[1], in_dim, hidden_dim)       # encoder hidden
    w2, b2 = lin(ks[2], ks[3], hidden_dim, latent_dim)   # mu head
    w3, b3 = lin(ks[4], ks[5], hidden_dim, latent_dim)   # log-sigma head
    w4, b4 = lin(ks[6], ks[7], latent_dim, hidden_dim)   # decoder hidden
    w5, b5 = lin(ks[8], ks[9], hidden_dim, in_dim)       # decoder output

    # Fuse the mu / log-sigma heads into a single (H, 2L) matmul.
    w23 = jnp.concatenate([w2, w3], axis=1)
    b23 = jnp.concatenate([b2, b3], axis=1)

    bf16 = jnp.bfloat16
    return (w1.astype(bf16), b1,
            w23.astype(bf16), b23,
            w4.astype(bf16), b4,
            w5.astype(bf16), b5)


def _pick_batch_tile(batch, max_tile=512):
    """Largest preferred tile (multiple of 8) that divides the batch."""
    for cand in (1024, 512, 256, 128, 64, 32, 16, 8):
        if cand <= max_tile and batch % cand == 0:
            return cand
    return batch   # tiny / odd batch -> single full block (still legal)


# ---------------------------------------------------------------------------
# Wrapper: pallas_call + trivial O(B*L) epilogue (exp / KL) in JAX.
# ---------------------------------------------------------------------------
def beta_vae_forward(x_nchw, eps, params, *, max_batch_tile=512):
    """x_nchw: (B, C, H, W) float32; eps: (B, latent_dim) float32."""
    B, C, H, W = x_nchw.shape
    D = C * H * W
    L = eps.shape[-1]
    w1, b1, w23, b23, w4, b4, w5, b5 = params
    Hd = w1.shape[1]

    TB = _pick_batch_tile(B, max_batch_tile)
    num_tiles = B // TB

    # Row-major flatten only (same as torch.flatten); no dtype pass over x —
    # the bf16 cast happens inside the kernel right before the first matmul.
    x_flat = x_nchw.reshape(B, D)

    kernel = functools.partial(_beta_vae_kernel, latent_dim=L)

    # Batch-tiled operands follow the grid; weights use a constant block index
    # (fetched once, kept VMEM-resident across grid steps).
    # NOTE(v7x scaling): for image-scale D / Hd, single-buffer the weight
    # specs (pipeline_mode=pl.Buffered(1)) and/or add an 'arbitrary' K-split
    # axis over D; unnecessary at D = Hd = 256.
    in_specs = [
        pl.BlockSpec((TB, D), lambda i: (i, 0)),        # x (f32)
        pl.BlockSpec((TB, L), lambda i: (i, 0)),        # eps
        pl.BlockSpec((D, Hd), lambda i: (0, 0)),        # w1
        pl.BlockSpec((1, Hd), lambda i: (0, 0)),        # b1
        pl.BlockSpec((Hd, 2 * L), lambda i: (0, 0)),    # w23 (fused heads)
        pl.BlockSpec((1, 2 * L), lambda i: (0, 0)),     # b23
        pl.BlockSpec((L, Hd), lambda i: (0, 0)),        # w4
        pl.BlockSpec((1, Hd), lambda i: (0, 0)),        # b4
        pl.BlockSpec((Hd, D), lambda i: (0, 0)),        # w5
        pl.BlockSpec((1, D), lambda i: (0, 0)),         # b5
    ]
    out_specs = (
        pl.BlockSpec((TB, D), lambda i: (i, 0)),        # reconstruction (bf16)
        pl.BlockSpec((TB, 2 * L), lambda i: (i, 0)),    # ms = [mu | log_sigma]
    )
    out_shape = (
        jax.ShapeDtypeStruct((B, D), jnp.bfloat16),
        jax.ShapeDtypeStruct((B, 2 * L), jnp.float32),
    )

    # Advisory cost hint so XLA schedules surrounding ops sensibly.
    weight_bytes = 2 * (D * Hd + Hd * 2 * L + L * Hd + Hd * D) \
        + 4 * (Hd + 2 * L + Hd + D)
    cost = pl.CostEstimate(
        flops=2 * B * (D * Hd + Hd * 2 * L + L * Hd + Hd * D),
        transcendentals=B * (L + D),                    # exp + sigmoid
        bytes_accessed=4 * B * D + 4 * B * L + weight_bytes
        + 2 * B * D + 4 * B * 2 * L,
    )

    recon_flat, ms = pl.pallas_call(
        kernel,
        grid=(num_tiles,),
        in_specs=in_specs,
        out_specs=out_specs,
        out_shape=out_shape,
        compiler_params=pltpu.CompilerParams(
            dimension_semantics=("parallel",),          # megacore on v7x
            vmem_limit_bytes=32 * 1024 * 1024,          # v5e default is 16 MiB
        ),
        cost_estimate=cost,
    )(x_flat, eps, w1, b1, w23, b23, w4, b4, w5, b5)

    mu = ms[:, :L]
    log_sigma = ms[:, L:]
    sigma = jnp.exp(log_sigma)

    # KL divergence, summed over batch and latent dims (torch .sum()); uses
    # the pre-activation log_sigma directly (no log(exp(.)) round trip).
    # TODO(synk): beta weighting of the KL happens in the training loop of the
    # reference code, not inside forward, so it is omitted here.
    kl = jnp.sum(sigma * sigma + mu * mu - log_sigma - 0.5)

    reconstructed = recon_flat.astype(jnp.float32).reshape(B, C, H, W)
    return reconstructed, mu, sigma, kl


# ---------------------------------------------------------------------------
# Pure-JAX reference (mirrors the kernel's dtype handling) for a sanity check.
# ---------------------------------------------------------------------------
def _reference_forward(x_nchw, eps, params):
    B = x_nchw.shape[0]
    w1, b1, w23, b23, w4, b4, w5, b5 = params
    L = eps.shape[-1]
    x = x_nchw.reshape(B, -1).astype(jnp.bfloat16)
    h = jnp.maximum(jnp.dot(x, w1, preferred_element_type=jnp.float32) + b1, 0.0)
    ms = jnp.dot(h.astype(jnp.bfloat16), w23,
                 preferred_element_type=jnp.float32) + b23
    mu, log_sigma = ms[:, :L], ms[:, L:]
    sigma = jnp.exp(log_sigma)
    z = mu + sigma * eps
    kl = jnp.sum(sigma * sigma + mu * mu - log_sigma - 0.5)
    d = jnp.maximum(jnp.dot(z.astype(jnp.bfloat16), w4,
                            preferred_element_type=jnp.float32) + b4, 0.0)
    logits = jnp.dot(d.astype(jnp.bfloat16), w5,
                     preferred_element_type=jnp.float32) + b5
    recon = jax.nn.sigmoid(logits).reshape(x_nchw.shape)
    return recon, mu, sigma, kl


if __name__ == "__main__":
    # Demo: TB=512 -> 4 grid steps (>=2 per TensorCore on v7x, exercises the
    # batch-pipelined / megacore-parallel path).  HIDDEN is a multiple of 256
    # to fill the v6e/v7x MXU.  Total data stays tiny (~4 MiB).
    B, C, H, W = 2048, 1, 16, 16
    LATENT = 8
    HIDDEN = 256
    D = C * H * W

    key = jax.random.PRNGKey(0)
    k_x, k_eps, k_p = jax.random.split(key, 3)

    x = jax.random.uniform(k_x, (B, C, H, W), jnp.float32)      # image-like input
    eps = jax.random.normal(k_eps, (B, LATENT), jnp.float32)    # N(0,1) sample
    params = init_params(k_p, D, HIDDEN, LATENT)

    recon, mu, sigma, kl = jax.block_until_ready(
        beta_vae_forward(x, eps, params)
    )

    # Shape / finiteness checks.
    assert recon.shape == (B, C, H, W)
    assert mu.shape == (B, LATENT)
    assert sigma.shape == (B, LATENT)
    assert kl.shape == ()
    assert bool(jnp.all(jnp.isfinite(recon)))
    assert bool(jnp.all(sigma > 0))
    assert bool(jnp.isfinite(kl))

    # Numerical sanity check against a pure-JAX reference.  recon is stored in
    # bf16 by the kernel, so tolerances account for the ~2^-8 rounding.
    r_recon, r_mu, r_sigma, r_kl = jax.block_until_ready(
        _reference_forward(x, eps, params)
    )
    assert bool(jnp.max(jnp.abs(recon - r_recon)) < 2e-2)
    assert bool(jnp.max(jnp.abs(mu - r_mu)) < 2e-2)
    assert bool(jnp.max(jnp.abs(sigma - r_sigma)) < 5e-2)
    assert bool(jnp.abs(kl - r_kl) < 1e-2 * jnp.abs(r_kl) + 1.0)

    print("KERNEL_OK")
</pallas_src>

<mosaic_0001>
module attributes {stable_mosaic.version = 11 : i64} {
  func.func @_beta_vae_kernel(%arg0: i32, %arg1: memref<512x256xf32, #tpu.memory_space<vmem>>, %arg2: memref<512x8xf32, #tpu.memory_space<vmem>>, %arg3: memref<256x256xbf16, #tpu.memory_space<vmem>>, %arg4: memref<1x256xf32, #tpu.memory_space<vmem>>, %arg5: memref<256x16xbf16, #tpu.memory_space<vmem>>, %arg6: memref<1x16xf32, #tpu.memory_space<vmem>>, %arg7: memref<8x256xbf16, #tpu.memory_space<vmem>>, %arg8: memref<1x256xf32, #tpu.memory_space<vmem>>, %arg9: memref<256x256xbf16, #tpu.memory_space<vmem>>, %arg10: memref<1x256xf32, #tpu.memory_space<vmem>>, %arg11: memref<512x256xbf16, #tpu.memory_space<vmem>>, %arg12: memref<512x16xf32, #tpu.memory_space<vmem>>) attributes {dimension_semantics = [#tpu.dimension_semantics<parallel>], iteration_bounds = array<i64: 4>, scalar_prefetch = 0 : i64, scratch_operands = 0 : i64, tpu.core_type = #tpu.core_type<tc>, window_params = [{transform_indices = @transform_0, window_bounds = array<i64: 512, 256>}, {transform_indices = @transform_1, window_bounds = array<i64: 512, 8>}, {pipeline_mode = #tpu.pipeline_mode<synchronous>, transform_indices = @transform_2, window_bounds = array<i64: 256, 256>}, {pipeline_mode = #tpu.pipeline_mode<synchronous>, transform_indices = @transform_3, window_bounds = array<i64: 1, 256>}, {pipeline_mode = #tpu.pipeline_mode<synchronous>, transform_indices = @transform_4, window_bounds = array<i64: 256, 16>}, {pipeline_mode = #tpu.pipeline_mode<synchronous>, transform_indices = @transform_5, window_bounds = array<i64: 1, 16>}, {pipeline_mode = #tpu.pipeline_mode<synchronous>, transform_indices = @transform_6, window_bounds = array<i64: 8, 256>}, {pipeline_mode = #tpu.pipeline_mode<synchronous>, transform_indices = @transform_7, window_bounds = array<i64: 1, 256>}, {pipeline_mode = #tpu.pipeline_mode<synchronous>, transform_indices = @transform_8, window_bounds = array<i64: 256, 256>}, {pipeline_mode = #tpu.pipeline_mode<synchronous>, transform_indices = @transform_9, window_bounds = array<i64: 1, 256>}, {transform_indices = @transform_10, window_bounds = array<i64: 512, 256>}, {transform_indices = @transform_11, window_bounds = array<i64: 512, 16>}]} {
    %c0 = arith.constant 0 : index
    %c0_0 = arith.constant 0 : index
    %0 = vector.load %arg1[%c0, %c0_0] : memref<512x256xf32, #tpu.memory_space<vmem>>, vector<512x256xf32>
    %1 = arith.truncf %0 : vector<512x256xf32> to vector<512x256xbf16>
    %c0_1 = arith.constant 0 : index
    %c0_2 = arith.constant 0 : index
    %2 = vector.load %arg3[%c0_1, %c0_2] : memref<256x256xbf16, #tpu.memory_space<vmem>>, vector<256x256xbf16>
    %cst = arith.constant dense<0.000000e+00> : vector<512x256xf32>
    %3 = tpu.matmul %1, %2, %cst {dimension_numbers = #tpu.dot_dimension_numbers<[1], [0], [0], [1], [0, 0, 1, 1], [], []>} : vector<512x256xbf16>, vector<256x256xbf16>, vector<512x256xf32> -> vector<512x256xf32>
    %c0_3 = arith.constant 0 : index
    %c0_4 = arith.constant 0 : index
    %4 = vector.load %arg4[%c0_3, %c0_4] : memref<1x256xf32, #tpu.memory_space<vmem>>, vector<1x256xf32>
    %5 = vector.broadcast %4 : vector<1x256xf32> to vector<512x256xf32>
    %6 = arith.addf %3, %5 : vector<512x256xf32>
    %cst_5 = arith.constant 0.000000e+00 : f32
    %7 = vector.broadcast %cst_5 : f32 to vector<512x256xf32>
    %8 = arith.maximumf %6, %7 : vector<512x256xf32>
    %9 = arith.truncf %8 : vector<512x256xf32> to vector<512x256xbf16>
    %c0_6 = arith.constant 0 : index
    %c0_7 = arith.constant 0 : index
    %10 = vector.load %arg5[%c0_6, %c0_7] : memref<256x16xbf16, #tpu.memory_space<vmem>>, vector<256x16xbf16>
    %cst_8 = arith.constant dense<0.000000e+00> : vector<512x16xf32>
    %11 = tpu.matmul %9, %10, %cst_8 {dimension_numbers = #tpu.dot_dimension_numbers<[1], [0], [0], [1], [0, 0, 1, 1], [], []>} : vector<512x256xbf16>, vector<256x16xbf16>, vector<512x16xf32> -> vector<512x16xf32>
    %c0_9 = arith.constant 0 : index
    %c0_10 = arith.constant 0 : index
    %12 = vector.load %arg6[%c0_9, %c0_10] : memref<1x16xf32, #tpu.memory_space<vmem>>, vector<1x16xf32>
    %13 = vector.broadcast %12 : vector<1x16xf32> to vector<512x16xf32>
    %14 = arith.addf %11, %13 : vector<512x16xf32>
    %15 = vector.extract_strided_slice %14 {offsets = [0, 0], sizes = [512, 8], strides = [1, 1]} : vector<512x16xf32> to vector<512x8xf32>
    %16 = vector.extract_strided_slice %14 {offsets = [0, 8], sizes = [512, 8], strides = [1, 1]} : vector<512x16xf32> to vector<512x8xf32>
    %17 = math.exp %16 : vector<512x8xf32>
    %c0_11 = arith.constant 0 : index
    %c0_12 = arith.constant 0 : index
    %18 = vector.load %arg2[%c0_11, %c0_12] : memref<512x8xf32, #tpu.memory_space<vmem>>, vector<512x8xf32>
    %19 = arith.mulf %17, %18 : vector<512x8xf32>
    %20 = arith.addf %15, %19 : vector<512x8xf32>
    %21 = arith.truncf %20 : vector<512x8xf32> to vector<512x8xbf16>
    %c0_13 = arith.constant 0 : index
    %c0_14 = arith.constant 0 : index
    %22 = vector.load %arg7[%c0_13, %c0_14] : memref<8x256xbf16, #tpu.memory_space<vmem>>, vector<8x256xbf16>
    %cst_15 = arith.constant dense<0.000000e+00> : vector<512x256xf32>
    %23 = tpu.matmul %21, %22, %cst_15 {dimension_numbers = #tpu.dot_dimension_numbers<[1], [0], [0], [1], [0, 0, 1, 1], [], []>} : vector<512x8xbf16>, vector<8x256xbf16>, vector<512x256xf32> -> vector<512x256xf32>
    %c0_16 = arith.constant 0 : index
    %c0_17 = arith.constant 0 : index
    %24 = vector.load %arg8[%c0_16, %c0_17] : memref<1x256xf32, #tpu.memory_space<vmem>>, vector<1x256xf32>
    %25 = vector.broadcast %24 : vector<1x256xf32> to vector<512x256xf32>
    %26 = arith.addf %23, %25 : vector<512x256xf32>
    %cst_18 = arith.constant 0.000000e+00 : f32
    %27 = vector.broadcast %cst_18 : f32 to vector<512x256xf32>
    %28 = arith.maximumf %26, %27 : vector<512x256xf32>
    %29 = arith.truncf %28 : vector<512x256xf32> to vector<512x256xbf16>
    %c0_19 = arith.constant 0 : index
    %c0_20 = arith.constant 0 : index
    %30 = vector.load %arg9[%c0_19, %c0_20] : memref<256x256xbf16, #tpu.memory_space<vmem>>, vector<256x256xbf16>
    %cst_21 = arith.constant dense<0.000000e+00> : vector<512x256xf32>
    %31 = tpu.matmul %29, %30, %cst_21 {dimension_numbers = #tpu.dot_dimension_numbers<[1], [0], [0], [1], [0, 0, 1, 1], [], []>} : vector<512x256xbf16>, vector<256x256xbf16>, vector<512x256xf32> -> vector<512x256xf32>
    %c0_22 = arith.constant 0 : index
    %c0_23 = arith.constant 0 : index
    %32 = vector.load %arg10[%c0_22, %c0_23] : memref<1x256xf32, #tpu.memory_space<vmem>>, vector<1x256xf32>
    %33 = vector.broadcast %32 : vector<1x256xf32> to vector<512x256xf32>
    %34 = arith.addf %31, %33 : vector<512x256xf32>
    %35 = arith.negf %34 : vector<512x256xf32>
    %36 = math.exp %35 : vector<512x256xf32>
    %cst_24 = arith.constant 1.000000e+00 : f32
    %37 = vector.broadcast %cst_24 : f32 to vector<512x256xf32>
    %38 = arith.addf %37, %36 : vector<512x256xf32>
    %39 = arith.divf %37, %38 : vector<512x256xf32>
    %40 = arith.truncf %39 : vector<512x256xf32> to vector<512x256xbf16>
    %c0_25 = arith.constant 0 : index
    %c0_26 = arith.constant 0 : index
    %41 = vector.load %arg11[%c0_25, %c0_26] : memref<512x256xbf16, #tpu.memory_space<vmem>>, vector<512x256xbf16>
    tpu.vector_store %arg11[%c0_25, %c0_26], %40 {strides = array<i32>} : memref<512x256xbf16, #tpu.memory_space<vmem>>, vector<512x256xbf16>,
    %c0_27 = arith.constant 0 : index
    %c0_28 = arith.constant 0 : index
    %42 = vector.load %arg12[%c0_27, %c0_28] : memref<512x16xf32, #tpu.memory_space<vmem>>, vector<512x16xf32>
    tpu.vector_store %arg12[%c0_27, %c0_28], %14 {strides = array<i32>} : memref<512x16xf32, #tpu.memory_space<vmem>>, vector<512x16xf32>,
    return
  }
  func.func @transform_0(%arg0: i32) -> (i32, i32) {
    %c0_i32 = arith.constant 0 : i32
    %c0_i32_0 = arith.constant 0 : i32
    return %arg0, %c0_i32 : i32, i32
  }
  func.func @transform_1(%arg0: i32) -> (i32, i32) {
    %c0_i32 = arith.constant 0 : i32
    %c0_i32_0 = arith.constant 0 : i32
    return %arg0, %c0_i32 : i32, i32
  }
  func.func @transform_2(%arg0: i32) -> (i32, i32) {
    %c0_i32 = arith.constant 0 : i32
    %c0_i32_0 = arith.constant 0 : i32
    %c0_i32_1 = arith.constant 0 : i32
    return %c0_i32, %c0_i32_0 : i32, i32
  }
  func.func @transform_3(%arg0: i32) -> (i32, i32) {
    %c0_i32 = arith.constant 0 : i32
    %c0_i32_0 = arith.constant 0 : i32
    %c0_i32_1 = arith.constant 0 : i32
    return %c0_i32, %c0_i32_0 : i32, i32
  }
  func.func @transform_4(%arg0: i32) -> (i32, i32) {
    %c0_i32 = arith.constant 0 : i32
    %c0_i32_0 = arith.constant 0 : i32
    %c0_i32_1 = arith.constant 0 : i32
    return %c0_i32, %c0_i32_0 : i32, i32
  }
  func.func @transform_5(%arg0: i32) -> (i32, i32) {
    %c0_i32 = arith.constant 0 : i32
    %c0_i32_0 = arith.constant 0 : i32
    %c0_i32_1 = arith.constant 0 : i32
    return %c0_i32, %c0_i32_0 : i32, i32
  }
  func.func @transform_6(%arg0: i32) -> (i32, i32) {
    %c0_i32 = arith.constant 0 : i32
    %c0_i32_0 = arith.constant 0 : i32
    %c0_i32_1 = arith.constant 0 : i32
    return %c0_i32, %c0_i32_0 : i32, i32
  }
  func.func @transform_7(%arg0: i32) -> (i32, i32) {
    %c0_i32 = arith.constant 0 : i32
    %c0_i32_0 = arith.constant 0 : i32
    %c0_i32_1 = arith.constant 0 : i32
    return %c0_i32, %c0_i32_0 : i32, i32
  }
  func.func @transform_8(%arg0: i32) -> (i32, i32) {
    %c0_i32 = arith.constant 0 : i32
    %c0_i32_0 = arith.constant 0 : i32
    %c0_i32_1 = arith.constant 0 : i32
    return %c0_i32, %c0_i32_0 : i32, i32
  }
  func.func @transform_9(%arg0: i32) -> (i32, i32) {
    %c0_i32 = arith.constant 0 : i32
    %c0_i32_0 = arith.constant 0 : i32
    %c0_i32_1 = arith.constant 0 : i32
    return %c0_i32, %c0_i32_0 : i32, i32
  }
  func.func @transform_10(%arg0: i32) -> (i32, i32) {
    %c0_i32 = arith.constant 0 : i32
    %c0_i32_0 = arith.constant 0 : i32
    return %arg0, %c0_i32 : i32, i32
  }
  func.func @transform_11(%arg0: i32) -> (i32, i32) {
    %c0_i32 = arith.constant 0 : i32
    %c0_i32_0 = arith.constant 0 : i32
    return %arg0, %c0_i32 : i32, i32
  }
}

</mosaic_0001>

<llo_original>
// kernel: tpu_custom_call.1
$region0: #{tpu_custom_call.1}
  #allocation0 [shape = 'u32[]', space=smem, size = 0x4, offset = 0x4, fixed_abs, tag = 'smem constant byte address 0x4 - core index']
  #allocation1 [shape = 'u32[144,128]{1,0:T(1,128)}', space=vmem, size = 0x12000, scoped, tag = 'internal scratch']
  %s0 = inlined_call_operand.hbm [shape: f32[2048,256], index: 0, kind: input, shape index: {}]
  %s1 = inlined_call_operand.vmem [shape: f32[2048,8], index: 1, kind: input, shape index: {}]
  %s2 = inlined_call_operand.hbm [shape: bf16[256,256], index: 2, kind: input, shape index: {}]
  %s3 = inlined_call_operand.hbm [shape: f32[1,256], index: 3, kind: input, shape index: {}]
  %s4 = inlined_call_operand.vmem [shape: bf16[256,16], index: 4, kind: input, shape index: {}]
  %s5 = inlined_call_operand.hbm [shape: f32[1,16], index: 5, kind: input, shape index: {}]
  %s6 = inlined_call_operand.hbm [shape: bf16[8,256], index: 6, kind: input, shape index: {}]
  %s7 = inlined_call_operand.hbm [shape: f32[1,256], index: 7, kind: input, shape index: {}]
  %s8 = inlined_call_operand.hbm [shape: bf16[256,256], index: 8, kind: input, shape index: {}]
  %s9 = inlined_call_operand.hbm [shape: f32[1,256], index: 9, kind: input, shape index: {}]
  %s10 = inlined_call_operand.hbm [shape: bf16[2048,256], index: 10, kind: output, shape index: {0}]
  %s11 = inlined_call_operand.vmem [shape: f32[2048,16], index: 11, kind: output, shape index: {1}]
  %12 = xla_tuple %s10, %s11
  %s13 = sld [smem:[#allocation0]]
  $region113: #{tpu_custom_call.1} parent=0
    _
  %s15 = ssub.s32 1, %s13
  %s16 = scalar_select 0, %s15, %s13
  $region1: #{tpu_custom_call.1} parent=0
    #allocation2 [shape = 'u8[1048576]{0}', space=vmem, size = 0x100000, scoped, tag = 'input window, operand 0']
    #allocation3 [shape = 's32[2]{0}', space=sflag, size = 0x8, scoped, tag = 'scoped memory for tpu_custom_call.1']
    #allocation4 [shape = 's32[2]{0}', space=sflag, size = 0x8, scoped, tag = 'scoped memory for tpu_custom_call.1']
    #allocation5 [shape = 'u8[131072]{0}', space=vmem, size = 0x20000, scoped, tag = 'input window, operand 2, single buffered']
    #allocation6 [shape = 's32[1]{0}', space=sflag, size = 0x4, scoped, tag = 'scoped memory for tpu_custom_call.1']
    #allocation7 [shape = 'u8[1024]{0}', space=vmem, size = 0x400, scoped, tag = 'input window, operand 3, single buffered']
    #allocation8 [shape = 'u8[512]{0}', space=vmem, size = 0x400, scoped, tag = 'input window, operand 5, single buffered']
    #allocation9 [shape = 's32[1]{0}', space=sflag, size = 0x4, scoped, tag = 'scoped memory for tpu_custom_call.1']
    #allocation10 [shape = 'u8[4096]{0}', space=vmem, size = 0x1000, scoped, tag = 'input window, operand 6, single buffered']
    #allocation11 [shape = 'u8[1024]{0}', space=vmem, size = 0x400, scoped, tag = 'input window, operand 7, single buffered']
    #allocation12 [shape = 's32[1]{0}', space=sflag, size = 0x4, scoped, tag = 'scoped memory for tpu_custom_call.1']
    #allocation13 [shape = 'u8[131072]{0}', space=vmem, size = 0x20000, scoped, tag = 'input window, operand 8, single buffered']
    #allocation14 [shape = 'u8[1024]{0}', space=vmem, size = 0x400, scoped, tag = 'input window, operand 9, single buffered']
    #allocation15 [shape = 's32[1]{0}', space=sflag, size = 0x4, scoped, tag = 'scoped memory for tpu_custom_call.1']
    #allocation16 [shape = 'u8[524288]{0}', space=vmem, size = 0x80000, scoped, tag = 'output window, operand 0']
    %17 = vsyncpa [#allocation3], 0
    %s18 = scalar_lea.sflag [#allocation3], 1
    %19 = vsyncpa %s18, 0
    %20 = vsyncpa [#allocation6], 0
    %21 = vsyncpa [#allocation9], 0
    %22 = vsyncpa [#allocation12], 0
    %23 = vsyncpa [#allocation15], 0
    %24 = vsyncpa [#allocation4], 0
    %s25 = scalar_lea.sflag [#allocation4], 1
    %26 = vsyncpa %s25, 0
    loop: start=0, step=1, limit=6
    $region2: #{tpu_custom_call.1} parent=1 // loop_pre_header
      _
    $region3: #{tpu_custom_call.1} parent=1 // loop_header
      %s28 = sphi 0, %s32
      %p29 = scmp.ge.s32.totalorder %s28, 6
      %s38 = sphi 0, %s40
      %s41 = sphi 0, %s38
      %s42 = sphi 0, %s41
      %s58 = sphi 0, %s42
      %s64 = sphi 0, %s66
      %s67 = sphi 0, %s64
      %s68 = sphi 0, %s67
      %s84 = sphi 0, %s68
      %s88 = sphi 0, %s88
      %s90 = sphi 0, %s88
      %s91 = sphi 0, %s90
      %s105 = sphi 0, %s91
      %s109 = sphi 0, %s109
      %s111 = sphi 0, %s109
      %s112 = sphi 0, %s111
      %s126 = sphi 0, %s112
      %s130 = sphi 0, %s130
      %s132 = sphi 0, %s130
      %s133 = sphi 0, %s132
      %s147 = sphi 0, %s133
      %s151 = sphi 0, %s151
      %s153 = sphi 0, %s151
      %s154 = sphi 0, %s153
      %s168 = sphi 0, %s154
      %s172 = sphi 0, %s172
      %s174 = sphi 0, %s172
      %s175 = sphi 0, %s174
      %s189 = sphi 0, %s175
      %s193 = sphi 0, %s193
      %s195 = sphi 0, %s193
      %s196 = sphi 0, %s195
      %s210 = sphi 0, %s196
      %s214 = sphi 0, %s214
      %s216 = sphi 0, %s214
      %s217 = sphi 0, %s216
      %s231 = sphi 0, %s217
      %s235 = sphi 0, %s235
      %s237 = sphi 0, %s235
      %s238 = sphi 0, %s237
      %s252 = sphi 0, %s238
      %s258 = sphi 0, %s260
      %s261 = sphi 0, %s258
      %s262 = sphi 0, %s261
      %s278 = sphi 0, %s262
      %s284 = sphi 0, %s286
      %s287 = sphi 0, %s284
      %s288 = sphi 0, %s287
      %s304 = sphi 0, %s288
    $region4: #{tpu_custom_call.1} parent=1 // loop_header_branch
      %31 = sbr.rel (%p29) target = $region8
    $region5: #{tpu_custom_call.1} parent=1 // loop_body
      %s33 = ssub.s32 %s28, 1
      %s34 = ssub.s32 %s28, 2
      %s35 = sadd.s32 %s28, 1
      %s36 = ssub.s32 %s28, %s35
      %p37 = scmp.eq.s32.totalorder %s36, 0
      %s39 = sadd.s32 %s38, 1
      %s40 = scalar_select %p37, %s38, %s39
      %p43 = pneg %p37
      %p44 = scmp.eq.s32.totalorder %s28, 3
      %p45 = por %p43, %p44
      %p46 = scmp.ne.s32.totalorder %s38, %s41
      %p47 = scmp.eq.s32.totalorder %s28, 0
      %p48 = por %p46, %p47
      %p49 = scmp.ne.s32.totalorder %s38, %s41
      %p50 = scmp.eq.s32.totalorder %s33, 3
      %p51 = por %p49, %p50
      %p52 = scmp.ne.s32.totalorder %s41, %s42
      %p53 = scmp.eq.s32.totalorder %s33, 0
      %p54 = por %p52, %p53
      %p55 = scmp.ne.s32.totalorder %s41, %s42
      %p56 = scmp.eq.s32.totalorder %s34, 3
      %p57 = por %p55, %p56
      %p59 = scmp.ne.s32.totalorder %s42, %s58
      %p60 = scmp.eq.s32.totalorder %s34, 0
      %p61 = por %p59, %p60
      %s62 = ssub.s32 %s28, %s35
      %p63 = scmp.eq.s32.totalorder %s62, 0
      %s65 = sadd.s32 %s64, 1
      %s66 = scalar_select %p63, %s64, %s65
      %p69 = pneg %p63
      %p70 = scmp.eq.s32.totalorder %s28, 3
      %p71 = por %p69, %p70
      %p72 = scmp.ne.s32.totalorder %s64, %s67
      %p73 = scmp.eq.s32.totalorder %s28, 0
      %p74 = por %p72, %p73
      %p75 = scmp.ne.s32.totalorder %s64, %s67
      %p76 = scmp.eq.s32.totalorder %s33, 3
      %p77 = por %p75, %p76
      %p78 = scmp.ne.s32.totalorder %s67, %s68
      %p79 = scmp.eq.s32.totalorder %s33, 0
      %p80 = por %p78, %p79
      %p81 = scmp.ne.s32.totalorder %s67, %s68
      %p82 = scmp.eq.s32.totalorder %s34, 3
      %p83 = por %p81, %p82
      %p85 = scmp.ne.s32.totalorder %s68, %s84
      %p86 = scmp.eq.s32.totalorder %s34, 0
      %p87 = por %p85, %p86
      %s89 = sadd.s32 %s88, 1
      %p92 = scmp.eq.s32.totalorder %s28, 3
      %p93 = scmp.ne.s32.totalorder %s88, %s90
      %p94 = scmp.eq.s32.totalorder %s28, 0
      %p95 = por %p93, %p94
      %p96 = scmp.ne.s32.totalorder %s88, %s90
      %p97 = scmp.eq.s32.totalorder %s33, 3
      %p98 = por %p96, %p97
      %p99 = scmp.ne.s32.totalorder %s90, %s91
      %p100 = scmp.eq.s32.totalorder %s33, 0
      %p101 = por %p99, %p100
      %p102 = scmp.ne.s32.totalorder %s90, %s91
      %p103 = scmp.eq.s32.totalorder %s34, 3
      %p104 = por %p102, %p103
      %p106 = scmp.ne.s32.totalorder %s91, %s105
      %p107 = scmp.eq.s32.totalorder %s34, 0
      %p108 = por %p106, %p107
      %s110 = sadd.s32 %s109, 1
      %p113 = scmp.eq.s32.totalorder %s28, 3
      %p114 = scmp.ne.s32.totalorder %s109, %s111
      %p115 = scmp.eq.s32.totalorder %s28, 0
      %p116 = por %p114, %p115
      %p117 = scmp.ne.s32.totalorder %s109, %s111
      %p118 = scmp.eq.s32.totalorder %s33, 3
      %p119 = por %p117, %p118
      %p120 = scmp.ne.s32.totalorder %s111, %s112
      %p121 = scmp.eq.s32.totalorder %s33, 0
      %p122 = por %p120, %p121
      %p123 = scmp.ne.s32.totalorder %s111, %s112
      %p124 = scmp.eq.s32.totalorder %s34, 3
      %p125 = por %p123, %p124
      %p127 = scmp.ne.s32.totalorder %s112, %s126
      %p128 = scmp.eq.s32.totalorder %s34, 0
      %p129 = por %p127, %p128
      %s131 = sadd.s32 %s130, 1
      %p134 = scmp.eq.s32.totalorder %s28, 3
      %p135 = scmp.ne.s32.totalorder %s130, %s132
      %p136 = scmp.eq.s32.totalorder %s28, 0
      %p137 = por %p135, %p136
      %p138 = scmp.ne.s32.totalorder %s130, %s132
      %p139 = scmp.eq.s32.totalorder %s33, 3
      %p140 = por %p138, %p139
      %p141 = scmp.ne.s32.totalorder %s132, %s133
      %p142 = scmp.eq.s32.totalorder %s33, 0
      %p143 = por %p141, %p142
      %p144 = scmp.ne.s32.totalorder %s132, %s133
      %p145 = scmp.eq.s32.totalorder %s34, 3
      %p146 = por %p144, %p145
      %p148 = scmp.ne.s32.totalorder %s133, %s147
      %p149 = scmp.eq.s32.totalorder %s34, 0
      %p150 = por %p148, %p149
      %s152 = sadd.s32 %s151, 1
      %p155 = scmp.eq.s32.totalorder %s28, 3
      %p156 = scmp.ne.s32.totalorder %s151, %s153
      %p157 = scmp.eq.s32.totalorder %s28, 0
      %p158 = por %p156, %p157
      %p159 = scmp.ne.s32.totalorder %s151, %s153
      %p160 = scmp.eq.s32.totalorder %s33, 3
      %p161 = por %p159, %p160
      %p162 = scmp.ne.s32.totalorder %s153, %s154
      %p163 = scmp.eq.s32.totalorder %s33, 0
      %p164 = por %p162, %p163
      %p165 = scmp.ne.s32.totalorder %s153, %s154
      %p166 = scmp.eq.s32.totalorder %s34, 3
      %p167 = por %p165, %p166
      %p169 = scmp.ne.s32.totalorder %s154, %s168
      %p170 = scmp.eq.s32.totalorder %s34, 0
      %p171 = por %p169, %p170
      %s173 = sadd.s32 %s172, 1
      %p176 = scmp.eq.s32.totalorder %s28, 3
      %p177 = scmp.ne.s32.totalorder %s172, %s174
      %p178 = scmp.eq.s32.totalorder %s28, 0
      %p179 = por %p177, %p178
      %p180 = scmp.ne.s32.totalorder %s172, %s174
      %p181 = scmp.eq.s32.totalorder %s33, 3
      %p182 = por %p180, %p181
      %p183 = scmp.ne.s32.totalorder %s174, %s175
      %p184 = scmp.eq.s32.totalorder %s33, 0
      %p185 = por %p183, %p184
      %p186 = scmp.ne.s32.totalorder %s174, %s175
      %p187 = scmp.eq.s32.totalorder %s34, 3
      %p188 = por %p186, %p187
      %p190 = scmp.ne.s32.totalorder %s175, %s189
      %p191 = scmp.eq.s32.totalorder %s34, 0
      %p192 = por %p190, %p191
      %s194 = sadd.s32 %s193, 1
      %p197 = scmp.eq.s32.totalorder %s28, 3
      %p198 = scmp.ne.s32.totalorder %s193, %s195
      %p199 = scmp.eq.s32.totalorder %s28, 0
      %p200 = por %p198, %p199
      %p201 = scmp.ne.s32.totalorder %s193, %s195
      %p202 = scmp.eq.s32.totalorder %s33, 3
      %p203 = por %p201, %p202
      %p204 = scmp.ne.s32.totalorder %s195, %s196
      %p205 = scmp.eq.s32.totalorder %s33, 0
      %p206 = por %p204, %p205
      %p207 = scmp.ne.s32.totalorder %s195, %s196
      %p208 = scmp.eq.s32.totalorder %s34, 3
      %p209 = por %p207, %p208
      %p211 = scmp.ne.s32.totalorder %s196, %s210
      %p212 = scmp.eq.s32.totalorder %s34, 0
      %p213 = por %p211, %p212
      %s215 = sadd.s32 %s214, 1
      %p218 = scmp.eq.s32.totalorder %s28, 3
      %p219 = scmp.ne.s32.totalorder %s214, %s216
      %p220 = scmp.eq.s32.totalorder %s28, 0
      %p221 = por %p219, %p220
      %p222 = scmp.ne.s32.totalorder %s214, %s216
      %p223 = scmp.eq.s32.totalorder %s33, 3
      %p224 = por %p222, %p223
      %p225 = scmp.ne.s32.totalorder %s216, %s217
      %p226 = scmp.eq.s32.totalorder %s33, 0
      %p227 = por %p225, %p226
      %p228 = scmp.ne.s32.totalorder %s216, %s217
      %p229 = scmp.eq.s32.totalorder %s34, 3
      %p230 = por %p228, %p229
      %p232 = scmp.ne.s32.totalorder %s217, %s231
      %p233 = scmp.eq.s32.totalorder %s34, 0
      %p234 = por %p232, %p233
      %s236 = sadd.s32 %s235, 1
      %p239 = scmp.eq.s32.totalorder %s28, 3
      %p240 = scmp.ne.s32.totalorder %s235, %s237
      %p241 = scmp.eq.s32.totalorder %s28, 0
      %p242 = por %p240, %p241
      %p243 = scmp.ne.s32.totalorder %s235, %s237
      %p244 = scmp.eq.s32.totalorder %s33, 3
      %p245 = por %p243, %p244
      %p246 = scmp.ne.s32.totalorder %s237, %s238
      %p247 = scmp.eq.s32.totalorder %s33, 0
      %p248 = por %p246, %p247
      %p249 = scmp.ne.s32.totalorder %s237, %s238
      %p250 = scmp.eq.s32.totalorder %s34, 3
      %p251 = por %p249, %p250
      %p253 = scmp.ne.s32.totalorder %s238, %s252
      %p254 = scmp.eq.s32.totalorder %s34, 0
      %p255 = por %p253, %p254
      %s256 = ssub.s32 %s28, %s35
      %p257 = scmp.eq.s32.totalorder %s256, 0
      %s259 = sadd.s32 %s258, 1
      %s260 = scalar_select %p257, %s258, %s259
      %p263 = pneg %p257
      %p264 = scmp.eq.s32.totalorder %s28, 3
      %p265 = por %p263, %p264
      %p266 = scmp.ne.s32.totalorder %s258, %s261
      %p267 = scmp.eq.s32.totalorder %s28, 0
      %p268 = por %p266, %p267
      %p269 = scmp.ne.s32.totalorder %s258, %s261
      %p270 = scmp.eq.s32.totalorder %s33, 3
      %p271 = por %p269, %p270
      %p272 = scmp.ne.s32.totalorder %s261, %s262
      %p273 = scmp.eq.s32.totalorder %s33, 0
      %p274 = por %p272, %p273
      %p275 = scmp.ne.s32.totalorder %s261, %s262
      %p276 = scmp.eq.s32.totalorder %s34, 3
      %p277 = por %p275, %p276
      %p279 = scmp.ne.s32.totalorder %s262, %s278
      %p280 = scmp.eq.s32.totalorder %s34, 0
      %p281 = por %p279, %p280
      %s282 = ssub.s32 %s28, %s35
      %p283 = scmp.eq.s32.totalorder %s282, 0
      %s285 = sadd.s32 %s284, 1
      %s286 = scalar_select %p283, %s284, %s285
      %p289 = pneg %p283
      %p290 = scmp.eq.s32.totalorder %s28, 3
      %p291 = por %p289, %p290
      %p292 = scmp.ne.s32.totalorder %s284, %s287
      %p293 = scmp.eq.s32.totalorder %s28, 0
      %p294 = por %p292, %p293
      %p295 = scmp.ne.s32.totalorder %s284, %s287
      %p296 = scmp.eq.s32.totalorder %s33, 3
      %p297 = por %p295, %p296
      %p298 = scmp.ne.s32.totalorder %s287, %s288
      %p299 = scmp.eq.s32.totalorder %s33, 0
      %p300 = por %p298, %p299
      %p301 = scmp.ne.s32.totalorder %s287, %s288
      %p302 = scmp.eq.s32.totalorder %s34, 3
      %p303 = por %p301, %p302
      %p305 = scmp.ne.s32.totalorder %s288, %s304
      %p306 = scmp.eq.s32.totalorder %s34, 0
      %p307 = por %p305, %p306
      %p308 = scmp.le.s32.totalorder 1, %s28
      %p309 = scmp.lt.s32.totalorder %s28, 5
      %p310 = pnand %p308, %p309
      %p311 = pneg %p310
      // Predicated region
      $region9: #{tpu_custom_call.1} parent=5 // pred_check
        _
      $region10: #{tpu_custom_call.1} parent=5 // pred_check_branch
        %313 = sbr.rel (%p310) target = $region12
      $region11: #{tpu_custom_call.1} parent=5 // pred_region
        %s314 = ssub.s32 %s28, 1
        // Predicated region
        $region13: #{tpu_custom_call.1} parent=11 // pred_check
          %p315 = pneg %p101
        $region14: #{tpu_custom_call.1} parent=11 // pred_check_branch
          %317 = sbr.rel (%p315) target = $region16
        $region15: #{tpu_custom_call.1} parent=11 // pred_region
          %s319 = ssub.s32 4096, 4096
          %320 = vsyncadd [#allocation6], %s319
          %s321 = sshll.u32 [#allocation5], 4
          %s322 = int_to_ptr.vmem [resolvable:$true] %s321
          %327 = dma.hbm_to_vmem [thread:$0]  %s2, 4096, %s322, [#allocation6], 128, 128, 8
        $region16: #{tpu_custom_call.1} parent=11 // pred_fallthru
          _
        // Predicated region
        $region17: #{tpu_custom_call.1} parent=11 // pred_check
          %p328 = pneg %p122
        $region18: #{tpu_custom_call.1} parent=11 // pred_check_branch
          %330 = sbr.rel (%p328) target = $region20
        $region19: #{tpu_custom_call.1} parent=11 // pred_region
          %s332 = ssub.s32 32, 32
          %333 = vsyncadd [#allocation6], %s332
          %s335 = sshll.u32 [#allocation7], 4
          %s336 = int_to_ptr.vmem [resolvable:$true] %s335
          %338 = dma.hbm_to_vmem [thread:$0]  %s3, 32, %s336, [#allocation6]
        $region20: #{tpu_custom_call.1} parent=11 // pred_fallthru
          _
        // Predicated region
        $region21: #{tpu_custom_call.1} parent=11 // pred_check
          %p339 = pneg %p143
        $region22: #{tpu_custom_call.1} parent=11 // pred_check_branch
          %341 = sbr.rel (%p339) target = $region24
        $region23: #{tpu_custom_call.1} parent=11 // pred_region
          _
        $region24: #{tpu_custom_call.1} parent=11 // pred_fallthru
          _
        // Predicated region
        $region25: #{tpu_custom_call.1} parent=11 // pred_check
          %p342 = pneg %p164
        $region26: #{tpu_custom_call.1} parent=11 // pred_check_branch
          %344 = sbr.rel (%p342) target = $region28
        $region27: #{tpu_custom_call.1} parent=11 // pred_region
          %s346 = ssub.s32 16, 16
          %347 = vsyncadd [#allocation9], %s346
          %s349 = sshll.u32 [#allocation8], 4
          %s350 = int_to_ptr.vmem [resolvable:$true] %s349
          %352 = dma.hbm_to_vmem [thread:$0]  %s5, 16, %s350, [#allocation9]
        $region28: #{tpu_custom_call.1} parent=11 // pred_fallthru
          _
        // Predicated region
        $region29: #{tpu_custom_call.1} parent=11 // pred_check
          %p353 = pneg %p185
        $region30: #{tpu_custom_call.1} parent=11 // pred_check_branch
          %355 = sbr.rel (%p353) target = $region32
        $region31: #{tpu_custom_call.1} parent=11 // pred_region
          %s357 = ssub.s32 128, 128
          %358 = vsyncadd [#allocation9], %s357
          %s360 = sshll.u32 [#allocation10], 4
          %s361 = int_to_ptr.vmem [resolvable:$true] %s360
          %363 = dma.hbm_to_vmem [thread:$0]  %s6, 128, %s361, [#allocation9]
        $region32: #{tpu_custom_call.1} parent=11 // pred_fallthru
          _
        // Predicated region
        $region33: #{tpu_custom_call.1} parent=11 // pred_check
          %p364 = pneg %p206
        $region34: #{tpu_custom_call.1} parent=11 // pred_check_branch
          %366 = sbr.rel (%p364) target = $region36
        $region35: #{tpu_custom_call.1} parent=11 // pred_region
          %s368 = ssub.s32 32, 32
          %369 = vsyncadd [#allocation12], %s368
          %s371 = sshll.u32 [#allocation11], 4
          %s372 = int_to_ptr.vmem [resolvable:$true] %s371
          %374 = dma.hbm_to_vmem [thread:$0]  %s7, 32, %s372, [#allocation12]
        $region36: #{tpu_custom_call.1} parent=11 // pred_fallthru
          _
        // Predicated region
        $region37: #{tpu_custom_call.1} parent=11 // pred_check
          %p375 = pneg %p227
        $region38: #{tpu_custom_call.1} parent=11 // pred_check_branch
          %377 = sbr.rel (%p375) target = $region40
        $region39: #{tpu_custom_call.1} parent=11 // pred_region
          %s379 = ssub.s32 4096, 4096
          %380 = vsyncadd [#allocation12], %s379
          %s381 = sshll.u32 [#allocation13], 4
          %s382 = int_to_ptr.vmem [resolvable:$true] %s381
          %387 = dma.hbm_to_vmem [thread:$0]  %s8, 4096, %s382, [#allocation12], 128, 128, 8
        $region40: #{tpu_custom_call.1} parent=11 // pred_fallthru
          _
        // Predicated region
        $region41: #{tpu_custom_call.1} parent=11 // pred_check
          %p388 = pneg %p248
        $region42: #{tpu_custom_call.1} parent=11 // pred_check_branch
          %390 = sbr.rel (%p388) target = $region44
        $region43: #{tpu_custom_call.1} parent=11 // pred_region
          %s392 = ssub.s32 32, 32
          %393 = vsyncadd [#allocation15], %s392
          %s395 = sshll.u32 [#allocation14], 4
          %s396 = int_to_ptr.vmem [resolvable:$true] %s395
          %398 = dma.hbm_to_vmem [thread:$0]  %s9, 32, %s396, [#allocation15]
        $region44: #{tpu_custom_call.1} parent=11 // pred_fallthru
          _
      $region12: #{tpu_custom_call.1} parent=5 // pred_fallthru
        _
      %p399 = scmp.lt.s32.totalorder %s28, 4
      // Predicated region
      $region45: #{tpu_custom_call.1} parent=5 // pred_check
        %p400 = pneg %p399
      $region46: #{tpu_custom_call.1} parent=5 // pred_check_branch
        %402 = sbr.rel (%p400) target = $region48
      $region47: #{tpu_custom_call.1} parent=5 // pred_region
        // Predicated region
        $region49: #{tpu_custom_call.1} parent=47 // pred_check
          %p403 = pneg %p48
        $region50: #{tpu_custom_call.1} parent=47 // pred_check_branch
          %405 = sbr.rel (%p403) target = $region52
        $region51: #{tpu_custom_call.1} parent=47 // pred_region
          %s406 = sand.u32 %s38, 1
          %s407 = scalar_lea.sflag [#allocation3], %s406
          %s408 = sand.u32 %s38, 1
          %s409 = smul.addr %s408, 1024
          %s410 = scalar_lea.vmem [#allocation2], %s409
          %s411 = smul.u32 64, %s28
          %s413 = ssub.s32 16384, 16384
          %414 = vsyncadd %s407, %s413
          %s415 = smul.addr %s411, 2
          %s416 = smul.addr %s415, 128
          %s417 = scalar_lea.hbm %s0, %s416
          %s418 = sshll.u32 %s410, 4
          %s419 = int_to_ptr.vmem [resolvable:$true] %s418
          %424 = dma.hbm_to_vmem [thread:$0]  %s417, 16384, %s419, %s407, 256, 256, 16
        $region52: #{tpu_custom_call.1} parent=47 // pred_fallthru
          _
        // Predicated region
        $region53: #{tpu_custom_call.1} parent=47 // pred_check
          %p425 = pneg %p74
        $region54: #{tpu_custom_call.1} parent=47 // pred_check_branch
          %427 = sbr.rel (%p425) target = $region56
        $region55: #{tpu_custom_call.1} parent=47 // pred_region
          %s428 = smul.u32 64, %s28
          %p429 = scmp.lt.s32.totalorder %s428, 255
          %s430 = scalar_select %p429, %s428, 255
          %s431 = smul.addr %s430, 8
          %s432 = scalar_lea.vmem %s1, %s431
          %s433 = smul.u32 64, %s28
        $region56: #{tpu_custom_call.1} parent=47 // pred_fallthru
          _
      $region48: #{tpu_custom_call.1} parent=5 // pred_fallthru
        _
      %p434 = scmp.le.s32.totalorder 1, %s28
      %p435 = scmp.lt.s32.totalorder %s28, 5
      %p436 = pnand %p434, %p435
      %p437 = pneg %p436
      // Predicated region
      $region57: #{tpu_custom_call.1} parent=5 // pred_check
        _
      $region58: #{tpu_custom_call.1} parent=5 // pred_check_branch
        %439 = sbr.rel (%p436) target = $region60
      $region59: #{tpu_custom_call.1} parent=5 // pred_region
        %s440 = ssub.s32 %s28, 1
        %s441 = sand.u32 %s41, 1
        %s442 = scalar_lea.sflag [#allocation3], %s441
        %s443 = sand.u32 %s41, 1
        %s444 = smul.addr %s443, 1024
        %s445 = scalar_lea.vmem [#allocation2], %s444
        // Predicated region
        $region61: #{tpu_custom_call.1} parent=59 // pred_check
          %p446 = pneg %p54
        $region62: #{tpu_custom_call.1} parent=59 // pred_check_branch
          %448 = sbr.rel (%p446) target = $region64
        $region63: #{tpu_custom_call.1} parent=59 // pred_region
          %449 = dma.done %s442, 16384
        $region64: #{tpu_custom_call.1} parent=59 // pred_fallthru
          _
        // Predicated region
        $region65: #{tpu_custom_call.1} parent=59 // pred_check
          %p450 = pneg %p101
        $region66: #{tpu_custom_call.1} parent=59 // pred_check_branch
          %452 = sbr.rel (%p450) target = $region68
        $region67: #{tpu_custom_call.1} parent=59 // pred_region
          %453 = dma.done [#allocation6], 4096
        $region68: #{tpu_custom_call.1} parent=59 // pred_fallthru
          _
        // Predicated region
        $region69: #{tpu_custom_call.1} parent=59 // pred_check
          %p454 = pneg %p122
        $region70: #{tpu_custom_call.1} parent=59 // pred_check_branch
          %456 = sbr.rel (%p454) target = $region72
        $region71: #{tpu_custom_call.1} parent=59 // pred_region
          %457 = dma.done [#allocation6], 32
        $region72: #{tpu_custom_call.1} parent=59 // pred_fallthru
          _
        // Predicated region
        $region73: #{tpu_custom_call.1} parent=59 // pred_check
          %p458 = pneg %p164
        $region74: #{tpu_custom_call.1} parent=59 // pred_check_branch
          %460 = sbr.rel (%p458) target = $region76
        $region75: #{tpu_custom_call.1} parent=59 // pred_region
          %461 = dma.done [#allocation9], 16
        $region76: #{tpu_custom_call.1} parent=59 // pred_fallthru
          _
        // Predicated region
        $region77: #{tpu_custom_call.1} parent=59 // pred_check
          %p462 = pneg %p185
        $region78: #{tpu_custom_call.1} parent=59 // pred_check_branch
          %464 = sbr.rel (%p462) target = $region80
        $region79: #{tpu_custom_call.1} parent=59 // pred_region
          %465 = dma.done [#allocation9], 128
        $region80: #{tpu_custom_call.1} parent=59 // pred_fallthru
          _
        // Predicated region
        $region81: #{tpu_custom_call.1} parent=59 // pred_check
          %p466 = pneg %p206
        $region82: #{tpu_custom_call.1} parent=59 // pred_check_branch
          %468 = sbr.rel (%p466) target = $region84
        $region83: #{tpu_custom_call.1} parent=59 // pred_region
          %469 = dma.done [#allocation12], 32
        $region84: #{tpu_custom_call.1} parent=59 // pred_fallthru
          _
        // Predicated region
        $region85: #{tpu_custom_call.1} parent=59 // pred_check
          %p470 = pneg %p227
        $region86: #{tpu_custom_call.1} parent=59 // pred_check_branch
          %472 = sbr.rel (%p470) target = $region88
        $region87: #{tpu_custom_call.1} parent=59 // pred_region
          %473 = dma.done [#allocation12], 4096
        $region88: #{tpu_custom_call.1} parent=59 // pred_fallthru
          _
        // Predicated region
        $region89: #{tpu_custom_call.1} parent=59 // pred_check
          %p474 = pneg %p248
        $region90: #{tpu_custom_call.1} parent=59 // pred_check_branch
          %476 = sbr.rel (%p474) target = $region92
        $region91: #{tpu_custom_call.1} parent=59 // pred_region
          %477 = dma.done [#allocation15], 32
        $region92: #{tpu_custom_call.1} parent=59 // pred_fallthru
          _
        %s478 = sand.u32 %s41, 1
        %s479 = scalar_lea.sflag [#allocation3], %s478
        %s480 = sand.u32 %s41, 1
        %s481 = smul.addr %s480, 1024
        %s482 = scalar_lea.vmem [#allocation2], %s481
        %p483 = pneg %p54
        %p484 = pneg %p51
        %s485 = smul.u32 64, %s33
        %p486 = scmp.lt.s32.totalorder %s485, 255
        %s487 = scalar_select %p486, %s485, 255
        %s488 = smul.addr %s487, 8
        %s489 = scalar_lea.vmem %s1, %s488
        %p490 = pneg %p80
        %p491 = pneg %p77
        %p492 = pneg %p101
        %p493 = pneg %p98
        %p494 = pneg %p122
        %p495 = pneg %p119
        %p496 = pneg %p143
        %p497 = pneg %p140
        %p498 = pneg %p164
        %p499 = pneg %p161
        %p500 = pneg %p185
        %p501 = pneg %p182
        %p502 = pneg %p206
        %p503 = pneg %p203
        %p504 = pneg %p227
        %p505 = pneg %p224
        %p506 = pneg %p248
        %p507 = pneg %p245
        %p508 = pneg %p274
        %p509 = pneg %p271
        %s510 = sand.u32 %s261, 1
        %s511 = scalar_lea.sflag [#allocation4], %s510
        %s512 = sand.u32 %s261, 1
        %s513 = smul.addr %s512, 512
        %s514 = scalar_lea.vmem [#allocation16], %s513
        %p515 = pneg %p300
        %p516 = pneg %p297
        %s517 = smul.u32 64, %s33
        %p518 = scmp.lt.s32.totalorder %s517, 255
        %s519 = scalar_select %p518, %s517, 255
        %s520 = smul.addr %s519, 8
        %s521 = scalar_lea.vmem %s11, %s520
        %s522 = smul.u32 64, %s33
        %s523 = smul.u32 64, %s33
        %p524 = scmp.lt.s32.totalorder %s523, 255
        %s525 = scalar_select %p524, %s523, 255
        %s526 = smul.addr %s525, 8
        %s527 = scalar_lea.vmem %s1, %s526
        %s528 = smul.u32 64, %s33
        %s529 = smul.u32 64, %s33
        %s530 = smul.u32 64, %s33
        %p531 = scmp.lt.s32.totalorder %s530, 255
        %s532 = scalar_select %p531, %s530, 255
        %s533 = smul.addr %s532, 8
        %s534 = scalar_lea.vmem %s11, %s533
        %s535 = smul.u32 64, %s33
        %v537 = vld [vmem:[%s445] sm:$0xff]
        %v538 = vld [vmem:[%s445 + $0x8] sm:$0xff]
        %v539 = vld [vmem:[%s445 + $0x10] sm:$0xff]
        %v540 = vld [vmem:[%s445 + $0x18] sm:$0xff]
        %v541 = vld [vmem:[%s445 + $0x20] sm:$0xff]
        %v542 = vld [vmem:[%s445 + $0x28] sm:$0xff]
        %v543 = vld [vmem:[%s445 + $0x30] sm:$0xff]
        %v544 = vld [vmem:[%s445 + $0x38] sm:$0xff]
        %v545 = vld [vmem:[%s445 + $0x40] sm:$0xff]
        %v546 = vld [vmem:[%s445 + $0x48] sm:$0xff]
        %v547 = vld [vmem:[%s445 + $0x50] sm:$0xff]
        %v548 = vld [vmem:[%s445 + $0x58] sm:$0xff]
        %v549 = vld [vmem:[%s445 + $0x60] sm:$0xff]
        %v550 = vld [vmem:[%s445 + $0x68] sm:$0xff]
        %v551 = vld [vmem:[%s445 + $0x70] sm:$0xff]
        %v552 = vld [vmem:[%s445 + $0x78] sm:$0xff]
        %v553 = vld [vmem:[%s445 + $0x80] sm:$0xff]
        %v554 = vld [vmem:[%s445 + $0x88] sm:$0xff]
        %v555 = vld [vmem:[%s445 + $0x90] sm:$0xff]
        %v556 = vld [vmem:[%s445 + $0x98] sm:$0xff]
        %v557 = vld [vmem:[%s445 + $0xa0] sm:$0xff]
        %v558 = vld [vmem:[%s445 + $0xa8] sm:$0xff]
        %v559 = vld [vmem:[%s445 + $0xb0] sm:$0xff]
        %v560 = vld [vmem:[%s445 + $0xb8] sm:$0xff]
        %v561 = vld [vmem:[%s445 + $0xc0] sm:$0xff]
        %v562 = vld [vmem:[%s445 + $0xc8] sm:$0xff]
        %v563 = vld [vmem:[%s445 + $0xd0] sm:$0xff]
        %v564 = vld [vmem:[%s445 + $0xd8] sm:$0xff]
        %v565 = vld [vmem:[%s445 + $0xe0] sm:$0xff]
        %v566 = vld [vmem:[%s445 + $0xe8] sm:$0xff]
        %v567 = vld [vmem:[%s445 + $0xf0] sm:$0xff]
        %v568 = vld [vmem:[%s445 + $0xf8] sm:$0xff]
        %v569 = vld [vmem:[%s445 + $0x100] sm:$0xff]
        %v570 = vld [vmem:[%s445 + $0x108] sm:$0xff]
        %v571 = vld [vmem:[%s445 + $0x110] sm:$0xff]
        %v572 = vld [vmem:[%s445 + $0x118] sm:$0xff]
        %v573 = vld [vmem:[%s445 + $0x120] sm:$0xff]
        %v574 = vld [vmem:[%s445 + $0x128] sm:$0xff]
        %v575 = vld [vmem:[%s445 + $0x130] sm:$0xff]
        %v576 = vld [vmem:[%s445 + $0x138] sm:$0xff]
        %v577 = vld [vmem:[%s445 + $0x140] sm:$0xff]
        %v578 = vld [vmem:[%s445 + $0x148] sm:$0xff]
        %v579 = vld [vmem:[%s445 + $0x150] sm:$0xff]
        %v580 = vld [vmem:[%s445 + $0x158] sm:$0xff]
        %v581 = vld [vmem:[%s445 + $0x160] sm:$0xff]
        %v582 = vld [vmem:[%s445 + $0x168] sm:$0xff]
        %v583 = vld [vmem:[%s445 + $0x170] sm:$0xff]
        %v584 = vld [vmem:[%s445 + $0x178] sm:$0xff]
        %v585 = vld [vmem:[%s445 + $0x180] sm:$0xff]
        %v586 = vld [vmem:[%s445 + $0x188] sm:$0xff]
        %v587 = vld [vmem:[%s445 + $0x190] sm:$0xff]
        %v588 = vld [vmem:[%s445 + $0x198] sm:$0xff]
        %v589 = vld [vmem:[%s445 + $0x1a0] sm:$0xff]
        %v590 = vld [vmem:[%s445 + $0x1a8] sm:$0xff]
        %v591 = vld [vmem:[%s445 + $0x1b0] sm:$0xff]
        %v592 = vld [vmem:[%s445 + $0x1b8] sm:$0xff]
        %v593 = vld [vmem:[%s445 + $0x1c0] sm:$0xff]
        %v594 = vld [vmem:[%s445 + $0x1c8] sm:$0xff]
        %v595 = vld [vmem:[%s445 + $0x1d0] sm:$0xff]
        %v596 = vld [vmem:[%s445 + $0x1d8] sm:$0xff]
        %v597 = vld [vmem:[%s445 + $0x1e0] sm:$0xff]
        %v598 = vld [vmem:[%s445 + $0x1e8] sm:$0xff]
        %v599 = vld [vmem:[%s445 + $0x1f0] sm:$0xff]
        %v600 = vld [vmem:[%s445 + $0x1f8] sm:$0xff]
        %v601 = vld [vmem:[%s445 + $0x200] sm:$0xff]
        %v602 = vld [vmem:[%s445 + $0x208] sm:$0xff]
        %v603 = vld [vmem:[%s445 + $0x210] sm:$0xff]
        %v604 = vld [vmem:[%s445 + $0x218] sm:$0xff]
        %v605 = vld [vmem:[%s445 + $0x220] sm:$0xff]
        %v606 = vld [vmem:[%s445 + $0x228] sm:$0xff]
        %v607 = vld [vmem:[%s445 + $0x230] sm:$0xff]
        %v608 = vld [vmem:[%s445 + $0x238] sm:$0xff]
        %v609 = vld [vmem:[%s445 + $0x240] sm:$0xff]
        %v610 = vld [vmem:[%s445 + $0x248] sm:$0xff]
        %v611 = vld [vmem:[%s445 + $0x250] sm:$0xff]
        %v612 = vld [vmem:[%s445 + $0x258] sm:$0xff]
        %v613 = vld [vmem:[%s445 + $0x260] sm:$0xff]
        %v614 = vld [vmem:[%s445 + $0x268] sm:$0xff]
        %v615 = vld [vmem:[%s445 + $0x270] sm:$0xff]
        %v616 = vld [vmem:[%s445 + $0x278] sm:$0xff]
        %v617 = vld [vmem:[%s445 + $0x280] sm:$0xff]
        %v618 = vld [vmem:[%s445 + $0x288] sm:$0xff]
        %v619 = vld [vmem:[%s445 + $0x290] sm:$0xff]
        %v620 = vld [vmem:[%s445 + $0x298] sm:$0xff]
        %v621 = vld [vmem:[%s445 + $0x2a0] sm:$0xff]
        %v622 = vld [vmem:[%s445 + $0x2a8] sm:$0xff]
        %v623 = vld [vmem:[%s445 + $0x2b0] sm:$0xff]
        %v624 = vld [vmem:[%s445 + $0x2b8] sm:$0xff]
        %v625 = vld [vmem:[%s445 + $0x2c0] sm:$0xff]
        %v626 = vld [vmem:[%s445 + $0x2c8] sm:$0xff]
        %v627 = vld [vmem:[%s445 + $0x2d0] sm:$0xff]
        %v628 = vld [vmem:[%s445 + $0x2d8] sm:$0xff]
        %v629 = vld [vmem:[%s445 + $0x2e0] sm:$0xff]
        %v630 = vld [vmem:[%s445 + $0x2e8] sm:$0xff]
        %v631 = vld [vmem:[%s445 + $0x2f0] sm:$0xff]
        %v632 = vld [vmem:[%s445 + $0x2f8] sm:$0xff]
        %v633 = vld [vmem:[%s445 + $0x300] sm:$0xff]
        %v634 = vld [vmem:[%s445 + $0x308] sm:$0xff]
        %v635 = vld [vmem:[%s445 + $0x310] sm:$0xff]
        %v636 = vld [vmem:[%s445 + $0x318] sm:$0xff]
        %v637 = vld [vmem:[%s445 + $0x320] sm:$0xff]
        %v638 = vld [vmem:[%s445 + $0x328] sm:$0xff]
        %v639 = vld [vmem:[%s445 + $0x330] sm:$0xff]
        %v640 = vld [vmem:[%s445 + $0x338] sm:$0xff]
        %v641 = vld [vmem:[%s445 + $0x340] sm:$0xff]
        %v642 = vld [vmem:[%s445 + $0x348] sm:$0xff]
        %v643 = vld [vmem:[%s445 + $0x350] sm:$0xff]
        %v644 = vld [vmem:[%s445 + $0x358] sm:$0xff]
        %v645 = vld [vmem:[%s445 + $0x360] sm:$0xff]
        %v646 = vld [vmem:[%s445 + $0x368] sm:$0xff]
        %v647 = vld [vmem:[%s445 + $0x370] sm:$0xff]
        %v648 = vld [vmem:[%s445 + $0x378] sm:$0xff]
        %v649 = vld [vmem:[%s445 + $0x380] sm:$0xff]
        %v650 = vld [vmem:[%s445 + $0x388] sm:$0xff]
        %v651 = vld [vmem:[%s445 + $0x390] sm:$0xff]
        %v652 = vld [vmem:[%s445 + $0x398] sm:$0xff]
        %v653 = vld [vmem:[%s445 + $0x3a0] sm:$0xff]
        %v654 = vld [vmem:[%s445 + $0x3a8] sm:$0xff]
        %v655 = vld [vmem:[%s445 + $0x3b0] sm:$0xff]
        %v656 = vld [vmem:[%s445 + $0x3b8] sm:$0xff]
        %v657 = vld [vmem:[%s445 + $0x3c0] sm:$0xff]
        %v658 = vld [vmem:[%s445 + $0x3c8] sm:$0xff]
        %v659 = vld [vmem:[%s445 + $0x3d0] sm:$0xff]
        %v660 = vld [vmem:[%s445 + $0x3d8] sm:$0xff]
        %v661 = vld [vmem:[%s445 + $0x3e0] sm:$0xff]
        %v662 = vld [vmem:[%s445 + $0x3e8] sm:$0xff]
        %v663 = vld [vmem:[%s445 + $0x3f0] sm:$0xff]
        %v664 = vld [vmem:[%s445 + $0x3f8] sm:$0xff]
        %v665 = vpack.c.bf16 %v539, %v537
        %v666 = vpack.c.bf16 %v540, %v538
        %v667 = vpack.c.bf16 %v543, %v541
        %v668 = vpack.c.bf16 %v544, %v542
        %v669 = vpack.c.bf16 %v547, %v545
        %v670 = vpack.c.bf16 %v548, %v546
        %v671 = vpack.c.bf16 %v551, %v549
        %v672 = vpack.c.bf16 %v552, %v550
        %v673 = vpack.c.bf16 %v555, %v553
        %v674 = vpack.c.bf16 %v556, %v554
        %v675 = vpack.c.bf16 %v559, %v557
        %v676 = vpack.c.bf16 %v560, %v558
        %v677 = vpack.c.bf16 %v563, %v561
        %v678 = vpack.c.bf16 %v564, %v562
        %v679 = vpack.c.bf16 %v567, %v565
        %v680 = vpack.c.bf16 %v568, %v566
        %v681 = vpack.c.bf16 %v571, %v569
        %v682 = vpack.c.bf16 %v572, %v570
        %v683 = vpack.c.bf16 %v575, %v573
        %v684 = vpack.c.bf16 %v576, %v574
        %v685 = vpack.c.bf16 %v579, %v577
        %v686 = vpack.c.bf16 %v580, %v578
        %v687 = vpack.c.bf16 %v583, %v581
        %v688 = vpack.c.bf16 %v584, %v582
        %v689 = vpack.c.bf16 %v587, %v585
        %v690 = vpack.c.bf16 %v588, %v586
        %v691 = vpack.c.bf16 %v591, %v589
        %v692 = vpack.c.bf16 %v592, %v590
        %v693 = vpack.c.bf16 %v595, %v593
        %v694 = vpack.c.bf16 %v596, %v594
        %v695 = vpack.c.bf16 %v599, %v597
        %v696 = vpack.c.bf16 %v600, %v598
        %v697 = vpack.c.bf16 %v603, %v601
        %v698 = vpack.c.bf16 %v604, %v602
        %v699 = vpack.c.bf16 %v607, %v605
        %v700 = vpack.c.bf16 %v608, %v606
        %v701 = vpack.c.bf16 %v611, %v609
        %v702 = vpack.c.bf16 %v612, %v610
        %v703 = vpack.c.bf16 %v615, %v613
        %v704 = vpack.c.bf16 %v616, %v614
        %v705 = vpack.c.bf16 %v619, %v617
        %v706 = vpack.c.bf16 %v620, %v618
        %v707 = vpack.c.bf16 %v623, %v621
        %v708 = vpack.c.bf16 %v624, %v622
        %v709 = vpack.c.bf16 %v627, %v625
        %v710 = vpack.c.bf16 %v628, %v626
        %v711 = vpack.c.bf16 %v631, %v629
        %v712 = vpack.c.bf16 %v632, %v630
        %v713 = vpack.c.bf16 %v635, %v633
        %v714 = vpack.c.bf16 %v636, %v634
        %v715 = vpack.c.bf16 %v639, %v637
        %v716 = vpack.c.bf16 %v640, %v638
        %v717 = vpack.c.bf16 %v643, %v641
        %v718 = vpack.c.bf16 %v644, %v642
        %v719 = vpack.c.bf16 %v647, %v645
        %v720 = vpack.c.bf16 %v648, %v646
        %v721 = vpack.c.bf16 %v651, %v649
        %v722 = vpack.c.bf16 %v652, %v650
        %v723 = vpack.c.bf16 %v655, %v653
        %v724 = vpack.c.bf16 %v656, %v654
        %v725 = vpack.c.bf16 %v659, %v657
        %v726 = vpack.c.bf16 %v660, %v658
        %v727 = vpack.c.bf16 %v663, %v661
        %v728 = vpack.c.bf16 %v664, %v662
        %v729 = vld [vmem:[#allocation5] sm:$0xff]
        %v730 = vld [vmem:[#allocation5 + $0x8] sm:$0xff]
        %v731 = vld [vmem:[#allocation5 + $0x10] sm:$0xff]
        %v732 = vld [vmem:[#allocation5 + $0x18] sm:$0xff]
        %v733 = vld [vmem:[#allocation5 + $0x20] sm:$0xff]
        %v734 = vld [vmem:[#allocation5 + $0x28] sm:$0xff]
        %v735 = vld [vmem:[#allocation5 + $0x30] sm:$0xff]
        %v736 = vld [vmem:[#allocation5 + $0x38] sm:$0xff]
        %v737 = vld [vmem:[#allocation5 + $0x40] sm:$0xff]
        %v738 = vld [vmem:[#allocation5 + $0x48] sm:$0xff]
        %v739 = vld [vmem:[#allocation5 + $0x50] sm:$0xff]
        %v740 = vld [vmem:[#allocation5 + $0x58] sm:$0xff]
        %v741 = vld [vmem:[#allocation5 + $0x60] sm:$0xff]
        %v742 = vld [vmem:[#allocation5 + $0x68] sm:$0xff]
        %v743 = vld [vmem:[#allocation5 + $0x70] sm:$0xff]
        %v744 = vld [vmem:[#allocation5 + $0x78] sm:$0xff]
        %v745 = vld [vmem:[#allocation5 + $0x80] sm:$0xff]
        %v746 = vld [vmem:[#allocation5 + $0x88] sm:$0xff]
        %v747 = vld [vmem:[#allocation5 + $0x90] sm:$0xff]
        %v748 = vld [vmem:[#allocation5 + $0x98] sm:$0xff]
        %v749 = vld [vmem:[#allocation5 + $0xa0] sm:$0xff]
        %v750 = vld [vmem:[#allocation5 + $0xa8] sm:$0xff]
        %v751 = vld [vmem:[#allocation5 + $0xb0] sm:$0xff]
        %v752 = vld [vmem:[#allocation5 + $0xb8] sm:$0xff]
        %v753 = vld [vmem:[#allocation5 + $0xc0] sm:$0xff]
        %v754 = vld [vmem:[#allocation5 + $0xc8] sm:$0xff]
        %v755 = vld [vmem:[#allocation5 + $0xd0] sm:$0xff]
        %v756 = vld [vmem:[#allocation5 + $0xd8] sm:$0xff]
        %v757 = vld [vmem:[#allocation5 + $0xe0] sm:$0xff]
        %v758 = vld [vmem:[#allocation5 + $0xe8] sm:$0xff]
        %v759 = vld [vmem:[#allocation5 + $0xf0] sm:$0xff]
        %v760 = vld [vmem:[#allocation5 + $0xf8] sm:$0xff]
        %v761 = vld [vmem:[#allocation7] sm:$0x3]
        %v763 = vlaneseq
        %v764 = vshrl.u32 %v763, 7
        %v765 = vsub.s32 0, %v764
        %v766 = vrot.slane %v761, %v765
        %v767 = vlaneseq
        %v768 = vshrl.u32 %v767, 7
        %v769 = vsub.s32 1, %v768
        %v770 = vrot.slane %v761, %v769
        %v805 = vunpack.c.l.b16 %v729
        %v806 = vunpack.c.h.b16 %v729
        %v807 = vunpack.c.l.b16 %v730
        %v808 = vunpack.c.h.b16 %v730
        %v809 = vunpack.c.l.b16 %v731
        %v810 = vunpack.c.h.b16 %v731
        %v811 = vunpack.c.l.b16 %v732
        %v812 = vunpack.c.h.b16 %v732
        %v813 = vunpack.c.l.b16 %v733
        %v814 = vunpack.c.h.b16 %v733
        %v815 = vunpack.c.l.b16 %v734
        %v816 = vunpack.c.h.b16 %v734
        %v817 = vunpack.c.l.b16 %v735
        %v818 = vunpack.c.h.b16 %v735
        %v819 = vunpack.c.l.b16 %v736
        %v820 = vunpack.c.h.b16 %v736
        %v821 = vunpack.c.l.b16 %v737
        %v822 = vunpack.c.h.b16 %v737
        %v823 = vunpack.c.l.b16 %v738
        %v824 = vunpack.c.h.b16 %v738
        %v825 = vunpack.c.l.b16 %v739
        %v826 = vunpack.c.h.b16 %v739
        %v827 = vunpack.c.l.b16 %v740
        %v828 = vunpack.c.h.b16 %v740
        %v829 = vunpack.c.l.b16 %v741
        %v830 = vunpack.c.h.b16 %v741
        %v831 = vunpack.c.l.b16 %v742
        %v832 = vunpack.c.h.b16 %v742
        %v833 = vunpack.c.l.b16 %v743
        %v834 = vunpack.c.h.b16 %v743
        %v835 = vunpack.c.l.b16 %v744
        %v836 = vunpack.c.h.b16 %v744
        %v837 = vunpack.c.l.b16 %v745
        %v838 = vunpack.c.h.b16 %v745
        %v839 = vunpack.c.l.b16 %v746
        %v840 = vunpack.c.h.b16 %v746
        %v841 = vunpack.c.l.b16 %v747
        %v842 = vunpack.c.h.b16 %v747
        %v843 = vunpack.c.l.b16 %v748
        %v844 = vunpack.c.h.b16 %v748
        %v845 = vunpack.c.l.b16 %v749
        %v846 = vunpack.c.h.b16 %v749
        %v847 = vunpack.c.l.b16 %v750
        %v848 = vunpack.c.h.b16 %v750
        %v849 = vunpack.c.l.b16 %v751
        %v850 = vunpack.c.h.b16 %v751
        %v851 = vunpack.c.l.b16 %v752
        %v852 = vunpack.c.h.b16 %v752
        %v853 = vunpack.c.l.b16 %v753
        %v854 = vunpack.c.h.b16 %v753
        %v855 = vunpack.c.l.b16 %v754
        %v856 = vunpack.c.h.b16 %v754
        %v857 = vunpack.c.l.b16 %v755
        %v858 = vunpack.c.h.b16 %v755
        %v859 = vunpack.c.l.b16 %v756
        %v860 = vunpack.c.h.b16 %v756
        %v861 = vunpack.c.l.b16 %v757
        %v862 = vunpack.c.h.b16 %v757
        %v863 = vunpack.c.l.b16 %v758
        %v864 = vunpack.c.h.b16 %v758
        %v865 = vunpack.c.l.b16 %v759
        %v866 = vunpack.c.h.b16 %v759
        %v867 = vunpack.c.l.b16 %v760
        %v868 = vunpack.c.h.b16 %v760
        %v869 = vpack.c.b16 %v807, %v805
        %v870 = vpack.c.b16 %v808, %v806
        %v871 = vpack.c.b16 %v811, %v809
        %v872 = vpack.c.b16 %v812, %v810
        %v873 = vpack.c.b16 %v815, %v813
        %v874 = vpack.c.b16 %v816, %v814
        %v875 = vpack.c.b16 %v819, %v817
        %v876 = vpack.c.b16 %v820, %v818
        %v877 = vpack.c.b16 %v823, %v821
        %v878 = vpack.c.b16 %v824, %v822
        %v879 = vpack.c.b16 %v827, %v825
        %v880 = vpack.c.b16 %v828, %v826
        %v881 = vpack.c.b16 %v831, %v829
        %v882 = vpack.c.b16 %v832, %v830
        %v883 = vpack.c.b16 %v835, %v833
        %v884 = vpack.c.b16 %v836, %v834
        %v885 = vpack.c.b16 %v839, %v837
        %v886 = vpack.c.b16 %v840, %v838
        %v887 = vpack.c.b16 %v843, %v841
        %v888 = vpack.c.b16 %v844, %v842
        %v889 = vpack.c.b16 %v847, %v845
        %v890 = vpack.c.b16 %v848, %v846
        %v891 = vpack.c.b16 %v851, %v849
        %v892 = vpack.c.b16 %v852, %v850
        %v893 = vpack.c.b16 %v855, %v853
        %v894 = vpack.c.b16 %v856, %v854
        %v895 = vpack.c.b16 %v859, %v857
        %v896 = vpack.c.b16 %v860, %v858
        %v897 = vpack.c.b16 %v863, %v861
        %v898 = vpack.c.b16 %v864, %v862
        %v899 = vpack.c.b16 %v867, %v865
        %v900 = vpack.c.b16 %v868, %v866
        %933 = vmatprep.subr.bf16.mxu0 %v870
        %934 = vmatpush1.bf16.msra.mxu0 %v869
        %935 = vmatprep.subr.bf16.mxu0 %v872
        %936 = vmatpush1.bf16.msra.mxu0 %v871
        %937 = vmatprep.subr.bf16.mxu0 %v874
        %938 = vmatpush1.bf16.msra.mxu0 %v873
        %939 = vmatprep.subr.bf16.mxu0 %v876
        %940 = vmatpush1.bf16.msra.mxu0 %v875
        %941 = vmatprep.subr.bf16.mxu0 %v878
        %942 = vmatpush1.bf16.msra.mxu0 %v877
        %943 = vmatprep.subr.bf16.mxu0 %v880
        %944 = vmatpush1.bf16.msra.mxu0 %v879
        %945 = vmatprep.subr.bf16.mxu0 %v882
        %946 = vmatpush1.bf16.msra.mxu0 %v881
        %947 = vmatprep.subr.bf16.mxu0 %v884
        %948 = vmatpush1.bf16.msra.mxu0 %v883
        %949 = vmatprep.subr.bf16.mxu0 %v886
        %950 = vmatpush1.bf16.msra.mxu0 %v885
        %951 = vmatprep.subr.bf16.mxu0 %v888
        %952 = vmatpush1.bf16.msra.mxu0 %v887
        %953 = vmatprep.subr.bf16.mxu0 %v890
        %954 = vmatpush1.bf16.msra.mxu0 %v889
        %955 = vmatprep.subr.bf16.mxu0 %v892
        %956 = vmatpush1.bf16.msra.mxu0 %v891
        %957 = vmatprep.subr.bf16.mxu0 %v894
        %958 = vmatpush1.bf16.msra.mxu0 %v893
        %959 = vmatprep.subr.bf16.mxu0 %v896
        %960 = vmatpush1.bf16.msra.mxu0 %v895
        %961 = vmatprep.subr.bf16.mxu0 %v898
        %962 = vmatpush1.bf16.msra.mxu0 %v897
        %963 = vmatprep.subr.bf16.mxu0 %v900
        %964 = vmatpush1.bf16.msra.mxu0 %v899
        %965 = vmatprep.mubr.bf16.mxu0 %v666
        %966 = vmatmul.mubr.bf16.gmra.mrb[0].mxu0 %v665
        %v967 = vpop.f32.mrb[0].mxu0
        %v968 = vadd.f32 %v766, %v967
        %v969 = vpop.f32.mrb[0].mxu0
        %v970 = vadd.f32 %v770, %v969
        %v971 = vpop.f32.mrb[0].mxu0
        %v972 = vadd.f32 %v766, %v971
        %v973 = vpop.f32.mrb[0].mxu0
        %v974 = vadd.f32 %v770, %v973
        %975 = vmatprep.mubr.bf16.mxu0 %v668
        %976 = vmatmul.mubr.bf16.gmra.mrb[0].mxu0 %v667
        %v977 = vpop.f32.mrb[0].mxu0
        %v978 = vadd.f32 %v766, %v977
        %v979 = vpop.f32.mrb[0].mxu0
        %v980 = vadd.f32 %v770, %v979
        %v981 = vpop.f32.mrb[0].mxu0
        %v982 = vadd.f32 %v766, %v981
        %v983 = vpop.f32.mrb[0].mxu0
        %v984 = vadd.f32 %v770, %v983
        %985 = vmatprep.mubr.bf16.mxu0 %v670
        %986 = vmatmul.mubr.bf16.gmra.mrb[0].mxu0 %v669
        %v987 = vpop.f32.mrb[0].mxu0
        %v988 = vadd.f32 %v766, %v987
        %v989 = vpop.f32.mrb[0].mxu0
        %v990 = vadd.f32 %v770, %v989
        %v991 = vpop.f32.mrb[0].mxu0
        %v992 = vadd.f32 %v766, %v991
        %v993 = vpop.f32.mrb[0].mxu0
        %v994 = vadd.f32 %v770, %v993
        %995 = vmatprep.mubr.bf16.mxu0 %v672
        %996 = vmatmul.mubr.bf16.gmra.mrb[0].mxu0 %v671
        %v997 = vpop.f32.mrb[0].mxu0
        %v998 = vadd.f32 %v766, %v997
        %v999 = vpop.f32.mrb[0].mxu0
        %v1000 = vadd.f32 %v770, %v999
        %v1001 = vpop.f32.mrb[0].mxu0
        %v1002 = vadd.f32 %v766, %v1001
        %v1003 = vpop.f32.mrb[0].mxu0
        %v1004 = vadd.f32 %v770, %v1003
        %1005 = vmatprep.mubr.bf16.mxu0 %v674
        %1006 = vmatmul.mubr.bf16.gmra.mrb[0].mxu0 %v673
        %v1007 = vpop.f32.mrb[0].mxu0
        %v1008 = vadd.f32 %v766, %v1007
        %v1009 = vpop.f32.mrb[0].mxu0
        %v1010 = vadd.f32 %v770, %v1009
        %v1011 = vpop.f32.mrb[0].mxu0
        %v1012 = vadd.f32 %v766, %v1011
        %v1013 = vpop.f32.mrb[0].mxu0
        %v1014 = vadd.f32 %v770, %v1013
        %1015 = vmatprep.mubr.bf16.mxu0 %v676
        %1016 = vmatmul.mubr.bf16.gmra.mrb[0].mxu0 %v675
        %v1017 = vpop.f32.mrb[0].mxu0
        %v1018 = vadd.f32 %v766, %v1017
        %v1019 = vpop.f32.mrb[0].mxu0
        %v1020 = vadd.f32 %v770, %v1019
        %v1021 = vpop.f32.mrb[0].mxu0
        %v1022 = vadd.f32 %v766, %v1021
        %v1023 = vpop.f32.mrb[0].mxu0
        %v1024 = vadd.f32 %v770, %v1023
        %1025 = vmatprep.mubr.bf16.mxu0 %v678
        %1026 = vmatmul.mubr.bf16.gmra.mrb[0].mxu0 %v677
        %v1027 = vpop.f32.mrb[0].mxu0
        %v1028 = vadd.f32 %v766, %v1027
        %v1029 = vpop.f32.mrb[0].mxu0
        %v1030 = vadd.f32 %v770, %v1029
        %v1031 = vpop.f32.mrb[0].mxu0
        %v1032 = vadd.f32 %v766, %v1031
        %v1033 = vpop.f32.mrb[0].mxu0
        %v1034 = vadd.f32 %v770, %v1033
        %1035 = vmatprep.mubr.bf16.mxu0 %v680
        %1036 = vmatmul.mubr.bf16.gmra.mrb[0].mxu0 %v679
        %v1037 = vpop.f32.mrb[0].mxu0
        %v1038 = vadd.f32 %v766, %v1037
        %v1039 = vpop.f32.mrb[0].mxu0
        %v1040 = vadd.f32 %v770, %v1039
        %v1041 = vpop.f32.mrb[0].mxu0
        %v1042 = vadd.f32 %v766, %v1041
        %v1043 = vpop.f32.mrb[0].mxu0
        %v1044 = vadd.f32 %v770, %v1043
        %1045 = vmatprep.mubr.bf16.mxu0 %v682
        %1046 = vmatmul.mubr.bf16.gmra.mrb[0].mxu0 %v681
        %v1047 = vpop.f32.mrb[0].mxu0
        %v1048 = vadd.f32 %v766, %v1047
        %v1049 = vpop.f32.mrb[0].mxu0
        %v1050 = vadd.f32 %v770, %v1049
        %v1051 = vpop.f32.mrb[0].mxu0
        %v1052 = vadd.f32 %v766, %v1051
        %v1053 = vpop.f32.mrb[0].mxu0
        %v1054 = vadd.f32 %v770, %v1053
        %1055 = vmatprep.mubr.bf16.mxu0 %v684
        %1056 = vmatmul.mubr.bf16.gmra.mrb[0].mxu0 %v683
        %v1057 = vpop.f32.mrb[0].mxu0
        %v1058 = vadd.f32 %v766, %v1057
        %v1059 = vpop.f32.mrb[0].mxu0
        %v1060 = vadd.f32 %v770, %v1059
        %v1061 = vpop.f32.mrb[0].mxu0
        %v1062 = vadd.f32 %v766, %v1061
        %v1063 = vpop.f32.mrb[0].mxu0
        %v1064 = vadd.f32 %v770, %v1063
        %1065 = vmatprep.mubr.bf16.mxu0 %v686
        %1066 = vmatmul.mubr.bf16.gmra.mrb[0].mxu0 %v685
        %v1067 = vpop.f32.mrb[0].mxu0
        %v1068 = vadd.f32 %v766, %v1067
        %v1069 = vpop.f32.mrb[0].mxu0
        %v1070 = vadd.f32 %v770, %v1069
        %v1071 = vpop.f32.mrb[0].mxu0
        %v1072 = vadd.f32 %v766, %v1071
        %v1073 = vpop.f32.mrb[0].mxu0
        %v1074 = vadd.f32 %v770, %v1073
        %1075 = vmatprep.mubr.bf16.mxu0 %v688
        %1076 = vmatmul.mubr.bf16.gmra.mrb[0].mxu0 %v687
        %v1077 = vpop.f32.mrb[0].mxu0
        %v1078 = vadd.f32 %v766, %v1077
        %v1079 = vpop.f32.mrb[0].mxu0
        %v1080 = vadd.f32 %v770, %v1079
        %v1081 = vpop.f32.mrb[0].mxu0
        %v1082 = vadd.f32 %v766, %v1081
        %v1083 = vpop.f32.mrb[0].mxu0
        %v1084 = vadd.f32 %v770, %v1083
        %1085 = vmatprep.mubr.bf16.mxu0 %v690
        %1086 = vmatmul.mubr.bf16.gmra.mrb[0].mxu0 %v689
        %v1087 = vpop.f32.mrb[0].mxu0
        %v1088 = vadd.f32 %v766, %v1087
        %v1089 = vpop.f32.mrb[0].mxu0
        %v1090 = vadd.f32 %v770, %v1089
        %v1091 = vpop.f32.mrb[0].mxu0
        %v1092 = vadd.f32 %v766, %v1091
        %v1093 = vpop.f32.mrb[0].mxu0
        %v1094 = vadd.f32 %v770, %v1093
        %1095 = vmatprep.mubr.bf16.mxu0 %v692
        %1096 = vmatmul.mubr.bf16.gmra.mrb[0].mxu0 %v691
        %v1097 = vpop.f32.mrb[0].mxu0
        %v1098 = vadd.f32 %v766, %v1097
        %v1099 = vpop.f32.mrb[0].mxu0
        %v1100 = vadd.f32 %v770, %v1099
        %v1101 = vpop.f32.mrb[0].mxu0
        %v1102 = vadd.f32 %v766, %v1101
        %v1103 = vpop.f32.mrb[0].mxu0
        %v1104 = vadd.f32 %v770, %v1103
        %1105 = vmatprep.mubr.bf16.mxu0 %v694
        %1106 = vmatmul.mubr.bf16.gmra.mrb[0].mxu0 %v693
        %v1107 = vpop.f32.mrb[0].mxu0
        %v1108 = vadd.f32 %v766, %v1107
        %v1109 = vpop.f32.mrb[0].mxu0
        %v1110 = vadd.f32 %v770, %v1109
        %v1111 = vpop.f32.mrb[0].mxu0
        %v1112 = vadd.f32 %v766, %v1111
        %v1113 = vpop.f32.mrb[0].mxu0
        %v1114 = vadd.f32 %v770, %v1113
        %1115 = vmatprep.mubr.bf16.mxu0 %v696
        %1116 = vmatmul.mubr.bf16.gmra.mrb[0].mxu0 %v695
        %v1117 = vpop.f32.mrb[0].mxu0
        %v1118 = vadd.f32 %v766, %v1117
        %v1119 = vpop.f32.mrb[0].mxu0
        %v1120 = vadd.f32 %v770, %v1119
        %v1121 = vpop.f32.mrb[0].mxu0
        %v1122 = vadd.f32 %v766, %v1121
        %v1123 = vpop.f32.mrb[0].mxu0
        %v1124 = vadd.f32 %v770, %v1123
        %1125 = vmatprep.mubr.bf16.mxu0 %v698
        %1126 = vmatmul.mubr.bf16.gmra.mrb[0].mxu0 %v697
        %v1127 = vpop.f32.mrb[0].mxu0
        %v1128 = vadd.f32 %v766, %v1127
        %v1129 = vpop.f32.mrb[0].mxu0
        %v1130 = vadd.f32 %v770, %v1129
        %v1131 = vpop.f32.mrb[0].mxu0
        %v1132 = vadd.f32 %v766, %v1131
        %v1133 = vpop.f32.mrb[0].mxu0
        %v1134 = vadd.f32 %v770, %v1133
        %1135 = vmatprep.mubr.bf16.mxu0 %v700
        %1136 = vmatmul.mubr.bf16.gmra.mrb[0].mxu0 %v699
        %v1137 = vpop.f32.mrb[0].mxu0
        %v1138 = vadd.f32 %v766, %v1137
        %v1139 = vpop.f32.mrb[0].mxu0
        %v1140 = vadd.f32 %v770, %v1139
        %v1141 = vpop.f32.mrb[0].mxu0
        %v1142 = vadd.f32 %v766, %v1141
        %v1143 = vpop.f32.mrb[0].mxu0
        %v1144 = vadd.f32 %v770, %v1143
        %1145 = vmatprep.mubr.bf16.mxu0 %v702
        %1146 = vmatmul.mubr.bf16.gmra.mrb[0].mxu0 %v701
        %v1147 = vpop.f32.mrb[0].mxu0
        %v1148 = vadd.f32 %v766, %v1147
        %v1149 = vpop.f32.mrb[0].mxu0
        %v1150 = vadd.f32 %v770, %v1149
        %v1151 = vpop.f32.mrb[0].mxu0
        %v1152 = vadd.f32 %v766, %v1151
        %v1153 = vpop.f32.mrb[0].mxu0
        %v1154 = vadd.f32 %v770, %v1153
        %1155 = vmatprep.mubr.bf16.mxu0 %v704
        %1156 = vmatmul.mubr.bf16.gmra.mrb[0].mxu0 %v703
        %v1157 = vpop.f32.mrb[0].mxu0
        %v1158 = vadd.f32 %v766, %v1157
        %v1159 = vpop.f32.mrb[0].mxu0
        %v1160 = vadd.f32 %v770, %v1159
        %v1161 = vpop.f32.mrb[0].mxu0
        %v1162 = vadd.f32 %v766, %v1161
        %v1163 = vpop.f32.mrb[0].mxu0
        %v1164 = vadd.f32 %v770, %v1163
        %1165 = vmatprep.mubr.bf16.mxu0 %v706
        %1166 = vmatmul.mubr.bf16.gmra.mrb[0].mxu0 %v705
        %v1167 = vpop.f32.mrb[0].mxu0
        %v1168 = vadd.f32 %v766, %v1167
        %v1169 = vpop.f32.mrb[0].mxu0
        %v1170 = vadd.f32 %v770, %v1169
        %v1171 = vpop.f32.mrb[0].mxu0
        %v1172 = vadd.f32 %v766, %v1171
        %v1173 = vpop.f32.mrb[0].mxu0
        %v1174 = vadd.f32 %v770, %v1173
        %1175 = vmatprep.mubr.bf16.mxu0 %v708
        %1176 = vmatmul.mubr.bf16.gmra.mrb[0].mxu0 %v707
        %v1177 = vpop.f32.mrb[0].mxu0
        %v1178 = vadd.f32 %v766, %v1177
        %v1179 = vpop.f32.mrb[0].mxu0
        %v1180 = vadd.f32 %v770, %v1179
        %v1181 = vpop.f32.mrb[0].mxu0
        %v1182 = vadd.f32 %v766, %v1181
        %v1183 = vpop.f32.mrb[0].mxu0
        %v1184 = vadd.f32 %v770, %v1183
        %1185 = vmatprep.mubr.bf16.mxu0 %v710
        %1186 = vmatmul.mubr.bf16.gmra.mrb[0].mxu0 %v709
        %v1187 = vpop.f32.mrb[0].mxu0
        %v1188 = vadd.f32 %v766, %v1187
        %v1189 = vpop.f32.mrb[0].mxu0
        %v1190 = vadd.f32 %v770, %v1189
        %v1191 = vpop.f32.mrb[0].mxu0
        %v1192 = vadd.f32 %v766, %v1191
        %v1193 = vpop.f32.mrb[0].mxu0
        %v1194 = vadd.f32 %v770, %v1193
        %1195 = vmatprep.mubr.bf16.mxu0 %v712
        %1196 = vmatmul.mubr.bf16.gmra.mrb[0].mxu0 %v711
        %v1197 = vpop.f32.mrb[0].mxu0
        %v1198 = vadd.f32 %v766, %v1197
        %v1199 = vpop.f32.mrb[0].mxu0
        %v1200 = vadd.f32 %v770, %v1199
        %v1201 = vpop.f32.mrb[0].mxu0
        %v1202 = vadd.f32 %v766, %v1201
        %v1203 = vpop.f32.mrb[0].mxu0
        %v1204 = vadd.f32 %v770, %v1203
        %1205 = vmatprep.mubr.bf16.mxu0 %v714
        %1206 = vmatmul.mubr.bf16.gmra.mrb[0].mxu0 %v713
        %v1207 = vpop.f32.mrb[0].mxu0
        %v1208 = vadd.f32 %v766, %v1207
        %v1209 = vpop.f32.mrb[0].mxu0
        %v1210 = vadd.f32 %v770, %v1209
        %v1211 = vpop.f32.mrb[0].mxu0
        %v1212 = vadd.f32 %v766, %v1211
        %v1213 = vpop.f32.mrb[0].mxu0
        %v1214 = vadd.f32 %v770, %v1213
        %1215 = vmatprep.mubr.bf16.mxu0 %v716
        %1216 = vmatmul.mubr.bf16.gmra.mrb[0].mxu0 %v715
        %v1217 = vpop.f32.mrb[0].mxu0
        %v1218 = vadd.f32 %v766, %v1217
        %v1219 = vpop.f32.mrb[0].mxu0
        %v1220 = vadd.f32 %v770, %v1219
        %v1221 = vpop.f32.mrb[0].mxu0
        %v1222 = vadd.f32 %v766, %v1221
        %v1223 = vpop.f32.mrb[0].mxu0
        %v1224 = vadd.f32 %v770, %v1223
        %1225 = vmatprep.mubr.bf16.mxu0 %v718
        %1226 = vmatmul.mubr.bf16.gmra.mrb[0].mxu0 %v717
        %v1227 = vpop.f32.mrb[0].mxu0
        %v1228 = vadd.f32 %v766, %v1227
        %v1229 = vpop.f32.mrb[0].mxu0
        %v1230 = vadd.f32 %v770, %v1229
        %v1231 = vpop.f32.mrb[0].mxu0
        %v1232 = vadd.f32 %v766, %v1231
        %v1233 = vpop.f32.mrb[0].mxu0
        %v1234 = vadd.f32 %v770, %v1233
        %1235 = vmatprep.mubr.bf16.mxu0 %v720
        %1236 = vmatmul.mubr.bf16.gmra.mrb[0].mxu0 %v719
        %v1237 = vpop.f32.mrb[0].mxu0
        %v1238 = vadd.f32 %v766, %v1237
        %v1239 = vpop.f32.mrb[0].mxu0
        %v1240 = vadd.f32 %v770, %v1239
        %v1241 = vpop.f32.mrb[0].mxu0
        %v1242 = vadd.f32 %v766, %v1241
        %v1243 = vpop.f32.mrb[0].mxu0
        %v1244 = vadd.f32 %v770, %v1243
        %1245 = vmatprep.mubr.bf16.mxu0 %v722
        %1246 = vmatmul.mubr.bf16.gmra.mrb[0].mxu0 %v721
        %v1247 = vpop.f32.mrb[0].mxu0
        %v1248 = vadd.f32 %v766, %v1247
        %v1249 = vpop.f32.mrb[0].mxu0
        %v1250 = vadd.f32 %v770, %v1249
        %v1251 = vpop.f32.mrb[0].mxu0
        %v1252 = vadd.f32 %v766, %v1251
        %v1253 = vpop.f32.mrb[0].mxu0
        %v1254 = vadd.f32 %v770, %v1253
        %1255 = vmatprep.mubr.bf16.mxu0 %v724
        %1256 = vmatmul.mubr.bf16.gmra.mrb[0].mxu0 %v723
        %v1257 = vpop.f32.mrb[0].mxu0
        %v1258 = vadd.f32 %v766, %v1257
        %v1259 = vpop.f32.mrb[0].mxu0
        %v1260 = vadd.f32 %v770, %v1259
        %v1261 = vpop.f32.mrb[0].mxu0
        %v1262 = vadd.f32 %v766, %v1261
        %v1263 = vpop.f32.mrb[0].mxu0
        %v1264 = vadd.f32 %v770, %v1263
        %1265 = vmatprep.mubr.bf16.mxu0 %v726
        %1266 = vmatmul.mubr.bf16.gmra.mrb[0].mxu0 %v725
        %v1267 = vpop.f32.mrb[0].mxu0
        %v1268 = vadd.f32 %v766, %v1267
        %v1269 = vpop.f32.mrb[0].mxu0
        %v1270 = vadd.f32 %v770, %v1269
        %v1271 = vpop.f32.mrb[0].mxu0
        %v1272 = vadd.f32 %v766, %v1271
        %v1273 = vpop.f32.mrb[0].mxu0
        %v1274 = vadd.f32 %v770, %v1273
        %1275 = vmatprep.mubr.bf16.mxu0 %v728
        %1276 = vmatmul.mubr.bf16.gmra.mrb[0].mxu0 %v727
        %v1277 = vpop.f32.mrb[0].mxu0
        %v1278 = vadd.f32 %v766, %v1277
        %v1279 = vpop.f32.mrb[0].mxu0
        %v1280 = vadd.f32 %v770, %v1279
        %v1281 = vpop.f32.mrb[0].mxu0
        %v1282 = vadd.f32 %v766, %v1281
        %v1283 = vpop.f32.mrb[0].mxu0
        %v1284 = vadd.f32 %v770, %v1283
        %1285 = vdwg.mxu0
        %v1286 = vmax.f32 %v968, 0.0
        %v1287 = vmax.f32 %v970, 0.0
        %v1288 = vmax.f32 %v972, 0.0
        %v1289 = vmax.f32 %v974, 0.0
        %v1290 = vmax.f32 %v978, 0.0
        %v1291 = vmax.f32 %v980, 0.0
        %v1292 = vmax.f32 %v982, 0.0
        %v1293 = vmax.f32 %v984, 0.0
        %v1294 = vmax.f32 %v988, 0.0
        %v1295 = vmax.f32 %v990, 0.0
        %v1296 = vmax.f32 %v992, 0.0
        %v1297 = vmax.f32 %v994, 0.0
        %v1298 = vmax.f32 %v998, 0.0
        %v1299 = vmax.f32 %v1000, 0.0
        %v1300 = vmax.f32 %v1002, 0.0
        %v1301 = vmax.f32 %v1004, 0.0
        %v1302 = vmax.f32 %v1008, 0.0
        %v1303 = vmax.f32 %v1010, 0.0
        %v1304 = vmax.f32 %v1012, 0.0
        %v1305 = vmax.f32 %v1014, 0.0
        %v1306 = vmax.f32 %v1018, 0.0
        %v1307 = vmax.f32 %v1020, 0.0
        %v1308 = vmax.f32 %v1022, 0.0
        %v1309 = vmax.f32 %v1024, 0.0
        %v1310 = vmax.f32 %v1028, 0.0
        %v1311 = vmax.f32 %v1030, 0.0
        %v1312 = vmax.f32 %v1032, 0.0
        %v1313 = vmax.f32 %v1034, 0.0
        %v1314 = vmax.f32 %v1038, 0.0
        %v1315 = vmax.f32 %v1040, 0.0
        %v1316 = vmax.f32 %v1042, 0.0
        %v1317 = vmax.f32 %v1044, 0.0
        %v1318 = vmax.f32 %v1048, 0.0
        %v1319 = vmax.f32 %v1050, 0.0
        %v1320 = vmax.f32 %v1052, 0.0
        %v1321 = vmax.f32 %v1054, 0.0
        %v1322 = vmax.f32 %v1058, 0.0
        %v1323 = vmax.f32 %v1060, 0.0
        %v1324 = vmax.f32 %v1062, 0.0
        %v1325 = vmax.f32 %v1064, 0.0
        %v1326 = vmax.f32 %v1068, 0.0
        %v1327 = vmax.f32 %v1070, 0.0
        %v1328 = vmax.f32 %v1072, 0.0
        %v1329 = vmax.f32 %v1074, 0.0
        %v1330 = vmax.f32 %v1078, 0.0
        %v1331 = vmax.f32 %v1080, 0.0
        %v1332 = vmax.f32 %v1082, 0.0
        %v1333 = vmax.f32 %v1084, 0.0
        %v1334 = vmax.f32 %v1088, 0.0
        %v1335 = vmax.f32 %v1090, 0.0
        %v1336 = vmax.f32 %v1092, 0.0
        %v1337 = vmax.f32 %v1094, 0.0
        %v1338 = vmax.f32 %v1098, 0.0
        %v1339 = vmax.f32 %v1100, 0.0
        %v1340 = vmax.f32 %v1102, 0.0
        %v1341 = vmax.f32 %v1104, 0.0
        %v1342 = vmax.f32 %v1108, 0.0
        %v1343 = vmax.f32 %v1110, 0.0
        %v1344 = vmax.f32 %v1112, 0.0
        %v1345 = vmax.f32 %v1114, 0.0
        %v1346 = vmax.f32 %v1118, 0.0
        %v1347 = vmax.f32 %v1120, 0.0
        %v1348 = vmax.f32 %v1122, 0.0
        %v1349 = vmax.f32 %v1124, 0.0
        %v1350 = vmax.f32 %v1128, 0.0
        %v1351 = vmax.f32 %v1130, 0.0
        %v1352 = vmax.f32 %v1132, 0.0
        %v1353 = vmax.f32 %v1134, 0.0
        %v1354 = vmax.f32 %v1138, 0.0
        %v1355 = vmax.f32 %v1140, 0.0
        %v1356 = vmax.f32 %v1142, 0.0
        %v1357 = vmax.f32 %v1144, 0.0
        %v1358 = vmax.f32 %v1148, 0.0
        %v1359 = vmax.f32 %v1150, 0.0
        %v1360 = vmax.f32 %v1152, 0.0
        %v1361 = vmax.f32 %v1154, 0.0
        %v1362 = vmax.f32 %v1158, 0.0
        %v1363 = vmax.f32 %v1160, 0.0
        %v1364 = vmax.f32 %v1162, 0.0
        %v1365 = vmax.f32 %v1164, 0.0
        %v1366 = vmax.f32 %v1168, 0.0
        %v1367 = vmax.f32 %v1170, 0.0
        %v1368 = vmax.f32 %v1172, 0.0
        %v1369 = vmax.f32 %v1174, 0.0
        %v1370 = vmax.f32 %v1178, 0.0
        %v1371 = vmax.f32 %v1180, 0.0
        %v1372 = vmax.f32 %v1182, 0.0
        %v1373 = vmax.f32 %v1184, 0.0
        %v1374 = vmax.f32 %v1188, 0.0
        %v1375 = vmax.f32 %v1190, 0.0
        %v1376 = vmax.f32 %v1192, 0.0
        %v1377 = vmax.f32 %v1194, 0.0
        %v1378 = vmax.f32 %v1198, 0.0
        %v1379 = vmax.f32 %v1200, 0.0
        %v1380 = vmax.f32 %v1202, 0.0
        %v1381 = vmax.f32 %v1204, 0.0
        %v1382 = vmax.f32 %v1208, 0.0
        %v1383 = vmax.f32 %v1210, 0.0
        %v1384 = vmax.f32 %v1212, 0.0
        %v1385 = vmax.f32 %v1214, 0.0
        %v1386 = vmax.f32 %v1218, 0.0
        %v1387 = vmax.f32 %v1220, 0.0
        %v1388 = vmax.f32 %v1222, 0.0
        %v1389 = vmax.f32 %v1224, 0.0
        %v1390 = vmax.f32 %v1228, 0.0
        %v1391 = vmax.f32 %v1230, 0.0
        %v1392 = vmax.f32 %v1232, 0.0
        %v1393 = vmax.f32 %v1234, 0.0
        %v1394 = vmax.f32 %v1238, 0.0
        %v1395 = vmax.f32 %v1240, 0.0
        %v1396 = vmax.f32 %v1242, 0.0
        %v1397 = vmax.f32 %v1244, 0.0
        %v1398 = vmax.f32 %v1248, 0.0
        %v1399 = vmax.f32 %v1250, 0.0
        %v1400 = vmax.f32 %v1252, 0.0
        %v1401 = vmax.f32 %v1254, 0.0
        %v1402 = vmax.f32 %v1258, 0.0
        %v1403 = vmax.f32 %v1260, 0.0
        %v1404 = vmax.f32 %v1262, 0.0
        %v1405 = vmax.f32 %v1264, 0.0
        %v1406 = vmax.f32 %v1268, 0.0
        %v1407 = vmax.f32 %v1270, 0.0
        %v1408 = vmax.f32 %v1272, 0.0
        %v1409 = vmax.f32 %v1274, 0.0
        %v1410 = vmax.f32 %v1278, 0.0
        %v1411 = vmax.f32 %v1280, 0.0
        %v1412 = vmax.f32 %v1282, 0.0
        %v1413 = vmax.f32 %v1284, 0.0
        %v1414 = vpack.c.bf16 %v1288, %v1286
        %v1415 = vpack.c.bf16 %v1289, %v1287
        %v1416 = vpack.c.bf16 %v1292, %v1290
        %v1417 = vpack.c.bf16 %v1293, %v1291
        %v1418 = vpack.c.bf16 %v1296, %v1294
        %v1419 = vpack.c.bf16 %v1297, %v1295
        %v1420 = vpack.c.bf16 %v1300, %v1298
        %v1421 = vpack.c.bf16 %v1301, %v1299
        %v1422 = vpack.c.bf16 %v1304, %v1302
        %v1423 = vpack.c.bf16 %v1305, %v1303
        %v1424 = vpack.c.bf16 %v1308, %v1306
        %v1425 = vpack.c.bf16 %v1309, %v1307
        %v1426 = vpack.c.bf16 %v1312, %v1310
        %v1427 = vpack.c.bf16 %v1313, %v1311
        %v1428 = vpack.c.bf16 %v1316, %v1314
        %v1429 = vpack.c.bf16 %v1317, %v1315
        %v1430 = vpack.c.bf16 %v1320, %v1318
        %v1431 = vpack.c.bf16 %v1321, %v1319
        %v1432 = vpack.c.bf16 %v1324, %v1322
        %v1433 = vpack.c.bf16 %v1325, %v1323
        %v1434 = vpack.c.bf16 %v1328, %v1326
        %v1435 = vpack.c.bf16 %v1329, %v1327
        %v1436 = vpack.c.bf16 %v1332, %v1330
        %v1437 = vpack.c.bf16 %v1333, %v1331
        %v1438 = vpack.c.bf16 %v1336, %v1334
        %v1439 = vpack.c.bf16 %v1337, %v1335
        %v1440 = vpack.c.bf16 %v1340, %v1338
        %v1441 = vpack.c.bf16 %v1341, %v1339
        %v1442 = vpack.c.bf16 %v1344, %v1342
        %v1443 = vpack.c.bf16 %v1345, %v1343
        %v1444 = vpack.c.bf16 %v1348, %v1346
        %v1445 = vpack.c.bf16 %v1349, %v1347
        %v1446 = vpack.c.bf16 %v1352, %v1350
        %v1447 = vpack.c.bf16 %v1353, %v1351
        %v1448 = vpack.c.bf16 %v1356, %v1354
        %v1449 = vpack.c.bf16 %v1357, %v1355
        %v1450 = vpack.c.bf16 %v1360, %v1358
        %v1451 = vpack.c.bf16 %v1361, %v1359
        %v1452 = vpack.c.bf16 %v1364, %v1362
        %v1453 = vpack.c.bf16 %v1365, %v1363
        %v1454 = vpack.c.bf16 %v1368, %v1366
        %v1455 = vpack.c.bf16 %v1369, %v1367
        %v1456 = vpack.c.bf16 %v1372, %v1370
        %v1457 = vpack.c.bf16 %v1373, %v1371
        %v1458 = vpack.c.bf16 %v1376, %v1374
        %v1459 = vpack.c.bf16 %v1377, %v1375
        %v1460 = vpack.c.bf16 %v1380, %v1378
        %v1461 = vpack.c.bf16 %v1381, %v1379
        %v1462 = vpack.c.bf16 %v1384, %v1382
        %v1463 = vpack.c.bf16 %v1385, %v1383
        %v1464 = vpack.c.bf16 %v1388, %v1386
        %v1465 = vpack.c.bf16 %v1389, %v1387
        %v1466 = vpack.c.bf16 %v1392, %v1390
        %v1467 = vpack.c.bf16 %v1393, %v1391
        %v1468 = vpack.c.bf16 %v1396, %v1394
        %v1469 = vpack.c.bf16 %v1397, %v1395
        %v1470 = vpack.c.bf16 %v1400, %v1398
        %v1471 = vpack.c.bf16 %v1401, %v1399
        %v1472 = vpack.c.bf16 %v1404, %v1402
        %v1473 = vpack.c.bf16 %v1405, %v1403
        %v1474 = vpack.c.bf16 %v1408, %v1406
        %v1475 = vpack.c.bf16 %v1409, %v1407
        %v1476 = vpack.c.bf16 %v1412, %v1410
        %v1477 = vpack.c.bf16 %v1413, %v1411
        %v1478 = vld [vmem:[%s4] sm:$0xf]
        %v1479 = vld [vmem:[%s4 + $0x4] sm:$0xf]
        %v1480 = vld [vmem:[%s4 + $0x8] sm:$0xf]
        %v1481 = vld [vmem:[%s4 + $0xc] sm:$0xf]
        %v1482 = vld [vmem:[%s4 + $0x10] sm:$0xf]
        %v1483 = vld [vmem:[%s4 + $0x14] sm:$0xf]
        %v1484 = vld [vmem:[%s4 + $0x18] sm:$0xf]
        %v1485 = vld [vmem:[%s4 + $0x1c] sm:$0xf]
        %v1486 = vld [vmem:[%s4 + $0x20] sm:$0xf]
        %v1487 = vld [vmem:[%s4 + $0x24] sm:$0xf]
        %v1488 = vld [vmem:[%s4 + $0x28] sm:$0xf]
        %v1489 = vld [vmem:[%s4 + $0x2c] sm:$0xf]
        %v1490 = vld [vmem:[%s4 + $0x30] sm:$0xf]
        %v1491 = vld [vmem:[%s4 + $0x34] sm:$0xf]
        %v1492 = vld [vmem:[%s4 + $0x38] sm:$0xf]
        %v1493 = vld [vmem:[%s4 + $0x3c] sm:$0xf]
        %v1494 = vld [vmem:[%s4 + $0x40] sm:$0xf]
        %v1495 = vld [vmem:[%s4 + $0x44] sm:$0xf]
        %v1496 = vld [vmem:[%s4 + $0x48] sm:$0xf]
        %v1497 = vld [vmem:[%s4 + $0x4c] sm:$0xf]
        %v1498 = vld [vmem:[%s4 + $0x50] sm:$0xf]
        %v1499 = vld [vmem:[%s4 + $0x54] sm:$0xf]
        %v1500 = vld [vmem:[%s4 + $0x58] sm:$0xf]
        %v1501 = vld [vmem:[%s4 + $0x5c] sm:$0xf]
        %v1502 = vld [vmem:[%s4 + $0x60] sm:$0xf]
        %v1503 = vld [vmem:[%s4 + $0x64] sm:$0xf]
        %v1504 = vld [vmem:[%s4 + $0x68] sm:$0xf]
        %v1505 = vld [vmem:[%s4 + $0x6c] sm:$0xf]
        %v1506 = vld [vmem:[%s4 + $0x70] sm:$0xf]
        %v1507 = vld [vmem:[%s4 + $0x74] sm:$0xf]
        %v1508 = vld [vmem:[%s4 + $0x78] sm:$0xf]
        %v1509 = vld [vmem:[%s4 + $0x7c] sm:$0xf]
        %v1510 = vld [vmem:[#allocation8] sm:$0x1]
        %v1512 = vlaneseq
        %v1513 = vshrl.u32 %v1512, 7
        %v1514 = vsub.s32 0, %v1513
        %v1515 = vrot.slane %v1510, %v1514
        %v1549 = vunpack.c.l.b16 %v1478
        %v1550 = vunpack.c.l.b16 %v1479
        %v1551 = vunpack.c.l.b16 %v1480
        %v1552 = vunpack.c.l.b16 %v1481
        %v1553 = vunpack.c.l.b16 %v1482
        %v1554 = vunpack.c.l.b16 %v1483
        %v1555 = vunpack.c.l.b16 %v1484
        %v1556 = vunpack.c.l.b16 %v1485
        %v1557 = vunpack.c.l.b16 %v1486
        %v1558 = vunpack.c.l.b16 %v1487
        %v1559 = vunpack.c.l.b16 %v1488
        %v1560 = vunpack.c.l.b16 %v1489
        %v1561 = vunpack.c.l.b16 %v1490
        %v1562 = vunpack.c.l.b16 %v1491
        %v1563 = vunpack.c.l.b16 %v1492
        %v1564 = vunpack.c.l.b16 %v1493
        %v1565 = vunpack.c.l.b16 %v1494
        %v1566 = vunpack.c.l.b16 %v1495
        %v1567 = vunpack.c.l.b16 %v1496
        %v1568 = vunpack.c.l.b16 %v1497
        %v1569 = vunpack.c.l.b16 %v1498
        %v1570 = vunpack.c.l.b16 %v1499
        %v1571 = vunpack.c.l.b16 %v1500
        %v1572 = vunpack.c.l.b16 %v1501
        %v1573 = vunpack.c.l.b16 %v1502
        %v1574 = vunpack.c.l.b16 %v1503
        %v1575 = vunpack.c.l.b16 %v1504
        %v1576 = vunpack.c.l.b16 %v1505
        %v1577 = vunpack.c.l.b16 %v1506
        %v1578 = vunpack.c.l.b16 %v1507
        %v1579 = vunpack.c.l.b16 %v1508
        %v1580 = vunpack.c.l.b16 %v1509
        %v1581 = vpack.c.b16 %v1550, %v1549
        %v1582 = vpack.c.b16 %v1552, %v1551
        %v1583 = vpack.c.b16 %v1554, %v1553
        %v1584 = vpack.c.b16 %v1556, %v1555
        %v1585 = vpack.c.b16 %v1558, %v1557
        %v1586 = vpack.c.b16 %v1560, %v1559
        %v1587 = vpack.c.b16 %v1562, %v1561
        %v1588 = vpack.c.b16 %v1564, %v1563
        %v1589 = vpack.c.b16 %v1566, %v1565
        %v1590 = vpack.c.b16 %v1568, %v1567
        %v1591 = vpack.c.b16 %v1570, %v1569
        %v1592 = vpack.c.b16 %v1572, %v1571
        %v1593 = vpack.c.b16 %v1574, %v1573
        %v1594 = vpack.c.b16 %v1576, %v1575
        %v1595 = vpack.c.b16 %v1578, %v1577
        %v1596 = vpack.c.b16 %v1580, %v1579
        %1613 = vmatprep.subr.bf16.mxu0 0
        %1614 = vmatpush1.bf16.msra.mxu0 %v1581
        %1615 = vmatprep.subr.bf16.mxu0 0
        %1616 = vmatpush1.bf16.msra.mxu0 %v1582
        %1617 = vmatprep.subr.bf16.mxu0 0
        %1618 = vmatpush1.bf16.msra.mxu0 %v1583
        %1619 = vmatprep.subr.bf16.mxu0 0
        %1620 = vmatpush1.bf16.msra.mxu0 %v1584
        %1621 = vmatprep.subr.bf16.mxu0 0
        %1622 = vmatpush1.bf16.msra.mxu0 %v1585
        %1623 = vmatprep.subr.bf16.mxu0 0
        %1624 = vmatpush1.bf16.msra.mxu0 %v1586
        %1625 = vmatprep.subr.bf16.mxu0 0
        %1626 = vmatpush1.bf16.msra.mxu0 %v1587
        %1627 = vmatprep.subr.bf16.mxu0 0
        %1628 = vmatpush1.bf16.msra.mxu0 %v1588
        %1629 = vmatprep.subr.bf16.mxu0 0
        %1630 = vmatpush1.bf16.msra.mxu0 %v1589
        %1631 = vmatprep.subr.bf16.mxu0 0
        %1632 = vmatpush1.bf16.msra.mxu0 %v1590
        %1633 = vmatprep.subr.bf16.mxu0 0
        %1634 = vmatpush1.bf16.msra.mxu0 %v1591
        %1635 = vmatprep.subr.bf16.mxu0 0
        %1636 = vmatpush1.bf16.msra.mxu0 %v1592
        %1637 = vmatprep.subr.bf16.mxu0 0
        %1638 = vmatpush1.bf16.msra.mxu0 %v1593
        %1639 = vmatprep.subr.bf16.mxu0 0
        %1640 = vmatpush1.bf16.msra.mxu0 %v1594
        %1641 = vmatprep.subr.bf16.mxu0 0
        %1642 = vmatpush1.bf16.msra.mxu0 %v1595
        %1643 = vmatprep.subr.bf16.mxu0 0
        %1644 = vmatpush1.bf16.msra.mxu0 %v1596
        %1645 = vmatprep.mubr.bf16.mxu0 %v1415
        %1646 = vmatmul.mubr.bf16.gmra.mrb[0].mxu0 %v1414
        %v1647 = vpop.f32.mrb[0].mxu0
        %v1648 = vadd.f32 %v1515, %v1647
        %v1649 = vpop.f32.mrb[0].mxu0
        %v1650 = vpop.f32.mrb[0].mxu0
        %v1651 = vadd.f32 %v1515, %v1650
        %v1652 = vpop.f32.mrb[0].mxu0
        %1653 = vmatprep.mubr.bf16.mxu0 %v1417
        %1654 = vmatmul.mubr.bf16.gmra.mrb[0].mxu0 %v1416
        %v1655 = vpop.f32.mrb[0].mxu0
        %v1656 = vadd.f32 %v1515, %v1655
        %v1657 = vpop.f32.mrb[0].mxu0
        %v1658 = vpop.f32.mrb[0].mxu0
        %v1659 = vadd.f32 %v1515, %v1658
        %v1660 = vpop.f32.mrb[0].mxu0
        %1661 = vmatprep.mubr.bf16.mxu0 %v1419
        %1662 = vmatmul.mubr.bf16.gmra.mrb[0].mxu0 %v1418
        %v1663 = vpop.f32.mrb[0].mxu0
        %v1664 = vadd.f32 %v1515, %v1663
        %v1665 = vpop.f32.mrb[0].mxu0
        %v1666 = vpop.f32.mrb[0].mxu0
        %v1667 = vadd.f32 %v1515, %v1666
        %v1668 = vpop.f32.mrb[0].mxu0
        %1669 = vmatprep.mubr.bf16.mxu0 %v1421
        %1670 = vmatmul.mubr.bf16.gmra.mrb[0].mxu0 %v1420
        %v1671 = vpop.f32.mrb[0].mxu0
        %v1672 = vadd.f32 %v1515, %v1671
        %v1673 = vpop.f32.mrb[0].mxu0
        %v1674 = vpop.f32.mrb[0].mxu0
        %v1675 = vadd.f32 %v1515, %v1674
        %v1676 = vpop.f32.mrb[0].mxu0
        %1677 = vmatprep.mubr.bf16.mxu0 %v1423
        %1678 = vmatmul.mubr.bf16.gmra.mrb[0].mxu0 %v1422
        %v1679 = vpop.f32.mrb[0].mxu0
        %v1680 = vadd.f32 %v1515, %v1679
        %v1681 = vpop.f32.mrb[0].mxu0
        %v1682 = vpop.f32.mrb[0].mxu0
        %v1683 = vadd.f32 %v1515, %v1682
        %v1684 = vpop.f32.mrb[0].mxu0
        %1685 = vmatprep.mubr.bf16.mxu0 %v1425
        %1686 = vmatmul.mubr.bf16.gmra.mrb[0].mxu0 %v1424
        %v1687 = vpop.f32.mrb[0].mxu0
        %v1688 = vadd.f32 %v1515, %v1687
        %v1689 = vpop.f32.mrb[0].mxu0
        %v1690 = vpop.f32.mrb[0].mxu0
        %v1691 = vadd.f32 %v1515, %v1690
        %v1692 = vpop.f32.mrb[0].mxu0
        %1693 = vmatprep.mubr.bf16.mxu0 %v1427
        %1694 = vmatmul.mubr.bf16.gmra.mrb[0].mxu0 %v1426
        %v1695 = vpop.f32.mrb[0].mxu0
        %v1696 = vadd.f32 %v1515, %v1695
        %v1697 = vpop.f32.mrb[0].mxu0
        %v1698 = vpop.f32.mrb[0].mxu0
        %v1699 = vadd.f32 %v1515, %v1698
        %v1700 = vpop.f32.mrb[0].mxu0
        %1701 = vmatprep.mubr.bf16.mxu0 %v1429
        %1702 = vmatmul.mubr.bf16.gmra.mrb[0].mxu0 %v1428
        %v1703 = vpop.f32.mrb[0].mxu0
        %v1704 = vadd.f32 %v1515, %v1703
        %v1705 = vpop.f32.mrb[0].mxu0
        %v1706 = vpop.f32.mrb[0].mxu0
        %v1707 = vadd.f32 %v1515, %v1706
        %v1708 = vpop.f32.mrb[0].mxu0
        %1709 = vmatprep.mubr.bf16.mxu0 %v1431
        %1710 = vmatmul.mubr.bf16.gmra.mrb[0].mxu0 %v1430
        %v1711 = vpop.f32.mrb[0].mxu0
        %v1712 = vadd.f32 %v1515, %v1711
        %v1713 = vpop.f32.mrb[0].mxu0
        %v1714 = vpop.f32.mrb[0].mxu0
        %v1715 = vadd.f32 %v1515, %v1714
        %v1716 = vpop.f32.mrb[0].mxu0
        %1717 = vmatprep.mubr.bf16.mxu0 %v1433
        %1718 = vmatmul.mubr.bf16.gmra.mrb[0].mxu0 %v1432
        %v1719 = vpop.f32.mrb[0].mxu0
        %v1720 = vadd.f32 %v1515, %v1719
        %v1721 = vpop.f32.mrb[0].mxu0
        %v1722 = vpop.f32.mrb[0].mxu0
        %v1723 = vadd.f32 %v1515, %v1722
        %v1724 = vpop.f32.mrb[0].mxu0
        %1725 = vmatprep.mubr.bf16.mxu0 %v1435
        %1726 = vmatmul.mubr.bf16.gmra.mrb[0].mxu0 %v1434
        %v1727 = vpop.f32.mrb[0].mxu0
        %v1728 = vadd.f32 %v1515, %v1727
        %v1729 = vpop.f32.mrb[0].mxu0
        %v1730 = vpop.f32.mrb[0].mxu0
        %v1731 = vadd.f32 %v1515, %v1730
        %v1732 = vpop.f32.mrb[0].mxu0
        %1733 = vmatprep.mubr.bf16.mxu0 %v1437
        %1734 = vmatmul.mubr.bf16.gmra.mrb[0].mxu0 %v1436
        %v1735 = vpop.f32.mrb[0].mxu0
        %v1736 = vadd.f32 %v1515, %v1735
        %v1737 = vpop.f32.mrb[0].mxu0
        %v1738 = vpop.f32.mrb[0].mxu0
        %v1739 = vadd.f32 %v1515, %v1738
        %v1740 = vpop.f32.mrb[0].mxu0
        %1741 = vmatprep.mubr.bf16.mxu0 %v1439
        %1742 = vmatmul.mubr.bf16.gmra.mrb[0].mxu0 %v1438
        %v1743 = vpop.f32.mrb[0].mxu0
        %v1744 = vadd.f32 %v1515, %v1743
        %v1745 = vpop.f32.mrb[0].mxu0
        %v1746 = vpop.f32.mrb[0].mxu0
        %v1747 = vadd.f32 %v1515, %v1746
        %v1748 = vpop.f32.mrb[0].mxu0
        %1749 = vmatprep.mubr.bf16.mxu0 %v1441
        %1750 = vmatmul.mubr.bf16.gmra.mrb[0].mxu0 %v1440
        %v1751 = vpop.f32.mrb[0].mxu0
        %v1752 = vadd.f32 %v1515, %v1751
        %v1753 = vpop.f32.mrb[0].mxu0
        %v1754 = vpop.f32.mrb[0].mxu0
        %v1755 = vadd.f32 %v1515, %v1754
        %v1756 = vpop.f32.mrb[0].mxu0
        %1757 = vmatprep.mubr.bf16.mxu0 %v1443
        %1758 = vmatmul.mubr.bf16.gmra.mrb[0].mxu0 %v1442
        %v1759 = vpop.f32.mrb[0].mxu0
        %v1760 = vadd.f32 %v1515, %v1759
        %v1761 = vpop.f32.mrb[0].mxu0
        %v1762 = vpop.f32.mrb[0].mxu0
        %v1763 = vadd.f32 %v1515, %v1762
        %v1764 = vpop.f32.mrb[0].mxu0
        %1765 = vmatprep.mubr.bf16.mxu0 %v1445
        %1766 = vmatmul.mubr.bf16.gmra.mrb[0].mxu0 %v1444
        %v1767 = vpop.f32.mrb[0].mxu0
        %v1768 = vadd.f32 %v1515, %v1767
        %v1769 = vpop.f32.mrb[0].mxu0
        %v1770 = vpop.f32.mrb[0].mxu0
        %v1771 = vadd.f32 %v1515, %v1770
        %v1772 = vpop.f32.mrb[0].mxu0
        %1773 = vmatprep.mubr.bf16.mxu0 %v1447
        %1774 = vmatmul.mubr.bf16.gmra.mrb[0].mxu0 %v1446
        %v1775 = vpop.f32.mrb[0].mxu0
        %v1776 = vadd.f32 %v1515, %v1775
        %v1777 = vpop.f32.mrb[0].mxu0
        %v1778 = vpop.f32.mrb[0].mxu0
        %v1779 = vadd.f32 %v1515, %v1778
        %v1780 = vpop.f32.mrb[0].mxu0
        %1781 = vmatprep.mubr.bf16.mxu0 %v1449
        %1782 = vmatmul.mubr.bf16.gmra.mrb[0].mxu0 %v1448
        %v1783 = vpop.f32.mrb[0].mxu0
        %v1784 = vadd.f32 %v1515, %v1783
        %v1785 = vpop.f32.mrb[0].mxu0
        %v1786 = vpop.f32.mrb[0].mxu0
        %v1787 = vadd.f32 %v1515, %v1786
        %v1788 = vpop.f32.mrb[0].mxu0
        %1789 = vmatprep.mubr.bf16.mxu0 %v1451
        %1790 = vmatmul.mubr.bf16.gmra.mrb[0].mxu0 %v1450
        %v1791 = vpop.f32.mrb[0].mxu0
        %v1792 = vadd.f32 %v1515, %v1791
        %v1793 = vpop.f32.mrb[0].mxu0
        %v1794 = vpop.f32.mrb[0].mxu0
        %v1795 = vadd.f32 %v1515, %v1794
        %v1796 = vpop.f32.mrb[0].mxu0
        %1797 = vmatprep.mubr.bf16.mxu0 %v1453
        %1798 = vmatmul.mubr.bf16.gmra.mrb[0].mxu0 %v1452
        %v1799 = vpop.f32.mrb[0].mxu0
        %v1800 = vadd.f32 %v1515, %v1799
        %v1801 = vpop.f32.mrb[0].mxu0
        %v1802 = vpop.f32.mrb[0].mxu0
        %v1803 = vadd.f32 %v1515, %v1802
        %v1804 = vpop.f32.mrb[0].mxu0
        %1805 = vmatprep.mubr.bf16.mxu0 %v1455
        %1806 = vmatmul.mubr.bf16.gmra.mrb[0].mxu0 %v1454
        %v1807 = vpop.f32.mrb[0].mxu0
        %v1808 = vadd.f32 %v1515, %v1807
        %v1809 = vpop.f32.mrb[0].mxu0
        %v1810 = vpop.f32.mrb[0].mxu0
        %v1811 = vadd.f32 %v1515, %v1810
        %v1812 = vpop.f32.mrb[0].mxu0
        %1813 = vmatprep.mubr.bf16.mxu0 %v1457
        %1814 = vmatmul.mubr.bf16.gmra.mrb[0].mxu0 %v1456
        %v1815 = vpop.f32.mrb[0].mxu0
        %v1816 = vadd.f32 %v1515, %v1815
        %v1817 = vpop.f32.mrb[0].mxu0
        %v1818 = vpop.f32.mrb[0].mxu0
        %v1819 = vadd.f32 %v1515, %v1818
        %v1820 = vpop.f32.mrb[0].mxu0
        %1821 = vmatprep.mubr.bf16.mxu0 %v1459
        %1822 = vmatmul.mubr.bf16.gmra.mrb[0].mxu0 %v1458
        %v1823 = vpop.f32.mrb[0].mxu0
        %v1824 = vadd.f32 %v1515, %v1823
        %v1825 = vpop.f32.mrb[0].mxu0
        %v1826 = vpop.f32.mrb[0].mxu0
        %v1827 = vadd.f32 %v1515, %v1826
        %v1828 = vpop.f32.mrb[0].mxu0
        %1829 = vmatprep.mubr.bf16.mxu0 %v1461
        %1830 = vmatmul.mubr.bf16.gmra.mrb[0].mxu0 %v1460
        %v1831 = vpop.f32.mrb[0].mxu0
        %v1832 = vadd.f32 %v1515, %v1831
        %v1833 = vpop.f32.mrb[0].mxu0
        %v1834 = vpop.f32.mrb[0].mxu0
        %v1835 = vadd.f32 %v1515, %v1834
        %v1836 = vpop.f32.mrb[0].mxu0
        %1837 = vmatprep.mubr.bf16.mxu0 %v1463
        %1838 = vmatmul.mubr.bf16.gmra.mrb[0].mxu0 %v1462
        %v1839 = vpop.f32.mrb[0].mxu0
        %v1840 = vadd.f32 %v1515, %v1839
        %v1841 = vpop.f32.mrb[0].mxu0
        %v1842 = vpop.f32.mrb[0].mxu0
        %v1843 = vadd.f32 %v1515, %v1842
        %v1844 = vpop.f32.mrb[0].mxu0
        %1845 = vmatprep.mubr.bf16.mxu0 %v1465
        %1846 = vmatmul.mubr.bf16.gmra.mrb[0].mxu0 %v1464
        %v1847 = vpop.f32.mrb[0].mxu0
        %v1848 = vadd.f32 %v1515, %v1847
        %v1849 = vpop.f32.mrb[0].mxu0
        %v1850 = vpop.f32.mrb[0].mxu0
        %v1851 = vadd.f32 %v1515, %v1850
        %v1852 = vpop.f32.mrb[0].mxu0
        %1853 = vmatprep.mubr.bf16.mxu0 %v1467
        %1854 = vmatmul.mubr.bf16.gmra.mrb[0].mxu0 %v1466
        %v1855 = vpop.f32.mrb[0].mxu0
        %v1856 = vadd.f32 %v1515, %v1855
        %v1857 = vpop.f32.mrb[0].mxu0
        %v1858 = vpop.f32.mrb[0].mxu0
        %v1859 = vadd.f32 %v1515, %v1858
        %v1860 = vpop.f32.mrb[0].mxu0
        %1861 = vmatprep.mubr.bf16.mxu0 %v1469
        %1862 = vmatmul.mubr.bf16.gmra.mrb[0].mxu0 %v1468
        %v1863 = vpop.f32.mrb[0].mxu0
        %v1864 = vadd.f32 %v1515, %v1863
        %v1865 = vpop.f32.mrb[0].mxu0
        %v1866 = vpop.f32.mrb[0].mxu0
        %v1867 = vadd.f32 %v1515, %v1866
        %v1868 = vpop.f32.mrb[0].mxu0
        %1869 = vmatprep.mubr.bf16.mxu0 %v1471
        %1870 = vmatmul.mubr.bf16.gmra.mrb[0].mxu0 %v1470
        %v1871 = vpop.f32.mrb[0].mxu0
        %v1872 = vadd.f32 %v1515, %v1871
        %v1873 = vpop.f32.mrb[0].mxu0
        %v1874 = vpop.f32.mrb[0].mxu0
        %v1875 = vadd.f32 %v1515, %v1874
        %v1876 = vpop.f32.mrb[0].mxu0
        %1877 = vmatprep.mubr.bf16.mxu0 %v1473
        %1878 = vmatmul.mubr.bf16.gmra.mrb[0].mxu0 %v1472
        %v1879 = vpop.f32.mrb[0].mxu0
        %v1880 = vadd.f32 %v1515, %v1879
        %v1881 = vpop.f32.mrb[0].mxu0
        %v1882 = vpop.f32.mrb[0].mxu0
        %v1883 = vadd.f32 %v1515, %v1882
        %v1884 = vpop.f32.mrb[0].mxu0
        %1885 = vmatprep.mubr.bf16.mxu0 %v1475
        %1886 = vmatmul.mubr.bf16.gmra.mrb[0].mxu0 %v1474
        %v1887 = vpop.f32.mrb[0].mxu0
        %v1888 = vadd.f32 %v1515, %v1887
        %v1889 = vpop.f32.mrb[0].mxu0
        %v1890 = vpop.f32.mrb[0].mxu0
        %v1891 = vadd.f32 %v1515, %v1890
        %v1892 = vpop.f32.mrb[0].mxu0
        %1893 = vmatprep.mubr.bf16.mxu0 %v1477
        %1894 = vmatmul.mubr.bf16.gmra.mrb[0].mxu0 %v1476
        %v1895 = vpop.f32.mrb[0].mxu0
        %v1896 = vadd.f32 %v1515, %v1895
        %v1897 = vpop.f32.mrb[0].mxu0
        %v1898 = vpop.f32.mrb[0].mxu0
        %v1899 = vadd.f32 %v1515, %v1898
        %v1900 = vpop.f32.mrb[0].mxu0
        %1901 = vdwg.mxu0
        %v1902 = vmul.f32 %v1648, 1.442695
        %v1903 = vpow.pop %v1902
        %v1904 = vmul.f32 %v1651, 1.442695
        %v1905 = vpow.pop %v1904
        %v1906 = vmul.f32 %v1656, 1.442695
        %v1907 = vpow.pop %v1906
        %v1908 = vmul.f32 %v1659, 1.442695
        %v1909 = vpow.pop %v1908
        %v1910 = vmul.f32 %v1664, 1.442695
        %v1911 = vpow.pop %v1910
        %v1912 = vmul.f32 %v1667, 1.442695
        %v1913 = vpow.pop %v1912
        %v1914 = vmul.f32 %v1672, 1.442695
        %v1915 = vpow.pop %v1914
        %v1916 = vmul.f32 %v1675, 1.442695
        %v1917 = vpow.pop %v1916
        %v1918 = vmul.f32 %v1680, 1.442695
        %v1919 = vpow.pop %v1918
        %v1920 = vmul.f32 %v1683, 1.442695
        %v1921 = vpow.pop %v1920
        %v1922 = vmul.f32 %v1688, 1.442695
        %v1923 = vpow.pop %v1922
        %v1924 = vmul.f32 %v1691, 1.442695
        %v1925 = vpow.pop %v1924
        %v1926 = vmul.f32 %v1696, 1.442695
        %v1927 = vpow.pop %v1926
        %v1928 = vmul.f32 %v1699, 1.442695
        %v1929 = vpow.pop %v1928
        %v1930 = vmul.f32 %v1704, 1.442695
        %v1931 = vpow.pop %v1930
        %v1932 = vmul.f32 %v1707, 1.442695
        %v1933 = vpow.pop %v1932
        %v1934 = vmul.f32 %v1712, 1.442695
        %v1935 = vpow.pop %v1934
        %v1936 = vmul.f32 %v1715, 1.442695
        %v1937 = vpow.pop %v1936
        %v1938 = vmul.f32 %v1720, 1.442695
        %v1939 = vpow.pop %v1938
        %v1940 = vmul.f32 %v1723, 1.442695
        %v1941 = vpow.pop %v1940
        %v1942 = vmul.f32 %v1728, 1.442695
        %v1943 = vpow.pop %v1942
        %v1944 = vmul.f32 %v1731, 1.442695
        %v1945 = vpow.pop %v1944
        %v1946 = vmul.f32 %v1736, 1.442695
        %v1947 = vpow.pop %v1946
        %v1948 = vmul.f32 %v1739, 1.442695
        %v1949 = vpow.pop %v1948
        %v1950 = vmul.f32 %v1744, 1.442695
        %v1951 = vpow.pop %v1950
        %v1952 = vmul.f32 %v1747, 1.442695
        %v1953 = vpow.pop %v1952
        %v1954 = vmul.f32 %v1752, 1.442695
        %v1955 = vpow.pop %v1954
        %v1956 = vmul.f32 %v1755, 1.442695
        %v1957 = vpow.pop %v1956
        %v1958 = vmul.f32 %v1760, 1.442695
        %v1959 = vpow.pop %v1958
        %v1960 = vmul.f32 %v1763, 1.442695
        %v1961 = vpow.pop %v1960
        %v1962 = vmul.f32 %v1768, 1.442695
        %v1963 = vpow.pop %v1962
        %v1964 = vmul.f32 %v1771, 1.442695
        %v1965 = vpow.pop %v1964
        %v1966 = vmul.f32 %v1776, 1.442695
        %v1967 = vpow.pop %v1966
        %v1968 = vmul.f32 %v1779, 1.442695
        %v1969 = vpow.pop %v1968
        %v1970 = vmul.f32 %v1784, 1.442695
        %v1971 = vpow.pop %v1970
        %v1972 = vmul.f32 %v1787, 1.442695
        %v1973 = vpow.pop %v1972
        %v1974 = vmul.f32 %v1792, 1.442695
        %v1975 = vpow.pop %v1974
        %v1976 = vmul.f32 %v1795, 1.442695
        %v1977 = vpow.pop %v1976
        %v1978 = vmul.f32 %v1800, 1.442695
        %v1979 = vpow.pop %v1978
        %v1980 = vmul.f32 %v1803, 1.442695
        %v1981 = vpow.pop %v1980
        %v1982 = vmul.f32 %v1808, 1.442695
        %v1983 = vpow.pop %v1982
        %v1984 = vmul.f32 %v1811, 1.442695
        %v1985 = vpow.pop %v1984
        %v1986 = vmul.f32 %v1816, 1.442695
        %v1987 = vpow.pop %v1986
        %v1988 = vmul.f32 %v1819, 1.442695
        %v1989 = vpow.pop %v1988
        %v1990 = vmul.f32 %v1824, 1.442695
        %v1991 = vpow.pop %v1990
        %v1992 = vmul.f32 %v1827, 1.442695
        %v1993 = vpow.pop %v1992
        %v1994 = vmul.f32 %v1832, 1.442695
        %v1995 = vpow.pop %v1994
        %v1996 = vmul.f32 %v1835, 1.442695
        %v1997 = vpow.pop %v1996
        %v1998 = vmul.f32 %v1840, 1.442695
        %v1999 = vpow.pop %v1998
        %v2000 = vmul.f32 %v1843, 1.442695
        %v2001 = vpow.pop %v2000
        %v2002 = vmul.f32 %v1848, 1.442695
        %v2003 = vpow.pop %v2002
        %v2004 = vmul.f32 %v1851, 1.442695
        %v2005 = vpow.pop %v2004
        %v2006 = vmul.f32 %v1856, 1.442695
        %v2007 = vpow.pop %v2006
        %v2008 = vmul.f32 %v1859, 1.442695
        %v2009 = vpow.pop %v2008
        %v2010 = vmul.f32 %v1864, 1.442695
        %v2011 = vpow.pop %v2010
        %v2012 = vmul.f32 %v1867, 1.442695
        %v2013 = vpow.pop %v2012
        %v2014 = vmul.f32 %v1872, 1.442695
        %v2015 = vpow.pop %v2014
        %v2016 = vmul.f32 %v1875, 1.442695
        %v2017 = vpow.pop %v2016
        %v2018 = vmul.f32 %v1880, 1.442695
        %v2019 = vpow.pop %v2018
        %v2020 = vmul.f32 %v1883, 1.442695
        %v2021 = vpow.pop %v2020
        %v2022 = vmul.f32 %v1888, 1.442695
        %v2023 = vpow.pop %v2022
        %v2024 = vmul.f32 %v1891, 1.442695
        %v2025 = vpow.pop %v2024
        %v2026 = vmul.f32 %v1896, 1.442695
        %v2027 = vpow.pop %v2026
        %v2028 = vmul.f32 %v1899, 1.442695
        %v2029 = vpow.pop %v2028
        %v2030 = vld [vmem:[%s527] sm:$0xff]
        %v2031 = vld [vmem:[%s527 + $0x8] sm:$0xff]
        %v2032 = vld [vmem:[%s527 + $0x10] sm:$0xff]
        %v2033 = vld [vmem:[%s527 + $0x18] sm:$0xff]
        %v2034 = vld [vmem:[%s527 + $0x20] sm:$0xff]
        %v2035 = vld [vmem:[%s527 + $0x28] sm:$0xff]
        %v2036 = vld [vmem:[%s527 + $0x30] sm:$0xff]
        %v2037 = vld [vmem:[%s527 + $0x38] sm:$0xff]
        %v2038 = vld [vmem:[%s527 + $0x40] sm:$0xff]
        %v2039 = vld [vmem:[%s527 + $0x48] sm:$0xff]
        %v2040 = vld [vmem:[%s527 + $0x50] sm:$0xff]
        %v2041 = vld [vmem:[%s527 + $0x58] sm:$0xff]
        %v2042 = vld [vmem:[%s527 + $0x60] sm:$0xff]
        %v2043 = vld [vmem:[%s527 + $0x68] sm:$0xff]
        %v2044 = vld [vmem:[%s527 + $0x70] sm:$0xff]
        %v2045 = vld [vmem:[%s527 + $0x78] sm:$0xff]
        %v2046 = vld [vmem:[%s527 + $0x80] sm:$0xff]
        %v2047 = vld [vmem:[%s527 + $0x88] sm:$0xff]
        %v2048 = vld [vmem:[%s527 + $0x90] sm:$0xff]
        %v2049 = vld [vmem:[%s527 + $0x98] sm:$0xff]
        %v2050 = vld [vmem:[%s527 + $0xa0] sm:$0xff]
        %v2051 = vld [vmem:[%s527 + $0xa8] sm:$0xff]
        %v2052 = vld [vmem:[%s527 + $0xb0] sm:$0xff]
        %v2053 = vld [vmem:[%s527 + $0xb8] sm:$0xff]
        %v2054 = vld [vmem:[%s527 + $0xc0] sm:$0xff]
        %v2055 = vld [vmem:[%s527 + $0xc8] sm:$0xff]
        %v2056 = vld [vmem:[%s527 + $0xd0] sm:$0xff]
        %v2057 = vld [vmem:[%s527 + $0xd8] sm:$0xff]
        %v2058 = vld [vmem:[%s527 + $0xe0] sm:$0xff]
        %v2059 = vld [vmem:[%s527 + $0xe8] sm:$0xff]
        %v2060 = vld [vmem:[%s527 + $0xf0] sm:$0xff]
        %v2061 = vld [vmem:[%s527 + $0xf8] sm:$0xff]
        %v2062 = vld [vmem:[%s527 + $0x100] sm:$0xff]
        %v2063 = vld [vmem:[%s527 + $0x108] sm:$0xff]
        %v2064 = vld [vmem:[%s527 + $0x110] sm:$0xff]
        %v2065 = vld [vmem:[%s527 + $0x118] sm:$0xff]
        %v2066 = vld [vmem:[%s527 + $0x120] sm:$0xff]
        %v2067 = vld [vmem:[%s527 + $0x128] sm:$0xff]
        %v2068 = vld [vmem:[%s527 + $0x130] sm:$0xff]
        %v2069 = vld [vmem:[%s527 + $0x138] sm:$0xff]
        %v2070 = vld [vmem:[%s527 + $0x140] sm:$0xff]
        %v2071 = vld [vmem:[%s527 + $0x148] sm:$0xff]
        %v2072 = vld [vmem:[%s527 + $0x150] sm:$0xff]
        %v2073 = vld [vmem:[%s527 + $0x158] sm:$0xff]
        %v2074 = vld [vmem:[%s527 + $0x160] sm:$0xff]
        %v2075 = vld [vmem:[%s527 + $0x168] sm:$0xff]
        %v2076 = vld [vmem:[%s527 + $0x170] sm:$0xff]
        %v2077 = vld [vmem:[%s527 + $0x178] sm:$0xff]
        %v2078 = vld [vmem:[%s527 + $0x180] sm:$0xff]
        %v2079 = vld [vmem:[%s527 + $0x188] sm:$0xff]
        %v2080 = vld [vmem:[%s527 + $0x190] sm:$0xff]
        %v2081 = vld [vmem:[%s527 + $0x198] sm:$0xff]
        %v2082 = vld [vmem:[%s527 + $0x1a0] sm:$0xff]
        %v2083 = vld [vmem:[%s527 + $0x1a8] sm:$0xff]
        %v2084 = vld [vmem:[%s527 + $0x1b0] sm:$0xff]
        %v2085 = vld [vmem:[%s527 + $0x1b8] sm:$0xff]
        %v2086 = vld [vmem:[%s527 + $0x1c0] sm:$0xff]
        %v2087 = vld [vmem:[%s527 + $0x1c8] sm:$0xff]
        %v2088 = vld [vmem:[%s527 + $0x1d0] sm:$0xff]
        %v2089 = vld [vmem:[%s527 + $0x1d8] sm:$0xff]
        %v2090 = vld [vmem:[%s527 + $0x1e0] sm:$0xff]
        %v2091 = vld [vmem:[%s527 + $0x1e8] sm:$0xff]
        %v2092 = vld [vmem:[%s527 + $0x1f0] sm:$0xff]
        %v2093 = vld [vmem:[%s527 + $0x1f8] sm:$0xff]
        %2158 = vrot.lane.b32.xlu0 %v2030, 8
        %v2159 = vpop.permute.xlu0 %2158
        %2160 = vrot.lane.b32.xlu0 %v2031, 8
        %v2161 = vpop.permute.xlu0 %2160
        %2162 = vrot.lane.b32.xlu0 %v2032, 8
        %v2163 = vpop.permute.xlu0 %2162
        %2164 = vrot.lane.b32.xlu0 %v2033, 8
        %v2165 = vpop.permute.xlu0 %2164
        %2166 = vrot.lane.b32.xlu0 %v2034, 8
        %v2167 = vpop.permute.xlu0 %2166
        %2168 = vrot.lane.b32.xlu0 %v2035, 8
        %v2169 = vpop.permute.xlu0 %2168
        %2170 = vrot.lane.b32.xlu0 %v2036, 8
        %v2171 = vpop.permute.xlu0 %2170
        %2172 = vrot.lane.b32.xlu0 %v2037, 8
        %v2173 = vpop.permute.xlu0 %2172
        %2174 = vrot.lane.b32.xlu0 %v2038, 8
        %v2175 = vpop.permute.xlu0 %2174
        %2176 = vrot.lane.b32.xlu0 %v2039, 8
        %v2177 = vpop.permute.xlu0 %2176
        %2178 = vrot.lane.b32.xlu0 %v2040, 8
        %v2179 = vpop.permute.xlu0 %2178
        %2180 = vrot.lane.b32.xlu0 %v2041, 8
        %v2181 = vpop.permute.xlu0 %2180
        %2182 = vrot.lane.b32.xlu0 %v2042, 8
        %v2183 = vpop.permute.xlu0 %2182
        %2184 = vrot.lane.b32.xlu0 %v2043, 8
        %v2185 = vpop.permute.xlu0 %2184
        %2186 = vrot.lane.b32.xlu0 %v2044, 8
        %v2187 = vpop.permute.xlu0 %2186
        %2188 = vrot.lane.b32.xlu0 %v2045, 8
        %v2189 = vpop.permute.xlu0 %2188
        %2190 = vrot.lane.b32.xlu0 %v2046, 8
        %v2191 = vpop.permute.xlu0 %2190
        %2192 = vrot.lane.b32.xlu0 %v2047, 8
        %v2193 = vpop.permute.xlu0 %2192
        %2194 = vrot.lane.b32.xlu0 %v2048, 8
        %v2195 = vpop.permute.xlu0 %2194
        %2196 = vrot.lane.b32.xlu0 %v2049, 8
        %v2197 = vpop.permute.xlu0 %2196
        %2198 = vrot.lane.b32.xlu0 %v2050, 8
        %v2199 = vpop.permute.xlu0 %2198
        %2200 = vrot.lane.b32.xlu0 %v2051, 8
        %v2201 = vpop.permute.xlu0 %2200
        %2202 = vrot.lane.b32.xlu0 %v2052, 8
        %v2203 = vpop.permute.xlu0 %2202
        %2204 = vrot.lane.b32.xlu0 %v2053, 8
        %v2205 = vpop.permute.xlu0 %2204
        %2206 = vrot.lane.b32.xlu0 %v2054, 8
        %v2207 = vpop.permute.xlu0 %2206
        %2208 = vrot.lane.b32.xlu0 %v2055, 8
        %v2209 = vpop.permute.xlu0 %2208
        %2210 = vrot.lane.b32.xlu0 %v2056, 8
        %v2211 = vpop.permute.xlu0 %2210
        %2212 = vrot.lane.b32.xlu0 %v2057, 8
        %v2213 = vpop.permute.xlu0 %2212
        %2214 = vrot.lane.b32.xlu0 %v2058, 8
        %v2215 = vpop.permute.xlu0 %2214
        %2216 = vrot.lane.b32.xlu0 %v2059, 8
        %v2217 = vpop.permute.xlu0 %2216
        %2218 = vrot.lane.b32.xlu0 %v2060, 8
        %v2219 = vpop.permute.xlu0 %2218
        %2220 = vrot.lane.b32.xlu0 %v2061, 8
        %v2221 = vpop.permute.xlu0 %2220
        %2222 = vrot.lane.b32.xlu0 %v2062, 8
        %v2223 = vpop.permute.xlu0 %2222
        %2224 = vrot.lane.b32.xlu0 %v2063, 8
        %v2225 = vpop.permute.xlu0 %2224
        %2226 = vrot.lane.b32.xlu0 %v2064, 8
        %v2227 = vpop.permute.xlu0 %2226
        %2228 = vrot.lane.b32.xlu0 %v2065, 8
        %v2229 = vpop.permute.xlu0 %2228
        %2230 = vrot.lane.b32.xlu0 %v2066, 8
        %v2231 = vpop.permute.xlu0 %2230
        %2232 = vrot.lane.b32.xlu0 %v2067, 8
        %v2233 = vpop.permute.xlu0 %2232
        %2234 = vrot.lane.b32.xlu0 %v2068, 8
        %v2235 = vpop.permute.xlu0 %2234
        %2236 = vrot.lane.b32.xlu0 %v2069, 8
        %v2237 = vpop.permute.xlu0 %2236
        %2238 = vrot.lane.b32.xlu0 %v2070, 8
        %v2239 = vpop.permute.xlu0 %2238
        %2240 = vrot.lane.b32.xlu0 %v2071, 8
        %v2241 = vpop.permute.xlu0 %2240
        %2242 = vrot.lane.b32.xlu0 %v2072, 8
        %v2243 = vpop.permute.xlu0 %2242
        %2244 = vrot.lane.b32.xlu0 %v2073, 8
        %v2245 = vpop.permute.xlu0 %2244
        %2246 = vrot.lane.b32.xlu0 %v2074, 8
        %v2247 = vpop.permute.xlu0 %2246
        %2248 = vrot.lane.b32.xlu0 %v2075, 8
        %v2249 = vpop.permute.xlu0 %2248
        %2250 = vrot.lane.b32.xlu0 %v2076, 8
        %v2251 = vpop.permute.xlu0 %2250
        %2252 = vrot.lane.b32.xlu0 %v2077, 8
        %v2253 = vpop.permute.xlu0 %2252
        %2254 = vrot.lane.b32.xlu0 %v2078, 8
        %v2255 = vpop.permute.xlu0 %2254
        %2256 = vrot.lane.b32.xlu0 %v2079, 8
        %v2257 = vpop.permute.xlu0 %2256
        %2258 = vrot.lane.b32.xlu0 %v2080, 8
        %v2259 = vpop.permute.xlu0 %2258
        %2260 = vrot.lane.b32.xlu0 %v2081, 8
        %v2261 = vpop.permute.xlu0 %2260
        %2262 = vrot.lane.b32.xlu0 %v2082, 8
        %v2263 = vpop.permute.xlu0 %2262
        %2264 = vrot.lane.b32.xlu0 %v2083, 8
        %v2265 = vpop.permute.xlu0 %2264
        %2266 = vrot.lane.b32.xlu0 %v2084, 8
        %v2267 = vpop.permute.xlu0 %2266
        %2268 = vrot.lane.b32.xlu0 %v2085, 8
        %v2269 = vpop.permute.xlu0 %2268
        %2270 = vrot.lane.b32.xlu0 %v2086, 8
        %v2271 = vpop.permute.xlu0 %2270
        %2272 = vrot.lane.b32.xlu0 %v2087, 8
        %v2273 = vpop.permute.xlu0 %2272
        %2274 = vrot.lane.b32.xlu0 %v2088, 8
        %v2275 = vpop.permute.xlu0 %2274
        %2276 = vrot.lane.b32.xlu0 %v2089, 8
        %v2277 = vpop.permute.xlu0 %2276
        %2278 = vrot.lane.b32.xlu0 %v2090, 8
        %v2279 = vpop.permute.xlu0 %2278
        %2280 = vrot.lane.b32.xlu0 %v2091, 8
        %v2281 = vpop.permute.xlu0 %2280
        %2282 = vrot.lane.b32.xlu0 %v2092, 8
        %v2283 = vpop.permute.xlu0 %2282
        %2284 = vrot.lane.b32.xlu0 %v2093, 8
        %v2285 = vpop.permute.xlu0 %2284
        %v2350 = vmul.f32 %v1903, %v2159
        %v2351 = vmul.f32 %v1905, %v2161
        %v2352 = vmul.f32 %v1907, %v2163
        %v2353 = vmul.f32 %v1909, %v2165
        %v2354 = vmul.f32 %v1911, %v2167
        %v2355 = vmul.f32 %v1913, %v2169
        %v2356 = vmul.f32 %v1915, %v2171
        %v2357 = vmul.f32 %v1917, %v2173
        %v2358 = vmul.f32 %v1919, %v2175
        %v2359 = vmul.f32 %v1921, %v2177
        %v2360 = vmul.f32 %v1923, %v2179
        %v2361 = vmul.f32 %v1925, %v2181
        %v2362 = vmul.f32 %v1927, %v2183
        %v2363 = vmul.f32 %v1929, %v2185
        %v2364 = vmul.f32 %v1931, %v2187
        %v2365 = vmul.f32 %v1933, %v2189
        %v2366 = vmul.f32 %v1935, %v2191
        %v2367 = vmul.f32 %v1937, %v2193
        %v2368 = vmul.f32 %v1939, %v2195
        %v2369 = vmul.f32 %v1941, %v2197
        %v2370 = vmul.f32 %v1943, %v2199
        %v2371 = vmul.f32 %v1945, %v2201
        %v2372 = vmul.f32 %v1947, %v2203
        %v2373 = vmul.f32 %v1949, %v2205
        %v2374 = vmul.f32 %v1951, %v2207
        %v2375 = vmul.f32 %v1953, %v2209
        %v2376 = vmul.f32 %v1955, %v2211
        %v2377 = vmul.f32 %v1957, %v2213
        %v2378 = vmul.f32 %v1959, %v2215
        %v2379 = vmul.f32 %v1961, %v2217
        %v2380 = vmul.f32 %v1963, %v2219
        %v2381 = vmul.f32 %v1965, %v2221
        %v2382 = vmul.f32 %v1967, %v2223
        %v2383 = vmul.f32 %v1969, %v2225
        %v2384 = vmul.f32 %v1971, %v2227
        %v2385 = vmul.f32 %v1973, %v2229
        %v2386 = vmul.f32 %v1975, %v2231
        %v2387 = vmul.f32 %v1977, %v2233
        %v2388 = vmul.f32 %v1979, %v2235
        %v2389 = vmul.f32 %v1981, %v2237
        %v2390 = vmul.f32 %v1983, %v2239
        %v2391 = vmul.f32 %v1985, %v2241
        %v2392 = vmul.f32 %v1987, %v2243
        %v2393 = vmul.f32 %v1989, %v2245
        %v2394 = vmul.f32 %v1991, %v2247
        %v2395 = vmul.f32 %v1993, %v2249
        %v2396 = vmul.f32 %v1995, %v2251
        %v2397 = vmul.f32 %v1997, %v2253
        %v2398 = vmul.f32 %v1999, %v2255
        %v2399 = vmul.f32 %v2001, %v2257
        %v2400 = vmul.f32 %v2003, %v2259
        %v2401 = vmul.f32 %v2005, %v2261
        %v2402 = vmul.f32 %v2007, %v2263
        %v2403 = vmul.f32 %v2009, %v2265
        %v2404 = vmul.f32 %v2011, %v2267
        %v2405 = vmul.f32 %v2013, %v2269
        %v2406 = vmul.f32 %v2015, %v2271
        %v2407 = vmul.f32 %v2017, %v2273
        %v2408 = vmul.f32 %v2019, %v2275
        %v2409 = vmul.f32 %v2021, %v2277
        %v2410 = vmul.f32 %v2023, %v2279
        %v2411 = vmul.f32 %v2025, %v2281
        %v2412 = vmul.f32 %v2027, %v2283
        %v2413 = vmul.f32 %v2029, %v2285
        %2478 = vrot.lane.b32.xlu0 %v2350, 120
        %v2479 = vpop.permute.xlu0 %2478
        %2480 = vrot.lane.b32.xlu0 %v2351, 120
        %v2481 = vpop.permute.xlu0 %2480
        %2482 = vrot.lane.b32.xlu0 %v2352, 120
        %v2483 = vpop.permute.xlu0 %2482
        %2484 = vrot.lane.b32.xlu0 %v2353, 120
        %v2485 = vpop.permute.xlu0 %2484
        %2486 = vrot.lane.b32.xlu0 %v2354, 120
        %v2487 = vpop.permute.xlu0 %2486
        %2488 = vrot.lane.b32.xlu0 %v2355, 120
        %v2489 = vpop.permute.xlu0 %2488
        %2490 = vrot.lane.b32.xlu0 %v2356, 120
        %v2491 = vpop.permute.xlu0 %2490
        %2492 = vrot.lane.b32.xlu0 %v2357, 120
        %v2493 = vpop.permute.xlu0 %2492
        %2494 = vrot.lane.b32.xlu0 %v2358, 120
        %v2495 = vpop.permute.xlu0 %2494
        %2496 = vrot.lane.b32.xlu0 %v2359, 120
        %v2497 = vpop.permute.xlu0 %2496
        %2498 = vrot.lane.b32.xlu0 %v2360, 120
        %v2499 = vpop.permute.xlu0 %2498
        %2500 = vrot.lane.b32.xlu0 %v2361, 120
        %v2501 = vpop.permute.xlu0 %2500
        %2502 = vrot.lane.b32.xlu0 %v2362, 120
        %v2503 = vpop.permute.xlu0 %2502
        %2504 = vrot.lane.b32.xlu0 %v2363, 120
        %v2505 = vpop.permute.xlu0 %2504
        %2506 = vrot.lane.b32.xlu0 %v2364, 120
        %v2507 = vpop.permute.xlu0 %2506
        %2508 = vrot.lane.b32.xlu0 %v2365, 120
        %v2509 = vpop.permute.xlu0 %2508
        %2510 = vrot.lane.b32.xlu0 %v2366, 120
        %v2511 = vpop.permute.xlu0 %2510
        %2512 = vrot.lane.b32.xlu0 %v2367, 120
        %v2513 = vpop.permute.xlu0 %2512
        %2514 = vrot.lane.b32.xlu0 %v2368, 120
        %v2515 = vpop.permute.xlu0 %2514
        %2516 = vrot.lane.b32.xlu0 %v2369, 120
        %v2517 = vpop.permute.xlu0 %2516
        %2518 = vrot.lane.b32.xlu0 %v2370, 120
        %v2519 = vpop.permute.xlu0 %2518
        %2520 = vrot.lane.b32.xlu0 %v2371, 120
        %v2521 = vpop.permute.xlu0 %2520
        %2522 = vrot.lane.b32.xlu0 %v2372, 120
        %v2523 = vpop.permute.xlu0 %2522
        %2524 = vrot.lane.b32.xlu0 %v2373, 120
        %v2525 = vpop.permute.xlu0 %2524
        %2526 = vrot.lane.b32.xlu0 %v2374, 120
        %v2527 = vpop.permute.xlu0 %2526
        %2528 = vrot.lane.b32.xlu0 %v2375, 120
        %v2529 = vpop.permute.xlu0 %2528
        %2530 = vrot.lane.b32.xlu0 %v2376, 120
        %v2531 = vpop.permute.xlu0 %2530
        %2532 = vrot.lane.b32.xlu0 %v2377, 120
        %v2533 = vpop.permute.xlu0 %2532
        %2534 = vrot.lane.b32.xlu0 %v2378, 120
        %v2535 = vpop.permute.xlu0 %2534
        %2536 = vrot.lane.b32.xlu0 %v2379, 120
        %v2537 = vpop.permute.xlu0 %2536
        %2538 = vrot.lane.b32.xlu0 %v2380, 120
        %v2539 = vpop.permute.xlu0 %2538
        %2540 = vrot.lane.b32.xlu0 %v2381, 120
        %v2541 = vpop.permute.xlu0 %2540
        %2542 = vrot.lane.b32.xlu0 %v2382, 120
        %v2543 = vpop.permute.xlu0 %2542
        %2544 = vrot.lane.b32.xlu0 %v2383, 120
        %v2545 = vpop.permute.xlu0 %2544
        %2546 = vrot.lane.b32.xlu0 %v2384, 120
        %v2547 = vpop.permute.xlu0 %2546
        %2548 = vrot.lane.b32.xlu0 %v2385, 120
        %v2549 = vpop.permute.xlu0 %2548
        %2550 = vrot.lane.b32.xlu0 %v2386, 120
        %v2551 = vpop.permute.xlu0 %2550
        %2552 = vrot.lane.b32.xlu0 %v2387, 120
        %v2553 = vpop.permute.xlu0 %2552
        %2554 = vrot.lane.b32.xlu0 %v2388, 120
        %v2555 = vpop.permute.xlu0 %2554
        %2556 = vrot.lane.b32.xlu0 %v2389, 120
        %v2557 = vpop.permute.xlu0 %2556
        %2558 = vrot.lane.b32.xlu0 %v2390, 120
        %v2559 = vpop.permute.xlu0 %2558
        %2560 = vrot.lane.b32.xlu0 %v2391, 120
        %v2561 = vpop.permute.xlu0 %2560
        %2562 = vrot.lane.b32.xlu0 %v2392, 120
        %v2563 = vpop.permute.xlu0 %2562
        %2564 = vrot.lane.b32.xlu0 %v2393, 120
        %v2565 = vpop.permute.xlu0 %2564
        %2566 = vrot.lane.b32.xlu0 %v2394, 120
        %v2567 = vpop.permute.xlu0 %2566
        %2568 = vrot.lane.b32.xlu0 %v2395, 120
        %v2569 = vpop.permute.xlu0 %2568
        %2570 = vrot.lane.b32.xlu0 %v2396, 120
        %v2571 = vpop.permute.xlu0 %2570
        %2572 = vrot.lane.b32.xlu0 %v2397, 120
        %v2573 = vpop.permute.xlu0 %2572
        %2574 = vrot.lane.b32.xlu0 %v2398, 120
        %v2575 = vpop.permute.xlu0 %2574
        %2576 = vrot.lane.b32.xlu0 %v2399, 120
        %v2577 = vpop.permute.xlu0 %2576
        %2578 = vrot.lane.b32.xlu0 %v2400, 120
        %v2579 = vpop.permute.xlu0 %2578
        %2580 = vrot.lane.b32.xlu0 %v2401, 120
        %v2581 = vpop.permute.xlu0 %2580
        %2582 = vrot.lane.b32.xlu0 %v2402, 120
        %v2583 = vpop.permute.xlu0 %2582
        %2584 = vrot.lane.b32.xlu0 %v2403, 120
        %v2585 = vpop.permute.xlu0 %2584
        %2586 = vrot.lane.b32.xlu0 %v2404, 120
        %v2587 = vpop.permute.xlu0 %2586
        %2588 = vrot.lane.b32.xlu0 %v2405, 120
        %v2589 = vpop.permute.xlu0 %2588
        %2590 = vrot.lane.b32.xlu0 %v2406, 120
        %v2591 = vpop.permute.xlu0 %2590
        %2592 = vrot.lane.b32.xlu0 %v2407, 120
        %v2593 = vpop.permute.xlu0 %2592
        %2594 = vrot.lane.b32.xlu0 %v2408, 120
        %v2595 = vpop.permute.xlu0 %2594
        %2596 = vrot.lane.b32.xlu0 %v2409, 120
        %v2597 = vpop.permute.xlu0 %2596
        %2598 = vrot.lane.b32.xlu0 %v2410, 120
        %v2599 = vpop.permute.xlu0 %2598
        %2600 = vrot.lane.b32.xlu0 %v2411, 120
        %v2601 = vpop.permute.xlu0 %2600
        %2602 = vrot.lane.b32.xlu0 %v2412, 120
        %v2603 = vpop.permute.xlu0 %2602
        %2604 = vrot.lane.b32.xlu0 %v2413, 120
        %v2605 = vpop.permute.xlu0 %2604
        %v2670 = vadd.f32 %v1648, %v2479
        %v2671 = vadd.f32 %v1651, %v2481
        %v2672 = vadd.f32 %v1656, %v2483
        %v2673 = vadd.f32 %v1659, %v2485
        %v2674 = vadd.f32 %v1664, %v2487
        %v2675 = vadd.f32 %v1667, %v2489
        %v2676 = vadd.f32 %v1672, %v2491
        %v2677 = vadd.f32 %v1675, %v2493
        %v2678 = vadd.f32 %v1680, %v2495
        %v2679 = vadd.f32 %v1683, %v2497
        %v2680 = vadd.f32 %v1688, %v2499
        %v2681 = vadd.f32 %v1691, %v2501
        %v2682 = vadd.f32 %v1696, %v2503
        %v2683 = vadd.f32 %v1699, %v2505
        %v2684 = vadd.f32 %v1704, %v2507
        %v2685 = vadd.f32 %v1707, %v2509
        %v2686 = vadd.f32 %v1712, %v2511
        %v2687 = vadd.f32 %v1715, %v2513
        %v2688 = vadd.f32 %v1720, %v2515
        %v2689 = vadd.f32 %v1723, %v2517
        %v2690 = vadd.f32 %v1728, %v2519
        %v2691 = vadd.f32 %v1731, %v2521
        %v2692 = vadd.f32 %v1736, %v2523
        %v2693 = vadd.f32 %v1739, %v2525
        %v2694 = vadd.f32 %v1744, %v2527
        %v2695 = vadd.f32 %v1747, %v2529
        %v2696 = vadd.f32 %v1752, %v2531
        %v2697 = vadd.f32 %v1755, %v2533
        %v2698 = vadd.f32 %v1760, %v2535
        %v2699 = vadd.f32 %v1763, %v2537
        %v2700 = vadd.f32 %v1768, %v2539
        %v2701 = vadd.f32 %v1771, %v2541
        %v2702 = vadd.f32 %v1776, %v2543
        %v2703 = vadd.f32 %v1779, %v2545
        %v2704 = vadd.f32 %v1784, %v2547
        %v2705 = vadd.f32 %v1787, %v2549
        %v2706 = vadd.f32 %v1792, %v2551
        %v2707 = vadd.f32 %v1795, %v2553
        %v2708 = vadd.f32 %v1800, %v2555
        %v2709 = vadd.f32 %v1803, %v2557
        %v2710 = vadd.f32 %v1808, %v2559
        %v2711 = vadd.f32 %v1811, %v2561
        %v2712 = vadd.f32 %v1816, %v2563
        %v2713 = vadd.f32 %v1819, %v2565
        %v2714 = vadd.f32 %v1824, %v2567
        %v2715 = vadd.f32 %v1827, %v2569
        %v2716 = vadd.f32 %v1832, %v2571
        %v2717 = vadd.f32 %v1835, %v2573
        %v2718 = vadd.f32 %v1840, %v2575
        %v2719 = vadd.f32 %v1843, %v2577
        %v2720 = vadd.f32 %v1848, %v2579
        %v2721 = vadd.f32 %v1851, %v2581
        %v2722 = vadd.f32 %v1856, %v2583
        %v2723 = vadd.f32 %v1859, %v2585
        %v2724 = vadd.f32 %v1864, %v2587
        %v2725 = vadd.f32 %v1867, %v2589
        %v2726 = vadd.f32 %v1872, %v2591
        %v2727 = vadd.f32 %v1875, %v2593
        %v2728 = vadd.f32 %v1880, %v2595
        %v2729 = vadd.f32 %v1883, %v2597
        %v2730 = vadd.f32 %v1888, %v2599
        %v2731 = vadd.f32 %v1891, %v2601
        %v2732 = vadd.f32 %v1896, %v2603
        %v2733 = vadd.f32 %v1899, %v2605
        %v2734 = vpack.c.bf16 %v2671, %v2670
        %v2735 = vpack.c.bf16 %v2673, %v2672
        %v2736 = vpack.c.bf16 %v2675, %v2674
        %v2737 = vpack.c.bf16 %v2677, %v2676
        %v2738 = vpack.c.bf16 %v2679, %v2678
        %v2739 = vpack.c.bf16 %v2681, %v2680
        %v2740 = vpack.c.bf16 %v2683, %v2682
        %v2741 = vpack.c.bf16 %v2685, %v2684
        %v2742 = vpack.c.bf16 %v2687, %v2686
        %v2743 = vpack.c.bf16 %v2689, %v2688
        %v2744 = vpack.c.bf16 %v2691, %v2690
        %v2745 = vpack.c.bf16 %v2693, %v2692
        %v2746 = vpack.c.bf16 %v2695, %v2694
        %v2747 = vpack.c.bf16 %v2697, %v2696
        %v2748 = vpack.c.bf16 %v2699, %v2698
        %v2749 = vpack.c.bf16 %v2701, %v2700
        %v2750 = vpack.c.bf16 %v2703, %v2702
        %v2751 = vpack.c.bf16 %v2705, %v2704
        %v2752 = vpack.c.bf16 %v2707, %v2706
        %v2753 = vpack.c.bf16 %v2709, %v2708
        %v2754 = vpack.c.bf16 %v2711, %v2710
        %v2755 = vpack.c.bf16 %v2713, %v2712
        %v2756 = vpack.c.bf16 %v2715, %v2714
        %v2757 = vpack.c.bf16 %v2717, %v2716
        %v2758 = vpack.c.bf16 %v2719, %v2718
        %v2759 = vpack.c.bf16 %v2721, %v2720
        %v2760 = vpack.c.bf16 %v2723, %v2722
        %v2761 = vpack.c.bf16 %v2725, %v2724
        %v2762 = vpack.c.bf16 %v2727, %v2726
        %v2763 = vpack.c.bf16 %v2729, %v2728
        %v2764 = vpack.c.bf16 %v2731, %v2730
        %v2765 = vpack.c.bf16 %v2733, %v2732
        %v2766 = vld [vmem:[#allocation10] sm:$0xff]
        %v2767 = vld [vmem:[#allocation11] sm:$0x3]
        %v2769 = vlaneseq
        %v2770 = vshrl.u32 %v2769, 7
        %v2771 = vsub.s32 0, %v2770
        %v2772 = vrot.slane %v2767, %v2771
        %v2773 = vlaneseq
        %v2774 = vshrl.u32 %v2773, 7
        %v2775 = vsub.s32 1, %v2774
        %v2776 = vrot.slane %v2767, %v2775
        %v2780 = vunpack.c.l.b16 %v2766
        %v2781 = vunpack.c.h.b16 %v2766
        %v2782 = vpack.c.b16 %v2780, %v2780
        %v2783 = vpack.c.b16 %v2781, %v2781
        %vm2784 = vcmask 64512
        %v2786 = vsel %vm2784, %v2734, 0
        %v2789 = vsel %vm2784, %v2735, 0
        %v2792 = vsel %vm2784, %v2736, 0
        %v2795 = vsel %vm2784, %v2737, 0
        %v2798 = vsel %vm2784, %v2738, 0
        %v2801 = vsel %vm2784, %v2739, 0
        %v2804 = vsel %vm2784, %v2740, 0
        %v2807 = vsel %vm2784, %v2741, 0
        %v2810 = vsel %vm2784, %v2742, 0
        %v2813 = vsel %vm2784, %v2743, 0
        %v2816 = vsel %vm2784, %v2744, 0
        %v2819 = vsel %vm2784, %v2745, 0
        %v2822 = vsel %vm2784, %v2746, 0
        %v2825 = vsel %vm2784, %v2747, 0
        %v2828 = vsel %vm2784, %v2748, 0
        %v2831 = vsel %vm2784, %v2749, 0
        %v2834 = vsel %vm2784, %v2750, 0
        %v2837 = vsel %vm2784, %v2751, 0
        %v2840 = vsel %vm2784, %v2752, 0
        %v2843 = vsel %vm2784, %v2753, 0
        %v2846 = vsel %vm2784, %v2754, 0
        %v2849 = vsel %vm2784, %v2755, 0
        %v2852 = vsel %vm2784, %v2756, 0
        %v2855 = vsel %vm2784, %v2757, 0
        %v2858 = vsel %vm2784, %v2758, 0
        %v2861 = vsel %vm2784, %v2759, 0
        %v2864 = vsel %vm2784, %v2760, 0
        %v2867 = vsel %vm2784, %v2761, 0
        %v2870 = vsel %vm2784, %v2762, 0
        %v2873 = vsel %vm2784, %v2763, 0
        %v2876 = vsel %vm2784, %v2764, 0
        %v2879 = vsel %vm2784, %v2765, 0
        %vm2881 = vcmask 1043456
        %v2883 = vsel %vm2881, %v2782, 0
        %v2886 = vsel %vm2881, %v2783, 0
        %2888 = vmatprep.subr.bf16.mxu0 %v2886
        %2889 = vmatpush1.bf16.msra.mxu0 %v2883
        %2890 = vmatprep.subr.bf16.mxu0 0
        %2891 = vmatpush1.bf16.msra.mxu0 0
        %2892 = vmatprep.subr.bf16.mxu0 0
        %2893 = vmatpush1.bf16.msra.mxu0 0
        %2894 = vmatprep.subr.bf16.mxu0 0
        %2895 = vmatpush1.bf16.msra.mxu0 0
        %2896 = vmatprep.subr.bf16.mxu0 0
        %2897 = vmatpush1.bf16.msra.mxu0 0
        %2898 = vmatprep.subr.bf16.mxu0 0
        %2899 = vmatpush1.bf16.msra.mxu0 0
        %2900 = vmatprep.subr.bf16.mxu0 0
        %2901 = vmatpush1.bf16.msra.mxu0 0
        %2902 = vmatprep.subr.bf16.mxu0 0
        %2903 = vmatpush1.bf16.msra.mxu0 0
        %2904 = vmatprep.subr.bf16.mxu0 0
        %2905 = vmatpush1.bf16.msra.mxu0 0
        %2906 = vmatprep.subr.bf16.mxu0 0
        %2907 = vmatpush1.bf16.msra.mxu0 0
        %2908 = vmatprep.subr.bf16.mxu0 0
        %2909 = vmatpush1.bf16.msra.mxu0 0
        %2910 = vmatprep.subr.bf16.mxu0 0
        %2911 = vmatpush1.bf16.msra.mxu0 0
        %2912 = vmatprep.subr.bf16.mxu0 0
        %2913 = vmatpush1.bf16.msra.mxu0 0
        %2914 = vmatprep.subr.bf16.mxu0 0
        %2915 = vmatpush1.bf16.msra.mxu0 0
        %2916 = vmatprep.subr.bf16.mxu0 0
        %2917 = vmatpush1.bf16.msra.mxu0 0
        %2918 = vmatprep.subr.bf16.mxu0 0
        %2919 = vmatpush1.bf16.msra.mxu0 0
        %2920 = vmatprep.mubr.bf16.mxu0 0
        %2921 = vmatmul.mubr.bf16.gmra.mrb[0].mxu0 %v2786
        %v2922 = vpop.f32.mrb[0].mxu0
        %v2923 = vadd.f32 %v2772, %v2922
        %v2924 = vpop.f32.mrb[0].mxu0
        %v2925 = vadd.f32 %v2776, %v2924
        %v2926 = vpop.f32.mrb[0].mxu0
        %v2927 = vadd.f32 %v2772, %v2926
        %v2928 = vpop.f32.mrb[0].mxu0
        %v2929 = vadd.f32 %v2776, %v2928
        %2930 = vmatprep.mubr.bf16.mxu0 0
        %2931 = vmatmul.mubr.bf16.gmra.mrb[0].mxu0 %v2789
        %v2932 = vpop.f32.mrb[0].mxu0
        %v2933 = vadd.f32 %v2772, %v2932
        %v2934 = vpop.f32.mrb[0].mxu0
        %v2935 = vadd.f32 %v2776, %v2934
        %v2936 = vpop.f32.mrb[0].mxu0
        %v2937 = vadd.f32 %v2772, %v2936
        %v2938 = vpop.f32.mrb[0].mxu0
        %v2939 = vadd.f32 %v2776, %v2938
        %2940 = vmatprep.mubr.bf16.mxu0 0
        %2941 = vmatmul.mubr.bf16.gmra.mrb[0].mxu0 %v2792
        %v2942 = vpop.f32.mrb[0].mxu0
        %v2943 = vadd.f32 %v2772, %v2942
        %v2944 = vpop.f32.mrb[0].mxu0
        %v2945 = vadd.f32 %v2776, %v2944
        %v2946 = vpop.f32.mrb[0].mxu0
        %v2947 = vadd.f32 %v2772, %v2946
        %v2948 = vpop.f32.mrb[0].mxu0
        %v2949 = vadd.f32 %v2776, %v2948
        %2950 = vmatprep.mubr.bf16.mxu0 0
        %2951 = vmatmul.mubr.bf16.gmra.mrb[0].mxu0 %v2795
        %v2952 = vpop.f32.mrb[0].mxu0
        %v2953 = vadd.f32 %v2772, %v2952
        %v2954 = vpop.f32.mrb[0].mxu0
        %v2955 = vadd.f32 %v2776, %v2954
        %v2956 = vpop.f32.mrb[0].mxu0
        %v2957 = vadd.f32 %v2772, %v2956
        %v2958 = vpop.f32.mrb[0].mxu0
        %v2959 = vadd.f32 %v2776, %v2958
        %2960 = vmatprep.mubr.bf16.mxu0 0
        %2961 = vmatmul.mubr.bf16.gmra.mrb[0].mxu0 %v2798
        %v2962 = vpop.f32.mrb[0].mxu0
        %v2963 = vadd.f32 %v2772, %v2962
        %v2964 = vpop.f32.mrb[0].mxu0
        %v2965 = vadd.f32 %v2776, %v2964
        %v2966 = vpop.f32.mrb[0].mxu0
        %v2967 = vadd.f32 %v2772, %v2966
        %v2968 = vpop.f32.mrb[0].mxu0
        %v2969 = vadd.f32 %v2776, %v2968
        %2970 = vmatprep.mubr.bf16.mxu0 0
        %2971 = vmatmul.mubr.bf16.gmra.mrb[0].mxu0 %v2801
        %v2972 = vpop.f32.mrb[0].mxu0
        %v2973 = vadd.f32 %v2772, %v2972
        %v2974 = vpop.f32.mrb[0].mxu0
        %v2975 = vadd.f32 %v2776, %v2974
        %v2976 = vpop.f32.mrb[0].mxu0
        %v2977 = vadd.f32 %v2772, %v2976
        %v2978 = vpop.f32.mrb[0].mxu0
        %v2979 = vadd.f32 %v2776, %v2978
        %2980 = vmatprep.mubr.bf16.mxu0 0
        %2981 = vmatmul.mubr.bf16.gmra.mrb[0].mxu0 %v2804
        %v2982 = vpop.f32.mrb[0].mxu0
        %v2983 = vadd.f32 %v2772, %v2982
        %v2984 = vpop.f32.mrb[0].mxu0
        %v2985 = vadd.f32 %v2776, %v2984
        %v2986 = vpop.f32.mrb[0].mxu0
        %v2987 = vadd.f32 %v2772, %v2986
        %v2988 = vpop.f32.mrb[0].mxu0
        %v2989 = vadd.f32 %v2776, %v2988
        %2990 = vmatprep.mubr.bf16.mxu0 0
        %2991 = vmatmul.mubr.bf16.gmra.mrb[0].mxu0 %v2807
        %v2992 = vpop.f32.mrb[0].mxu0
        %v2993 = vadd.f32 %v2772, %v2992
        %v2994 = vpop.f32.mrb[0].mxu0
        %v2995 = vadd.f32 %v2776, %v2994
        %v2996 = vpop.f32.mrb[0].mxu0
        %v2997 = vadd.f32 %v2772, %v2996
        %v2998 = vpop.f32.mrb[0].mxu0
        %v2999 = vadd.f32 %v2776, %v2998
        %3000 = vmatprep.mubr.bf16.mxu0 0
        %3001 = vmatmul.mubr.bf16.gmra.mrb[0].mxu0 %v2810
        %v3002 = vpop.f32.mrb[0].mxu0
        %v3003 = vadd.f32 %v2772, %v3002
        %v3004 = vpop.f32.mrb[0].mxu0
        %v3005 = vadd.f32 %v2776, %v3004
        %v3006 = vpop.f32.mrb[0].mxu0
        %v3007 = vadd.f32 %v2772, %v3006
        %v3008 = vpop.f32.mrb[0].mxu0
        %v3009 = vadd.f32 %v2776, %v3008
        %3010 = vmatprep.mubr.bf16.mxu0 0
        %3011 = vmatmul.mubr.bf16.gmra.mrb[0].mxu0 %v2813
        %v3012 = vpop.f32.mrb[0].mxu0
        %v3013 = vadd.f32 %v2772, %v3012
        %v3014 = vpop.f32.mrb[0].mxu0
        %v3015 = vadd.f32 %v2776, %v3014
        %v3016 = vpop.f32.mrb[0].mxu0
        %v3017 = vadd.f32 %v2772, %v3016
        %v3018 = vpop.f32.mrb[0].mxu0
        %v3019 = vadd.f32 %v2776, %v3018
        %3020 = vmatprep.mubr.bf16.mxu0 0
        %3021 = vmatmul.mubr.bf16.gmra.mrb[0].mxu0 %v2816
        %v3022 = vpop.f32.mrb[0].mxu0
        %v3023 = vadd.f32 %v2772, %v3022
        %v3024 = vpop.f32.mrb[0].mxu0
        %v3025 = vadd.f32 %v2776, %v3024
        %v3026 = vpop.f32.mrb[0].mxu0
        %v3027 = vadd.f32 %v2772, %v3026
        %v3028 = vpop.f32.mrb[0].mxu0
        %v3029 = vadd.f32 %v2776, %v3028
        %3030 = vmatprep.mubr.bf16.mxu0 0
        %3031 = vmatmul.mubr.bf16.gmra.mrb[0].mxu0 %v2819
        %v3032 = vpop.f32.mrb[0].mxu0
        %v3033 = vadd.f32 %v2772, %v3032
        %v3034 = vpop.f32.mrb[0].mxu0
        %v3035 = vadd.f32 %v2776, %v3034
        %v3036 = vpop.f32.mrb[0].mxu0
        %v3037 = vadd.f32 %v2772, %v3036
        %v3038 = vpop.f32.mrb[0].mxu0
        %v3039 = vadd.f32 %v2776, %v3038
        %3040 = vmatprep.mubr.bf16.mxu0 0
        %3041 = vmatmul.mubr.bf16.gmra.mrb[0].mxu0 %v2822
        %v3042 = vpop.f32.mrb[0].mxu0
        %v3043 = vadd.f32 %v2772, %v3042
        %v3044 = vpop.f32.mrb[0].mxu0
        %v3045 = vadd.f32 %v2776, %v3044
        %v3046 = vpop.f32.mrb[0].mxu0
        %v3047 = vadd.f32 %v2772, %v3046
        %v3048 = vpop.f32.mrb[0].mxu0
        %v3049 = vadd.f32 %v2776, %v3048
        %3050 = vmatprep.mubr.bf16.mxu0 0
        %3051 = vmatmul.mubr.bf16.gmra.mrb[0].mxu0 %v2825
        %v3052 = vpop.f32.mrb[0].mxu0
        %v3053 = vadd.f32 %v2772, %v3052
        %v3054 = vpop.f32.mrb[0].mxu0
        %v3055 = vadd.f32 %v2776, %v3054
        %v3056 = vpop.f32.mrb[0].mxu0
        %v3057 = vadd.f32 %v2772, %v3056
        %v3058 = vpop.f32.mrb[0].mxu0
        %v3059 = vadd.f32 %v2776, %v3058
        %3060 = vmatprep.mubr.bf16.mxu0 0
        %3061 = vmatmul.mubr.bf16.gmra.mrb[0].mxu0 %v2828
        %v3062 = vpop.f32.mrb[0].mxu0
        %v3063 = vadd.f32 %v2772, %v3062
        %v3064 = vpop.f32.mrb[0].mxu0
        %v3065 = vadd.f32 %v2776, %v3064
        %v3066 = vpop.f32.mrb[0].mxu0
        %v3067 = vadd.f32 %v2772, %v3066
        %v3068 = vpop.f32.mrb[0].mxu0
        %v3069 = vadd.f32 %v2776, %v3068
        %3070 = vmatprep.mubr.bf16.mxu0 0
        %3071 = vmatmul.mubr.bf16.gmra.mrb[0].mxu0 %v2831
        %v3072 = vpop.f32.mrb[0].mxu0
        %v3073 = vadd.f32 %v2772, %v3072
        %v3074 = vpop.f32.mrb[0].mxu0
        %v3075 = vadd.f32 %v2776, %v3074
        %v3076 = vpop.f32.mrb[0].mxu0
        %v3077 = vadd.f32 %v2772, %v3076
        %v3078 = vpop.f32.mrb[0].mxu0
        %v3079 = vadd.f32 %v2776, %v3078
        %3080 = vmatprep.mubr.bf16.mxu0 0
        %3081 = vmatmul.mubr.bf16.gmra.mrb[0].mxu0 %v2834
        %v3082 = vpop.f32.mrb[0].mxu0
        %v3083 = vadd.f32 %v2772, %v3082
        %v3084 = vpop.f32.mrb[0].mxu0
        %v3085 = vadd.f32 %v2776, %v3084
        %v3086 = vpop.f32.mrb[0].mxu0
        %v3087 = vadd.f32 %v2772, %v3086
        %v3088 = vpop.f32.mrb[0].mxu0
        %v3089 = vadd.f32 %v2776, %v3088
        %3090 = vmatprep.mubr.bf16.mxu0 0
        %3091 = vmatmul.mubr.bf16.gmra.mrb[0].mxu0 %v2837
        %v3092 = vpop.f32.mrb[0].mxu0
        %v3093 = vadd.f32 %v2772, %v3092
        %v3094 = vpop.f32.mrb[0].mxu0
        %v3095 = vadd.f32 %v2776, %v3094
        %v3096 = vpop.f32.mrb[0].mxu0
        %v3097 = vadd.f32 %v2772, %v3096
        %v3098 = vpop.f32.mrb[0].mxu0
        %v3099 = vadd.f32 %v2776, %v3098
        %3100 = vmatprep.mubr.bf16.mxu0 0
        %3101 = vmatmul.mubr.bf16.gmra.mrb[0].mxu0 %v2840
        %v3102 = vpop.f32.mrb[0].mxu0
        %v3103 = vadd.f32 %v2772, %v3102
        %v3104 = vpop.f32.mrb[0].mxu0
        %v3105 = vadd.f32 %v2776, %v3104
        %v3106 = vpop.f32.mrb[0].mxu0
        %v3107 = vadd.f32 %v2772, %v3106
        %v3108 = vpop.f32.mrb[0].mxu0
        %v3109 = vadd.f32 %v2776, %v3108
        %3110 = vmatprep.mubr.bf16.mxu0 0
        %3111 = vmatmul.mubr.bf16.gmra.mrb[0].mxu0 %v2843
        %v3112 = vpop.f32.mrb[0].mxu0
        %v3113 = vadd.f32 %v2772, %v3112
        %v3114 = vpop.f32.mrb[0].mxu0
        %v3115 = vadd.f32 %v2776, %v3114
        %v3116 = vpop.f32.mrb[0].mxu0
        %v3117 = vadd.f32 %v2772, %v3116
        %v3118 = vpop.f32.mrb[0].mxu0
        %v3119 = vadd.f32 %v2776, %v3118
        %3120 = vmatprep.mubr.bf16.mxu0 0
        %3121 = vmatmul.mubr.bf16.gmra.mrb[0].mxu0 %v2846
        %v3122 = vpop.f32.mrb[0].mxu0
        %v3123 = vadd.f32 %v2772, %v3122
        %v3124 = vpop.f32.mrb[0].mxu0
        %v3125 = vadd.f32 %v2776, %v3124
        %v3126 = vpop.f32.mrb[0].mxu0
        %v3127 = vadd.f32 %v2772, %v3126
        %v3128 = vpop.f32.mrb[0].mxu0
        %v3129 = vadd.f32 %v2776, %v3128
        %3130 = vmatprep.mubr.bf16.mxu0 0
        %3131 = vmatmul.mubr.bf16.gmra.mrb[0].mxu0 %v2849
        %v3132 = vpop.f32.mrb[0].mxu0
        %v3133 = vadd.f32 %v2772, %v3132
        %v3134 = vpop.f32.mrb[0].mxu0
        %v3135 = vadd.f32 %v2776, %v3134
        %v3136 = vpop.f32.mrb[0].mxu0
        %v3137 = vadd.f32 %v2772, %v3136
        %v3138 = vpop.f32.mrb[0].mxu0
        %v3139 = vadd.f32 %v2776, %v3138
        %3140 = vmatprep.mubr.bf16.mxu0 0
        %3141 = vmatmul.mubr.bf16.gmra.mrb[0].mxu0 %v2852
        %v3142 = vpop.f32.mrb[0].mxu0
        %v3143 = vadd.f32 %v2772, %v3142
        %v3144 = vpop.f32.mrb[0].mxu0
        %v3145 = vadd.f32 %v2776, %v3144
        %v3146 = vpop.f32.mrb[0].mxu0
        %v3147 = vadd.f32 %v2772, %v3146
        %v3148 = vpop.f32.mrb[0].mxu0
        %v3149 = vadd.f32 %v2776, %v3148
        %3150 = vmatprep.mubr.bf16.mxu0 0
        %3151 = vmatmul.mubr.bf16.gmra.mrb[0].mxu0 %v2855
        %v3152 = vpop.f32.mrb[0].mxu0
        %v3153 = vadd.f32 %v2772, %v3152
        %v3154 = vpop.f32.mrb[0].mxu0
        %v3155 = vadd.f32 %v2776, %v3154
        %v3156 = vpop.f32.mrb[0].mxu0
        %v3157 = vadd.f32 %v2772, %v3156
        %v3158 = vpop.f32.mrb[0].mxu0
        %v3159 = vadd.f32 %v2776, %v3158
        %3160 = vmatprep.mubr.bf16.mxu0 0
        %3161 = vmatmul.mubr.bf16.gmra.mrb[0].mxu0 %v2858
        %v3162 = vpop.f32.mrb[0].mxu0
        %v3163 = vadd.f32 %v2772, %v3162
        %v3164 = vpop.f32.mrb[0].mxu0
        %v3165 = vadd.f32 %v2776, %v3164
        %v3166 = vpop.f32.mrb[0].mxu0
        %v3167 = vadd.f32 %v2772, %v3166
        %v3168 = vpop.f32.mrb[0].mxu0
        %v3169 = vadd.f32 %v2776, %v3168
        %3170 = vmatprep.mubr.bf16.mxu0 0
        %3171 = vmatmul.mubr.bf16.gmra.mrb[0].mxu0 %v2861
        %v3172 = vpop.f32.mrb[0].mxu0
        %v3173 = vadd.f32 %v2772, %v3172
        %v3174 = vpop.f32.mrb[0].mxu0
        %v3175 = vadd.f32 %v2776, %v3174
        %v3176 = vpop.f32.mrb[0].mxu0
        %v3177 = vadd.f32 %v2772, %v3176
        %v3178 = vpop.f32.mrb[0].mxu0
        %v3179 = vadd.f32 %v2776, %v3178
        %3180 = vmatprep.mubr.bf16.mxu0 0
        %3181 = vmatmul.mubr.bf16.gmra.mrb[0].mxu0 %v2864
        %v3182 = vpop.f32.mrb[0].mxu0
        %v3183 = vadd.f32 %v2772, %v3182
        %v3184 = vpop.f32.mrb[0].mxu0
        %v3185 = vadd.f32 %v2776, %v3184
        %v3186 = vpop.f32.mrb[0].mxu0
        %v3187 = vadd.f32 %v2772, %v3186
        %v3188 = vpop.f32.mrb[0].mxu0
        %v3189 = vadd.f32 %v2776, %v3188
        %3190 = vmatprep.mubr.bf16.mxu0 0
        %3191 = vmatmul.mubr.bf16.gmra.mrb[0].mxu0 %v2867
        %v3192 = vpop.f32.mrb[0].mxu0
        %v3193 = vadd.f32 %v2772, %v3192
        %v3194 = vpop.f32.mrb[0].mxu0
        %v3195 = vadd.f32 %v2776, %v3194
        %v3196 = vpop.f32.mrb[0].mxu0
        %v3197 = vadd.f32 %v2772, %v3196
        %v3198 = vpop.f32.mrb[0].mxu0
        %v3199 = vadd.f32 %v2776, %v3198
        %3200 = vmatprep.mubr.bf16.mxu0 0
        %3201 = vmatmul.mubr.bf16.gmra.mrb[0].mxu0 %v2870
        %v3202 = vpop.f32.mrb[0].mxu0
        %v3203 = vadd.f32 %v2772, %v3202
        %v3204 = vpop.f32.mrb[0].mxu0
        %v3205 = vadd.f32 %v2776, %v3204
        %v3206 = vpop.f32.mrb[0].mxu0
        %v3207 = vadd.f32 %v2772, %v3206
        %v3208 = vpop.f32.mrb[0].mxu0
        %v3209 = vadd.f32 %v2776, %v3208
        %3210 = vmatprep.mubr.bf16.mxu0 0
        %3211 = vmatmul.mubr.bf16.gmra.mrb[0].mxu0 %v2873
        %v3212 = vpop.f32.mrb[0].mxu0
        %v3213 = vadd.f32 %v2772, %v3212
        %v3214 = vpop.f32.mrb[0].mxu0
        %v3215 = vadd.f32 %v2776, %v3214
        %v3216 = vpop.f32.mrb[0].mxu0
        %v3217 = vadd.f32 %v2772, %v3216
        %v3218 = vpop.f32.mrb[0].mxu0
        %v3219 = vadd.f32 %v2776, %v3218
        %3220 = vmatprep.mubr.bf16.mxu0 0
        %3221 = vmatmul.mubr.bf16.gmra.mrb[0].mxu0 %v2876
        %v3222 = vpop.f32.mrb[0].mxu0
        %v3223 = vadd.f32 %v2772, %v3222
        %v3224 = vpop.f32.mrb[0].mxu0
        %v3225 = vadd.f32 %v2776, %v3224
        %v3226 = vpop.f32.mrb[0].mxu0
        %v3227 = vadd.f32 %v2772, %v3226
        %v3228 = vpop.f32.mrb[0].mxu0
        %v3229 = vadd.f32 %v2776, %v3228
        %3230 = vmatprep.mubr.bf16.mxu0 0
        %3231 = vmatmul.mubr.bf16.gmra.mrb[0].mxu0 %v2879
        %v3232 = vpop.f32.mrb[0].mxu0
        %v3233 = vadd.f32 %v2772, %v3232
        %v3234 = vpop.f32.mrb[0].mxu0
        %v3235 = vadd.f32 %v2776, %v3234
        %v3236 = vpop.f32.mrb[0].mxu0
        %v3237 = vadd.f32 %v2772, %v3236
        %v3238 = vpop.f32.mrb[0].mxu0
        %v3239 = vadd.f32 %v2776, %v3238
        %3240 = vdwg.mxu0
        %v3241 = vmax.f32 %v2923, 0.0
        %v3242 = vmax.f32 %v2925, 0.0
        %v3243 = vmax.f32 %v2927, 0.0
        %v3244 = vmax.f32 %v2929, 0.0
        %v3245 = vmax.f32 %v2933, 0.0
        %v3246 = vmax.f32 %v2935, 0.0
        %v3247 = vmax.f32 %v2937, 0.0
        %v3248 = vmax.f32 %v2939, 0.0
        %v3249 = vmax.f32 %v2943, 0.0
        %v3250 = vmax.f32 %v2945, 0.0
        %v3251 = vmax.f32 %v2947, 0.0
        %v3252 = vmax.f32 %v2949, 0.0
        %v3253 = vmax.f32 %v2953, 0.0
        %v3254 = vmax.f32 %v2955, 0.0
        %v3255 = vmax.f32 %v2957, 0.0
        %v3256 = vmax.f32 %v2959, 0.0
        %v3257 = vmax.f32 %v2963, 0.0
        %v3258 = vmax.f32 %v2965, 0.0
        %v3259 = vmax.f32 %v2967, 0.0
        %v3260 = vmax.f32 %v2969, 0.0
        %v3261 = vmax.f32 %v2973, 0.0
        %v3262 = vmax.f32 %v2975, 0.0
        %v3263 = vmax.f32 %v2977, 0.0
        %v3264 = vmax.f32 %v2979, 0.0
        %v3265 = vmax.f32 %v2983, 0.0
        %v3266 = vmax.f32 %v2985, 0.0
        %v3267 = vmax.f32 %v2987, 0.0
        %v3268 = vmax.f32 %v2989, 0.0
        %v3269 = vmax.f32 %v2993, 0.0
        %v3270 = vmax.f32 %v2995, 0.0
        %v3271 = vmax.f32 %v2997, 0.0
        %v3272 = vmax.f32 %v2999, 0.0
        %v3273 = vmax.f32 %v3003, 0.0
        %v3274 = vmax.f32 %v3005, 0.0
        %v3275 = vmax.f32 %v3007, 0.0
        %v3276 = vmax.f32 %v3009, 0.0
        %v3277 = vmax.f32 %v3013, 0.0
        %v3278 = vmax.f32 %v3015, 0.0
        %v3279 = vmax.f32 %v3017, 0.0
        %v3280 = vmax.f32 %v3019, 0.0
        %v3281 = vmax.f32 %v3023, 0.0
        %v3282 = vmax.f32 %v3025, 0.0
        %v3283 = vmax.f32 %v3027, 0.0
        %v3284 = vmax.f32 %v3029, 0.0
        %v3285 = vmax.f32 %v3033, 0.0
        %v3286 = vmax.f32 %v3035, 0.0
        %v3287 = vmax.f32 %v3037, 0.0
        %v3288 = vmax.f32 %v3039, 0.0
        %v3289 = vmax.f32 %v3043, 0.0
        %v3290 = vmax.f32 %v3045, 0.0
        %v3291 = vmax.f32 %v3047, 0.0
        %v3292 = vmax.f32 %v3049, 0.0
        %v3293 = vmax.f32 %v3053, 0.0
        %v3294 = vmax.f32 %v3055, 0.0
        %v3295 = vmax.f32 %v3057, 0.0
        %v3296 = vmax.f32 %v3059, 0.0
        %v3297 = vmax.f32 %v3063, 0.0
        %v3298 = vmax.f32 %v3065, 0.0
        %v3299 = vmax.f32 %v3067, 0.0
        %v3300 = vmax.f32 %v3069, 0.0
        %v3301 = vmax.f32 %v3073, 0.0
        %v3302 = vmax.f32 %v3075, 0.0
        %v3303 = vmax.f32 %v3077, 0.0
        %v3304 = vmax.f32 %v3079, 0.0
        %v3305 = vmax.f32 %v3083, 0.0
        %v3306 = vmax.f32 %v3085, 0.0
        %v3307 = vmax.f32 %v3087, 0.0
        %v3308 = vmax.f32 %v3089, 0.0
        %v3309 = vmax.f32 %v3093, 0.0
        %v3310 = vmax.f32 %v3095, 0.0
        %v3311 = vmax.f32 %v3097, 0.0
        %v3312 = vmax.f32 %v3099, 0.0
        %v3313 = vmax.f32 %v3103, 0.0
        %v3314 = vmax.f32 %v3105, 0.0
        %v3315 = vmax.f32 %v3107, 0.0
        %v3316 = vmax.f32 %v3109, 0.0
        %v3317 = vmax.f32 %v3113, 0.0
        %v3318 = vmax.f32 %v3115, 0.0
        %v3319 = vmax.f32 %v3117, 0.0
        %v3320 = vmax.f32 %v3119, 0.0
        %v3321 = vmax.f32 %v3123, 0.0
        %v3322 = vmax.f32 %v3125, 0.0
        %v3323 = vmax.f32 %v3127, 0.0
        %v3324 = vmax.f32 %v3129, 0.0
        %v3325 = vmax.f32 %v3133, 0.0
        %v3326 = vmax.f32 %v3135, 0.0
        %v3327 = vmax.f32 %v3137, 0.0
        %v3328 = vmax.f32 %v3139, 0.0
        %v3329 = vmax.f32 %v3143, 0.0
        %v3330 = vmax.f32 %v3145, 0.0
        %v3331 = vmax.f32 %v3147, 0.0
        %v3332 = vmax.f32 %v3149, 0.0
        %v3333 = vmax.f32 %v3153, 0.0
        %v3334 = vmax.f32 %v3155, 0.0
        %v3335 = vmax.f32 %v3157, 0.0
        %v3336 = vmax.f32 %v3159, 0.0
        %v3337 = vmax.f32 %v3163, 0.0
        %v3338 = vmax.f32 %v3165, 0.0
        %v3339 = vmax.f32 %v3167, 0.0
        %v3340 = vmax.f32 %v3169, 0.0
        %v3341 = vmax.f32 %v3173, 0.0
        %v3342 = vmax.f32 %v3175, 0.0
        %v3343 = vmax.f32 %v3177, 0.0
        %v3344 = vmax.f32 %v3179, 0.0
        %v3345 = vmax.f32 %v3183, 0.0
        %v3346 = vmax.f32 %v3185, 0.0
        %v3347 = vmax.f32 %v3187, 0.0
        %v3348 = vmax.f32 %v3189, 0.0
        %v3349 = vmax.f32 %v3193, 0.0
        %v3350 = vmax.f32 %v3195, 0.0
        %v3351 = vmax.f32 %v3197, 0.0
        %v3352 = vmax.f32 %v3199, 0.0
        %v3353 = vmax.f32 %v3203, 0.0
        %v3354 = vmax.f32 %v3205, 0.0
        %v3355 = vmax.f32 %v3207, 0.0
        %v3356 = vmax.f32 %v3209, 0.0
        %v3357 = vmax.f32 %v3213, 0.0
        %v3358 = vmax.f32 %v3215, 0.0
        %v3359 = vmax.f32 %v3217, 0.0
        %v3360 = vmax.f32 %v3219, 0.0
        %v3361 = vmax.f32 %v3223, 0.0
        %v3362 = vmax.f32 %v3225, 0.0
        %v3363 = vmax.f32 %v3227, 0.0
        %v3364 = vmax.f32 %v3229, 0.0
        %v3365 = vmax.f32 %v3233, 0.0
        %v3366 = vmax.f32 %v3235, 0.0
        %v3367 = vmax.f32 %v3237, 0.0
        %v3368 = vmax.f32 %v3239, 0.0
        %v3369 = vpack.c.bf16 %v3243, %v3241
        %v3370 = vpack.c.bf16 %v3244, %v3242
        %v3371 = vpack.c.bf16 %v3247, %v3245
        %v3372 = vpack.c.bf16 %v3248, %v3246
        %v3373 = vpack.c.bf16 %v3251, %v3249
        %v3374 = vpack.c.bf16 %v3252, %v3250
        %v3375 = vpack.c.bf16 %v3255, %v3253
        %v3376 = vpack.c.bf16 %v3256, %v3254
        %v3377 = vpack.c.bf16 %v3259, %v3257
        %v3378 = vpack.c.bf16 %v3260, %v3258
        %v3379 = vpack.c.bf16 %v3263, %v3261
        %v3380 = vpack.c.bf16 %v3264, %v3262
        %v3381 = vpack.c.bf16 %v3267, %v3265
        %v3382 = vpack.c.bf16 %v3268, %v3266
        %v3383 = vpack.c.bf16 %v3271, %v3269
        %v3384 = vpack.c.bf16 %v3272, %v3270
        %v3385 = vpack.c.bf16 %v3275, %v3273
        %v3386 = vpack.c.bf16 %v3276, %v3274
        %v3387 = vpack.c.bf16 %v3279, %v3277
        %v3388 = vpack.c.bf16 %v3280, %v3278
        %v3389 = vpack.c.bf16 %v3283, %v3281
        %v3390 = vpack.c.bf16 %v3284, %v3282
        %v3391 = vpack.c.bf16 %v3287, %v3285
        %v3392 = vpack.c.bf16 %v3288, %v3286
        %v3393 = vpack.c.bf16 %v3291, %v3289
        %v3394 = vpack.c.bf16 %v3292, %v3290
        %v3395 = vpack.c.bf16 %v3295, %v3293
        %v3396 = vpack.c.bf16 %v3296, %v3294
        %v3397 = vpack.c.bf16 %v3299, %v3297
        %v3398 = vpack.c.bf16 %v3300, %v3298
        %v3399 = vpack.c.bf16 %v3303, %v3301
        %v3400 = vpack.c.bf16 %v3304, %v3302
        %v3401 = vpack.c.bf16 %v3307, %v3305
        %v3402 = vpack.c.bf16 %v3308, %v3306
        %v3403 = vpack.c.bf16 %v3311, %v3309
        %v3404 = vpack.c.bf16 %v3312, %v3310
        %v3405 = vpack.c.bf16 %v3315, %v3313
        %v3406 = vpack.c.bf16 %v3316, %v3314
        %v3407 = vpack.c.bf16 %v3319, %v3317
        %v3408 = vpack.c.bf16 %v3320, %v3318
        %v3409 = vpack.c.bf16 %v3323, %v3321
        %v3410 = vpack.c.bf16 %v3324, %v3322
        %v3411 = vpack.c.bf16 %v3327, %v3325
        %v3412 = vpack.c.bf16 %v3328, %v3326
        %v3413 = vpack.c.bf16 %v3331, %v3329
        %v3414 = vpack.c.bf16 %v3332, %v3330
        %v3415 = vpack.c.bf16 %v3335, %v3333
        %v3416 = vpack.c.bf16 %v3336, %v3334
        %v3417 = vpack.c.bf16 %v3339, %v3337
        %v3418 = vpack.c.bf16 %v3340, %v3338
        %v3419 = vpack.c.bf16 %v3343, %v3341
        %v3420 = vpack.c.bf16 %v3344, %v3342
        %v3421 = vpack.c.bf16 %v3347, %v3345
        %v3422 = vpack.c.bf16 %v3348, %v3346
        %v3423 = vpack.c.bf16 %v3351, %v3349
        %v3424 = vpack.c.bf16 %v3352, %v3350
        %v3425 = vpack.c.bf16 %v3355, %v3353
        %v3426 = vpack.c.bf16 %v3356, %v3354
        %v3427 = vpack.c.bf16 %v3359, %v3357
        %v3428 = vpack.c.bf16 %v3360, %v3358
        %v3429 = vpack.c.bf16 %v3363, %v3361
        %v3430 = vpack.c.bf16 %v3364, %v3362
        %v3431 = vpack.c.bf16 %v3367, %v3365
        %v3432 = vpack.c.bf16 %v3368, %v3366
        %v3433 = vld [vmem:[#allocation13] sm:$0xff]
        %v3434 = vld [vmem:[#allocation13 + $0x8] sm:$0xff]
        %v3435 = vld [vmem:[#allocation13 + $0x10] sm:$0xff]
        %v3436 = vld [vmem:[#allocation13 + $0x18] sm:$0xff]
        %v3437 = vld [vmem:[#allocation13 + $0x20] sm:$0xff]
        %v3438 = vld [vmem:[#allocation13 + $0x28] sm:$0xff]
        %v3439 = vld [vmem:[#allocation13 + $0x30] sm:$0xff]
        %v3440 = vld [vmem:[#allocation13 + $0x38] sm:$0xff]
        %v3441 = vld [vmem:[#allocation13 + $0x40] sm:$0xff]
        %v3442 = vld [vmem:[#allocation13 + $0x48] sm:$0xff]
        %v3443 = vld [vmem:[#allocation13 + $0x50] sm:$0xff]
        %v3444 = vld [vmem:[#allocation13 + $0x58] sm:$0xff]
        %v3445 = vld [vmem:[#allocation13 + $0x60] sm:$0xff]
        %v3446 = vld [vmem:[#allocation13 + $0x68] sm:$0xff]
        %v3447 = vld [vmem:[#allocation13 + $0x70] sm:$0xff]
        %v3448 = vld [vmem:[#allocation13 + $0x78] sm:$0xff]
        %v3449 = vld [vmem:[#allocation13 + $0x80] sm:$0xff]
        %v3450 = vld [vmem:[#allocation13 + $0x88] sm:$0xff]
        %v3451 = vld [vmem:[#allocation13 + $0x90] sm:$0xff]
        %v3452 = vld [vmem:[#allocation13 + $0x98] sm:$0xff]
        %v3453 = vld [vmem:[#allocation13 + $0xa0] sm:$0xff]
        %v3454 = vld [vmem:[#allocation13 + $0xa8] sm:$0xff]
        %v3455 = vld [vmem:[#allocation13 + $0xb0] sm:$0xff]
        %v3456 = vld [vmem:[#allocation13 + $0xb8] sm:$0xff]
        %v3457 = vld [vmem:[#allocation13 + $0xc0] sm:$0xff]
        %v3458 = vld [vmem:[#allocation13 + $0xc8] sm:$0xff]
        %v3459 = vld [vmem:[#allocation13 + $0xd0] sm:$0xff]
        %v3460 = vld [vmem:[#allocation13 + $0xd8] sm:$0xff]
        %v3461 = vld [vmem:[#allocation13 + $0xe0] sm:$0xff]
        %v3462 = vld [vmem:[#allocation13 + $0xe8] sm:$0xff]
        %v3463 = vld [vmem:[#allocation13 + $0xf0] sm:$0xff]
        %v3464 = vld [vmem:[#allocation13 + $0xf8] sm:$0xff]
        %v3465 = vld [vmem:[#allocation14] sm:$0x3]
        %v3467 = vlaneseq
        %v3468 = vshrl.u32 %v3467, 7
        %v3469 = vsub.s32 0, %v3468
        %v3470 = vrot.slane %v3465, %v3469
        %v3471 = vlaneseq
        %v3472 = vshrl.u32 %v3471, 7
        %v3473 = vsub.s32 1, %v3472
        %v3474 = vrot.slane %v3465, %v3473
        %v3509 = vunpack.c.l.b16 %v3433
        %v3510 = vunpack.c.h.b16 %v3433
        %v3511 = vunpack.c.l.b16 %v3434
        %v3512 = vunpack.c.h.b16 %v3434
        %v3513 = vunpack.c.l.b16 %v3435
        %v3514 = vunpack.c.h.b16 %v3435
        %v3515 = vunpack.c.l.b16 %v3436
        %v3516 = vunpack.c.h.b16 %v3436
        %v3517 = vunpack.c.l.b16 %v3437
        %v3518 = vunpack.c.h.b16 %v3437
        %v3519 = vunpack.c.l.b16 %v3438
        %v3520 = vunpack.c.h.b16 %v3438
        %v3521 = vunpack.c.l.b16 %v3439
        %v3522 = vunpack.c.h.b16 %v3439
        %v3523 = vunpack.c.l.b16 %v3440
        %v3524 = vunpack.c.h.b16 %v3440
        %v3525 = vunpack.c.l.b16 %v3441
        %v3526 = vunpack.c.h.b16 %v3441
        %v3527 = vunpack.c.l.b16 %v3442
        %v3528 = vunpack.c.h.b16 %v3442
        %v3529 = vunpack.c.l.b16 %v3443
        %v3530 = vunpack.c.h.b16 %v3443
        %v3531 = vunpack.c.l.b16 %v3444
        %v3532 = vunpack.c.h.b16 %v3444
        %v3533 = vunpack.c.l.b16 %v3445
        %v3534 = vunpack.c.h.b16 %v3445
        %v3535 = vunpack.c.l.b16 %v3446
        %v3536 = vunpack.c.h.b16 %v3446
        %v3537 = vunpack.c.l.b16 %v3447
        %v3538 = vunpack.c.h.b16 %v3447
        %v3539 = vunpack.c.l.b16 %v3448
        %v3540 = vunpack.c.h.b16 %v3448
        %v3541 = vunpack.c.l.b16 %v3449
        %v3542 = vunpack.c.h.b16 %v3449
        %v3543 = vunpack.c.l.b16 %v3450
        %v3544 = vunpack.c.h.b16 %v3450
        %v3545 = vunpack.c.l.b16 %v3451
        %v3546 = vunpack.c.h.b16 %v3451
        %v3547 = vunpack.c.l.b16 %v3452
        %v3548 = vunpack.c.h.b16 %v3452
        %v3549 = vunpack.c.l.b16 %v3453
        %v3550 = vunpack.c.h.b16 %v3453
        %v3551 = vunpack.c.l.b16 %v3454
        %v3552 = vunpack.c.h.b16 %v3454
        %v3553 = vunpack.c.l.b16 %v3455
        %v3554 = vunpack.c.h.b16 %v3455
        %v3555 = vunpack.c.l.b16 %v3456
        %v3556 = vunpack.c.h.b16 %v3456
        %v3557 = vunpack.c.l.b16 %v3457
        %v3558 = vunpack.c.h.b16 %v3457
        %v3559 = vunpack.c.l.b16 %v3458
        %v3560 = vunpack.c.h.b16 %v3458
        %v3561 = vunpack.c.l.b16 %v3459
        %v3562 = vunpack.c.h.b16 %v3459
        %v3563 = vunpack.c.l.b16 %v3460
        %v3564 = vunpack.c.h.b16 %v3460
        %v3565 = vunpack.c.l.b16 %v3461
        %v3566 = vunpack.c.h.b16 %v3461
        %v3567 = vunpack.c.l.b16 %v3462
        %v3568 = vunpack.c.h.b16 %v3462
        %v3569 = vunpack.c.l.b16 %v3463
        %v3570 = vunpack.c.h.b16 %v3463
        %v3571 = vunpack.c.l.b16 %v3464
        %v3572 = vunpack.c.h.b16 %v3464
        %v3573 = vpack.c.b16 %v3511, %v3509
        %v3574 = vpack.c.b16 %v3512, %v3510
        %v3575 = vpack.c.b16 %v3515, %v3513
        %v3576 = vpack.c.b16 %v3516, %v3514
        %v3577 = vpack.c.b16 %v3519, %v3517
        %v3578 = vpack.c.b16 %v3520, %v3518
        %v3579 = vpack.c.b16 %v3523, %v3521
        %v3580 = vpack.c.b16 %v3524, %v3522
        %v3581 = vpack.c.b16 %v3527, %v3525
        %v3582 = vpack.c.b16 %v3528, %v3526
        %v3583 = vpack.c.b16 %v3531, %v3529
        %v3584 = vpack.c.b16 %v3532, %v3530
        %v3585 = vpack.c.b16 %v3535, %v3533
        %v3586 = vpack.c.b16 %v3536, %v3534
        %v3587 = vpack.c.b16 %v3539, %v3537
        %v3588 = vpack.c.b16 %v3540, %v3538
        %v3589 = vpack.c.b16 %v3543, %v3541
        %v3590 = vpack.c.b16 %v3544, %v3542
        %v3591 = vpack.c.b16 %v3547, %v3545
        %v3592 = vpack.c.b16 %v3548, %v3546
        %v3593 = vpack.c.b16 %v3551, %v3549
        %v3594 = vpack.c.b16 %v3552, %v3550
        %v3595 = vpack.c.b16 %v3555, %v3553
        %v3596 = vpack.c.b16 %v3556, %v3554
        %v3597 = vpack.c.b16 %v3559, %v3557
        %v3598 = vpack.c.b16 %v3560, %v3558
        %v3599 = vpack.c.b16 %v3563, %v3561
        %v3600 = vpack.c.b16 %v3564, %v3562
        %v3601 = vpack.c.b16 %v3567, %v3565
        %v3602 = vpack.c.b16 %v3568, %v3566
        %v3603 = vpack.c.b16 %v3571, %v3569
        %v3604 = vpack.c.b16 %v3572, %v3570
        %3637 = vmatprep.subr.bf16.mxu0 %v3574
        %3638 = vmatpush1.bf16.msra.mxu0 %v3573
        %3639 = vmatprep.subr.bf16.mxu0 %v3576
        %3640 = vmatpush1.bf16.msra.mxu0 %v3575
        %3641 = vmatprep.subr.bf16.mxu0 %v3578
        %3642 = vmatpush1.bf16.msra.mxu0 %v3577
        %3643 = vmatprep.subr.bf16.mxu0 %v3580
        %3644 = vmatpush1.bf16.msra.mxu0 %v3579
        %3645 = vmatprep.subr.bf16.mxu0 %v3582
        %3646 = vmatpush1.bf16.msra.mxu0 %v3581
        %3647 = vmatprep.subr.bf16.mxu0 %v3584
        %3648 = vmatpush1.bf16.msra.mxu0 %v3583
        %3649 = vmatprep.subr.bf16.mxu0 %v3586
        %3650 = vmatpush1.bf16.msra.mxu0 %v3585
        %3651 = vmatprep.subr.bf16.mxu0 %v3588
        %3652 = vmatpush1.bf16.msra.mxu0 %v3587
        %3653 = vmatprep.subr.bf16.mxu0 %v3590
        %3654 = vmatpush1.bf16.msra.mxu0 %v3589
        %3655 = vmatprep.subr.bf16.mxu0 %v3592
        %3656 = vmatpush1.bf16.msra.mxu0 %v3591
        %3657 = vmatprep.subr.bf16.mxu0 %v3594
        %3658 = vmatpush1.bf16.msra.mxu0 %v3593
        %3659 = vmatprep.subr.bf16.mxu0 %v3596
        %3660 = vmatpush1.bf16.msra.mxu0 %v3595
        %3661 = vmatprep.subr.bf16.mxu0 %v3598
        %3662 = vmatpush1.bf16.msra.mxu0 %v3597
        %3663 = vmatprep.subr.bf16.mxu0 %v3600
        %3664 = vmatpush1.bf16.msra.mxu0 %v3599
        %3665 = vmatprep.subr.bf16.mxu0 %v3602
        %3666 = vmatpush1.bf16.msra.mxu0 %v3601
        %3667 = vmatprep.subr.bf16.mxu0 %v3604
        %3668 = vmatpush1.bf16.msra.mxu0 %v3603
        %3669 = vmatprep.mubr.bf16.mxu0 %v3370
        %3670 = vmatmul.mubr.bf16.gmra.mrb[0].mxu0 %v3369
        %v3671 = vpop.f32.mrb[0].mxu0
        %v3672 = vadd.f32 %v3470, %v3671
        %v3673 = vpop.f32.mrb[0].mxu0
        %v3674 = vadd.f32 %v3474, %v3673
        %v3675 = vpop.f32.mrb[0].mxu0
        %v3676 = vadd.f32 %v3470, %v3675
        %v3677 = vpop.f32.mrb[0].mxu0
        %v3678 = vadd.f32 %v3474, %v3677
        %3679 = vmatprep.mubr.bf16.mxu0 %v3372
        %3680 = vmatmul.mubr.bf16.gmra.mrb[0].mxu0 %v3371
        %v3681 = vpop.f32.mrb[0].mxu0
        %v3682 = vadd.f32 %v3470, %v3681
        %v3683 = vpop.f32.mrb[0].mxu0
        %v3684 = vadd.f32 %v3474, %v3683
        %v3685 = vpop.f32.mrb[0].mxu0
        %v3686 = vadd.f32 %v3470, %v3685
        %v3687 = vpop.f32.mrb[0].mxu0
        %v3688 = vadd.f32 %v3474, %v3687
        %3689 = vmatprep.mubr.bf16.mxu0 %v3374
        %3690 = vmatmul.mubr.bf16.gmra.mrb[0].mxu0 %v3373
        %v3691 = vpop.f32.mrb[0].mxu0
        %v3692 = vadd.f32 %v3470, %v3691
        %v3693 = vpop.f32.mrb[0].mxu0
        %v3694 = vadd.f32 %v3474, %v3693
        %v3695 = vpop.f32.mrb[0].mxu0
        %v3696 = vadd.f32 %v3470, %v3695
        %v3697 = vpop.f32.mrb[0].mxu0
        %v3698 = vadd.f32 %v3474, %v3697
        %3699 = vmatprep.mubr.bf16.mxu0 %v3376
        %3700 = vmatmul.mubr.bf16.gmra.mrb[0].mxu0 %v3375
        %v3701 = vpop.f32.mrb[0].mxu0
        %v3702 = vadd.f32 %v3470, %v3701
        %v3703 = vpop.f32.mrb[0].mxu0
        %v3704 = vadd.f32 %v3474, %v3703
        %v3705 = vpop.f32.mrb[0].mxu0
        %v3706 = vadd.f32 %v3470, %v3705
        %v3707 = vpop.f32.mrb[0].mxu0
        %v3708 = vadd.f32 %v3474, %v3707
        %3709 = vmatprep.mubr.bf16.mxu0 %v3378
        %3710 = vmatmul.mubr.bf16.gmra.mrb[0].mxu0 %v3377
        %v3711 = vpop.f32.mrb[0].mxu0
        %v3712 = vadd.f32 %v3470, %v3711
        %v3713 = vpop.f32.mrb[0].mxu0
        %v3714 = vadd.f32 %v3474, %v3713
        %v3715 = vpop.f32.mrb[0].mxu0
        %v3716 = vadd.f32 %v3470, %v3715
        %v3717 = vpop.f32.mrb[0].mxu0
        %v3718 = vadd.f32 %v3474, %v3717
        %3719 = vmatprep.mubr.bf16.mxu0 %v3380
        %3720 = vmatmul.mubr.bf16.gmra.mrb[0].mxu0 %v3379
        %v3721 = vpop.f32.mrb[0].mxu0
        %v3722 = vadd.f32 %v3470, %v3721
        %v3723 = vpop.f32.mrb[0].mxu0
        %v3724 = vadd.f32 %v3474, %v3723
        %v3725 = vpop.f32.mrb[0].mxu0
        %v3726 = vadd.f32 %v3470, %v3725
        %v3727 = vpop.f32.mrb[0].mxu0
        %v3728 = vadd.f32 %v3474, %v3727
        %3729 = vmatprep.mubr.bf16.mxu0 %v3382
        %3730 = vmatmul.mubr.bf16.gmra.mrb[0].mxu0 %v3381
        %v3731 = vpop.f32.mrb[0].mxu0
        %v3732 = vadd.f32 %v3470, %v3731
        %v3733 = vpop.f32.mrb[0].mxu0
        %v3734 = vadd.f32 %v3474, %v3733
        %v3735 = vpop.f32.mrb[0].mxu0
        %v3736 = vadd.f32 %v3470, %v3735
        %v3737 = vpop.f32.mrb[0].mxu0
        %v3738 = vadd.f32 %v3474, %v3737
        %3739 = vmatprep.mubr.bf16.mxu0 %v3384
        %3740 = vmatmul.mubr.bf16.gmra.mrb[0].mxu0 %v3383
        %v3741 = vpop.f32.mrb[0].mxu0
        %v3742 = vadd.f32 %v3470, %v3741
        %v3743 = vpop.f32.mrb[0].mxu0
        %v3744 = vadd.f32 %v3474, %v3743
        %v3745 = vpop.f32.mrb[0].mxu0
        %v3746 = vadd.f32 %v3470, %v3745
        %v3747 = vpop.f32.mrb[0].mxu0
        %v3748 = vadd.f32 %v3474, %v3747
        %3749 = vmatprep.mubr.bf16.mxu0 %v3386
        %3750 = vmatmul.mubr.bf16.gmra.mrb[0].mxu0 %v3385
        %v3751 = vpop.f32.mrb[0].mxu0
        %v3752 = vadd.f32 %v3470, %v3751
        %v3753 = vpop.f32.mrb[0].mxu0
        %v3754 = vadd.f32 %v3474, %v3753
        %v3755 = vpop.f32.mrb[0].mxu0
        %v3756 = vadd.f32 %v3470, %v3755
        %v3757 = vpop.f32.mrb[0].mxu0
        %v3758 = vadd.f32 %v3474, %v3757
        %3759 = vmatprep.mubr.bf16.mxu0 %v3388
        %3760 = vmatmul.mubr.bf16.gmra.mrb[0].mxu0 %v3387
        %v3761 = vpop.f32.mrb[0].mxu0
        %v3762 = vadd.f32 %v3470, %v3761
        %v3763 = vpop.f32.mrb[0].mxu0
        %v3764 = vadd.f32 %v3474, %v3763
        %v3765 = vpop.f32.mrb[0].mxu0
        %v3766 = vadd.f32 %v3470, %v3765
        %v3767 = vpop.f32.mrb[0].mxu0
        %v3768 = vadd.f32 %v3474, %v3767
        %3769 = vmatprep.mubr.bf16.mxu0 %v3390
        %3770 = vmatmul.mubr.bf16.gmra.mrb[0].mxu0 %v3389
        %v3771 = vpop.f32.mrb[0].mxu0
        %v3772 = vadd.f32 %v3470, %v3771
        %v3773 = vpop.f32.mrb[0].mxu0
        %v3774 = vadd.f32 %v3474, %v3773
        %v3775 = vpop.f32.mrb[0].mxu0
        %v3776 = vadd.f32 %v3470, %v3775
        %v3777 = vpop.f32.mrb[0].mxu0
        %v3778 = vadd.f32 %v3474, %v3777
        %3779 = vmatprep.mubr.bf16.mxu0 %v3392
        %3780 = vmatmul.mubr.bf16.gmra.mrb[0].mxu0 %v3391
        %v3781 = vpop.f32.mrb[0].mxu0
        %v3782 = vadd.f32 %v3470, %v3781
        %v3783 = vpop.f32.mrb[0].mxu0
        %v3784 = vadd.f32 %v3474, %v3783
        %v3785 = vpop.f32.mrb[0].mxu0
        %v3786 = vadd.f32 %v3470, %v3785
        %v3787 = vpop.f32.mrb[0].mxu0
        %v3788 = vadd.f32 %v3474, %v3787
        %3789 = vmatprep.mubr.bf16.mxu0 %v3394
        %3790 = vmatmul.mubr.bf16.gmra.mrb[0].mxu0 %v3393
        %v3791 = vpop.f32.mrb[0].mxu0
        %v3792 = vadd.f32 %v3470, %v3791
        %v3793 = vpop.f32.mrb[0].mxu0
        %v3794 = vadd.f32 %v3474, %v3793
        %v3795 = vpop.f32.mrb[0].mxu0
        %v3796 = vadd.f32 %v3470, %v3795
        %v3797 = vpop.f32.mrb[0].mxu0
        %v3798 = vadd.f32 %v3474, %v3797
        %3799 = vmatprep.mubr.bf16.mxu0 %v3396
        %3800 = vmatmul.mubr.bf16.gmra.mrb[0].mxu0 %v3395
        %v3801 = vpop.f32.mrb[0].mxu0
        %v3802 = vadd.f32 %v3470, %v3801
        %v3803 = vpop.f32.mrb[0].mxu0
        %v3804 = vadd.f32 %v3474, %v3803
        %v3805 = vpop.f32.mrb[0].mxu0
        %v3806 = vadd.f32 %v3470, %v3805
        %v3807 = vpop.f32.mrb[0].mxu0
        %v3808 = vadd.f32 %v3474, %v3807
        %3809 = vmatprep.mubr.bf16.mxu0 %v3398
        %3810 = vmatmul.mubr.bf16.gmra.mrb[0].mxu0 %v3397
        %v3811 = vpop.f32.mrb[0].mxu0
        %v3812 = vadd.f32 %v3470, %v3811
        %v3813 = vpop.f32.mrb[0].mxu0
        %v3814 = vadd.f32 %v3474, %v3813
        %v3815 = vpop.f32.mrb[0].mxu0
        %v3816 = vadd.f32 %v3470, %v3815
        %v3817 = vpop.f32.mrb[0].mxu0
        %v3818 = vadd.f32 %v3474, %v3817
        %3819 = vmatprep.mubr.bf16.mxu0 %v3400
        %3820 = vmatmul.mubr.bf16.gmra.mrb[0].mxu0 %v3399
        %v3821 = vpop.f32.mrb[0].mxu0
        %v3822 = vadd.f32 %v3470, %v3821
        %v3823 = vpop.f32.mrb[0].mxu0
        %v3824 = vadd.f32 %v3474, %v3823
        %v3825 = vpop.f32.mrb[0].mxu0
        %v3826 = vadd.f32 %v3470, %v3825
        %v3827 = vpop.f32.mrb[0].mxu0
        %v3828 = vadd.f32 %v3474, %v3827
        %3829 = vmatprep.mubr.bf16.mxu0 %v3402
        %3830 = vmatmul.mubr.bf16.gmra.mrb[0].mxu0 %v3401
        %v3831 = vpop.f32.mrb[0].mxu0
        %v3832 = vadd.f32 %v3470, %v3831
        %v3833 = vpop.f32.mrb[0].mxu0
        %v3834 = vadd.f32 %v3474, %v3833
        %v3835 = vpop.f32.mrb[0].mxu0
        %v3836 = vadd.f32 %v3470, %v3835
        %v3837 = vpop.f32.mrb[0].mxu0
        %v3838 = vadd.f32 %v3474, %v3837
        %3839 = vmatprep.mubr.bf16.mxu0 %v3404
        %3840 = vmatmul.mubr.bf16.gmra.mrb[0].mxu0 %v3403
        %v3841 = vpop.f32.mrb[0].mxu0
        %v3842 = vadd.f32 %v3470, %v3841
        %v3843 = vpop.f32.mrb[0].mxu0
        %v3844 = vadd.f32 %v3474, %v3843
        %v3845 = vpop.f32.mrb[0].mxu0
        %v3846 = vadd.f32 %v3470, %v3845
        %v3847 = vpop.f32.mrb[0].mxu0
        %v3848 = vadd.f32 %v3474, %v3847
        %3849 = vmatprep.mubr.bf16.mxu0 %v3406
        %3850 = vmatmul.mubr.bf16.gmra.mrb[0].mxu0 %v3405
        %v3851 = vpop.f32.mrb[0].mxu0
        %v3852 = vadd.f32 %v3470, %v3851
        %v3853 = vpop.f32.mrb[0].mxu0
        %v3854 = vadd.f32 %v3474, %v3853
        %v3855 = vpop.f32.mrb[0].mxu0
        %v3856 = vadd.f32 %v3470, %v3855
        %v3857 = vpop.f32.mrb[0].mxu0
        %v3858 = vadd.f32 %v3474, %v3857
        %3859 = vmatprep.mubr.bf16.mxu0 %v3408
        %3860 = vmatmul.mubr.bf16.gmra.mrb[0].mxu0 %v3407
        %v3861 = vpop.f32.mrb[0].mxu0
        %v3862 = vadd.f32 %v3470, %v3861
        %v3863 = vpop.f32.mrb[0].mxu0
        %v3864 = vadd.f32 %v3474, %v3863
        %v3865 = vpop.f32.mrb[0].mxu0
        %v3866 = vadd.f32 %v3470, %v3865
        %v3867 = vpop.f32.mrb[0].mxu0
        %v3868 = vadd.f32 %v3474, %v3867
        %3869 = vmatprep.mubr.bf16.mxu0 %v3410
        %3870 = vmatmul.mubr.bf16.gmra.mrb[0].mxu0 %v3409
        %v3871 = vpop.f32.mrb[0].mxu0
        %v3872 = vadd.f32 %v3470, %v3871
        %v3873 = vpop.f32.mrb[0].mxu0
        %v3874 = vadd.f32 %v3474, %v3873
        %v3875 = vpop.f32.mrb[0].mxu0
        %v3876 = vadd.f32 %v3470, %v3875
        %v3877 = vpop.f32.mrb[0].mxu0
        %v3878 = vadd.f32 %v3474, %v3877
        %3879 = vmatprep.mubr.bf16.mxu0 %v3412
        %3880 = vmatmul.mubr.bf16.gmra.mrb[0].mxu0 %v3411
        %v3881 = vpop.f32.mrb[0].mxu0
        %v3882 = vadd.f32 %v3470, %v3881
        %v3883 = vpop.f32.mrb[0].mxu0
        %v3884 = vadd.f32 %v3474, %v3883
        %v3885 = vpop.f32.mrb[0].mxu0
        %v3886 = vadd.f32 %v3470, %v3885
        %v3887 = vpop.f32.mrb[0].mxu0
        %v3888 = vadd.f32 %v3474, %v3887
        %3889 = vmatprep.mubr.bf16.mxu0 %v3414
        %3890 = vmatmul.mubr.bf16.gmra.mrb[0].mxu0 %v3413
        %v3891 = vpop.f32.mrb[0].mxu0
        %v3892 = vadd.f32 %v3470, %v3891
        %v3893 = vpop.f32.mrb[0].mxu0
        %v3894 = vadd.f32 %v3474, %v3893
        %v3895 = vpop.f32.mrb[0].mxu0
        %v3896 = vadd.f32 %v3470, %v3895
        %v3897 = vpop.f32.mrb[0].mxu0
        %v3898 = vadd.f32 %v3474, %v3897
        %3899 = vmatprep.mubr.bf16.mxu0 %v3416
        %3900 = vmatmul.mubr.bf16.gmra.mrb[0].mxu0 %v3415
        %v3901 = vpop.f32.mrb[0].mxu0
        %v3902 = vadd.f32 %v3470, %v3901
        %v3903 = vpop.f32.mrb[0].mxu0
        %v3904 = vadd.f32 %v3474, %v3903
        %v3905 = vpop.f32.mrb[0].mxu0
        %v3906 = vadd.f32 %v3470, %v3905
        %v3907 = vpop.f32.mrb[0].mxu0
        %v3908 = vadd.f32 %v3474, %v3907
        %3909 = vmatprep.mubr.bf16.mxu0 %v3418
        %3910 = vmatmul.mubr.bf16.gmra.mrb[0].mxu0 %v3417
        %v3911 = vpop.f32.mrb[0].mxu0
        %v3912 = vadd.f32 %v3470, %v3911
        %v3913 = vpop.f32.mrb[0].mxu0
        %v3914 = vadd.f32 %v3474, %v3913
        %v3915 = vpop.f32.mrb[0].mxu0
        %v3916 = vadd.f32 %v3470, %v3915
        %v3917 = vpop.f32.mrb[0].mxu0
        %v3918 = vadd.f32 %v3474, %v3917
        %3919 = vmatprep.mubr.bf16.mxu0 %v3420
        %3920 = vmatmul.mubr.bf16.gmra.mrb[0].mxu0 %v3419
        %v3921 = vpop.f32.mrb[0].mxu0
        %v3922 = vadd.f32 %v3470, %v3921
        %v3923 = vpop.f32.mrb[0].mxu0
        %v3924 = vadd.f32 %v3474, %v3923
        %v3925 = vpop.f32.mrb[0].mxu0
        %v3926 = vadd.f32 %v3470, %v3925
        %v3927 = vpop.f32.mrb[0].mxu0
        %v3928 = vadd.f32 %v3474, %v3927
        %3929 = vmatprep.mubr.bf16.mxu0 %v3422
        %3930 = vmatmul.mubr.bf16.gmra.mrb[0].mxu0 %v3421
        %v3931 = vpop.f32.mrb[0].mxu0
        %v3932 = vadd.f32 %v3470, %v3931
        %v3933 = vpop.f32.mrb[0].mxu0
        %v3934 = vadd.f32 %v3474, %v3933
        %v3935 = vpop.f32.mrb[0].mxu0
        %v3936 = vadd.f32 %v3470, %v3935
        %v3937 = vpop.f32.mrb[0].mxu0
        %v3938 = vadd.f32 %v3474, %v3937
        %3939 = vmatprep.mubr.bf16.mxu0 %v3424
        %3940 = vmatmul.mubr.bf16.gmra.mrb[0].mxu0 %v3423
        %v3941 = vpop.f32.mrb[0].mxu0
        %v3942 = vadd.f32 %v3470, %v3941
        %v3943 = vpop.f32.mrb[0].mxu0
        %v3944 = vadd.f32 %v3474, %v3943
        %v3945 = vpop.f32.mrb[0].mxu0
        %v3946 = vadd.f32 %v3470, %v3945
        %v3947 = vpop.f32.mrb[0].mxu0
        %v3948 = vadd.f32 %v3474, %v3947
        %3949 = vmatprep.mubr.bf16.mxu0 %v3426
        %3950 = vmatmul.mubr.bf16.gmra.mrb[0].mxu0 %v3425
        %v3951 = vpop.f32.mrb[0].mxu0
        %v3952 = vadd.f32 %v3470, %v3951
        %v3953 = vpop.f32.mrb[0].mxu0
        %v3954 = vadd.f32 %v3474, %v3953
        %v3955 = vpop.f32.mrb[0].mxu0
        %v3956 = vadd.f32 %v3470, %v3955
        %v3957 = vpop.f32.mrb[0].mxu0
        %v3958 = vadd.f32 %v3474, %v3957
        %3959 = vmatprep.mubr.bf16.mxu0 %v3428
        %3960 = vmatmul.mubr.bf16.gmra.mrb[0].mxu0 %v3427
        %v3961 = vpop.f32.mrb[0].mxu0
        %v3962 = vadd.f32 %v3470, %v3961
        %v3963 = vpop.f32.mrb[0].mxu0
        %v3964 = vadd.f32 %v3474, %v3963
        %v3965 = vpop.f32.mrb[0].mxu0
        %v3966 = vadd.f32 %v3470, %v3965
        %v3967 = vpop.f32.mrb[0].mxu0
        %v3968 = vadd.f32 %v3474, %v3967
        %3969 = vmatprep.mubr.bf16.mxu0 %v3430
        %3970 = vmatmul.mubr.bf16.gmra.mrb[0].mxu0 %v3429
        %v3971 = vpop.f32.mrb[0].mxu0
        %v3972 = vadd.f32 %v3470, %v3971
        %v3973 = vpop.f32.mrb[0].mxu0
        %v3974 = vadd.f32 %v3474, %v3973
        %v3975 = vpop.f32.mrb[0].mxu0
        %v3976 = vadd.f32 %v3470, %v3975
        %v3977 = vpop.f32.mrb[0].mxu0
        %v3978 = vadd.f32 %v3474, %v3977
        %3979 = vmatprep.mubr.bf16.mxu0 %v3432
        %3980 = vmatmul.mubr.bf16.gmra.mrb[0].mxu0 %v3431
        %v3981 = vpop.f32.mrb[0].mxu0
        %v3982 = vadd.f32 %v3470, %v3981
        %v3983 = vpop.f32.mrb[0].mxu0
        %v3984 = vadd.f32 %v3474, %v3983
        %v3985 = vpop.f32.mrb[0].mxu0
        %v3986 = vadd.f32 %v3470, %v3985
        %v3987 = vpop.f32.mrb[0].mxu0
        %v3988 = vadd.f32 %v3474, %v3987
        %3989 = vdwg.mxu0
        %v3990 = vxor.u32 %v3672, 2147483648
        %v3991 = vxor.u32 %v3674, 2147483648
        %v3992 = vxor.u32 %v3676, 2147483648
        %v3993 = vxor.u32 %v3678, 2147483648
        %v3994 = vxor.u32 %v3682, 2147483648
        %v3995 = vxor.u32 %v3684, 2147483648
        %v3996 = vxor.u32 %v3686, 2147483648
        %v3997 = vxor.u32 %v3688, 2147483648
        %v3998 = vxor.u32 %v3692, 2147483648
        %v3999 = vxor.u32 %v3694, 2147483648
        %v4000 = vxor.u32 %v3696, 2147483648
        %v4001 = vxor.u32 %v3698, 2147483648
        %v4002 = vxor.u32 %v3702, 2147483648
        %v4003 = vxor.u32 %v3704, 2147483648
        %v4004 = vxor.u32 %v3706, 2147483648
        %v4005 = vxor.u32 %v3708, 2147483648
        %v4006 = vxor.u32 %v3712, 2147483648
        %v4007 = vxor.u32 %v3714, 2147483648
        %v4008 = vxor.u32 %v3716, 2147483648
        %v4009 = vxor.u32 %v3718, 2147483648
        %v4010 = vxor.u32 %v3722, 2147483648
        %v4011 = vxor.u32 %v3724, 2147483648
        %v4012 = vxor.u32 %v3726, 2147483648
        %v4013 = vxor.u32 %v3728, 2147483648
        %v4014 = vxor.u32 %v3732, 2147483648
        %v4015 = vxor.u32 %v3734, 2147483648
        %v4016 = vxor.u32 %v3736, 2147483648
        %v4017 = vxor.u32 %v3738, 2147483648
        %v4018 = vxor.u32 %v3742, 2147483648
        %v4019 = vxor.u32 %v3744, 2147483648
        %v4020 = vxor.u32 %v3746, 2147483648
        %v4021 = vxor.u32 %v3748, 2147483648
        %v4022 = vxor.u32 %v3752, 2147483648
        %v4023 = vxor.u32 %v3754, 2147483648
        %v4024 = vxor.u32 %v3756, 2147483648
        %v4025 = vxor.u32 %v3758, 2147483648
        %v4026 = vxor.u32 %v3762, 2147483648
        %v4027 = vxor.u32 %v3764, 2147483648
        %v4028 = vxor.u32 %v3766, 2147483648
        %v4029 = vxor.u32 %v3768, 2147483648
        %v4030 = vxor.u32 %v3772, 2147483648
        %v4031 = vxor.u32 %v3774, 2147483648
        %v4032 = vxor.u32 %v3776, 2147483648
        %v4033 = vxor.u32 %v3778, 2147483648
        %v4034 = vxor.u32 %v3782, 2147483648
        %v4035 = vxor.u32 %v3784, 2147483648
        %v4036 = vxor.u32 %v3786, 2147483648
        %v4037 = vxor.u32 %v3788, 2147483648
        %v4038 = vxor.u32 %v3792, 2147483648
        %v4039 = vxor.u32 %v3794, 2147483648
        %v4040 = vxor.u32 %v3796, 2147483648
        %v4041 = vxor.u32 %v3798, 2147483648
        %v4042 = vxor.u32 %v3802, 2147483648
        %v4043 = vxor.u32 %v3804, 2147483648
        %v4044 = vxor.u32 %v3806, 2147483648
        %v4045 = vxor.u32 %v3808, 2147483648
        %v4046 = vxor.u32 %v3812, 2147483648
        %v4047 = vxor.u32 %v3814, 2147483648
        %v4048 = vxor.u32 %v3816, 2147483648
        %v4049 = vxor.u32 %v3818, 2147483648
        %v4050 = vxor.u32 %v3822, 2147483648
        %v4051 = vxor.u32 %v3824, 2147483648
        %v4052 = vxor.u32 %v3826, 2147483648
        %v4053 = vxor.u32 %v3828, 2147483648
        %v4054 = vxor.u32 %v3832, 2147483648
        %v4055 = vxor.u32 %v3834, 2147483648
        %v4056 = vxor.u32 %v3836, 2147483648
        %v4057 = vxor.u32 %v3838, 2147483648
        %v4058 = vxor.u32 %v3842, 2147483648
        %v4059 = vxor.u32 %v3844, 2147483648
        %v4060 = vxor.u32 %v3846, 2147483648
        %v4061 = vxor.u32 %v3848, 2147483648
        %v4062 = vxor.u32 %v3852, 2147483648
        %v4063 = vxor.u32 %v3854, 2147483648
        %v4064 = vxor.u32 %v3856, 2147483648
        %v4065 = vxor.u32 %v3858, 2147483648
        %v4066 = vxor.u32 %v3862, 2147483648
        %v4067 = vxor.u32 %v3864, 2147483648
        %v4068 = vxor.u32 %v3866, 2147483648
        %v4069 = vxor.u32 %v3868, 2147483648
        %v4070 = vxor.u32 %v3872, 2147483648
        %v4071 = vxor.u32 %v3874, 2147483648
        %v4072 = vxor.u32 %v3876, 2147483648
        %v4073 = vxor.u32 %v3878, 2147483648
        %v4074 = vxor.u32 %v3882, 2147483648
        %v4075 = vxor.u32 %v3884, 2147483648
        %v4076 = vxor.u32 %v3886, 2147483648
        %v4077 = vxor.u32 %v3888, 2147483648
        %v4078 = vxor.u32 %v3892, 2147483648
        %v4079 = vxor.u32 %v3894, 2147483648
        %v4080 = vxor.u32 %v3896, 2147483648
        %v4081 = vxor.u32 %v3898, 2147483648
        %v4082 = vxor.u32 %v3902, 2147483648
        %v4083 = vxor.u32 %v3904, 2147483648
        %v4084 = vxor.u32 %v3906, 2147483648
        %v4085 = vxor.u32 %v3908, 2147483648
        %v4086 = vxor.u32 %v3912, 2147483648
        %v4087 = vxor.u32 %v3914, 2147483648
        %v4088 = vxor.u32 %v3916, 2147483648
        %v4089 = vxor.u32 %v3918, 2147483648
        %v4090 = vxor.u32 %v3922, 2147483648
        %v4091 = vxor.u32 %v3924, 2147483648
        %v4092 = vxor.u32 %v3926, 2147483648
        %v4093 = vxor.u32 %v3928, 2147483648
        %v4094 = vxor.u32 %v3932, 2147483648
        %v4095 = vxor.u32 %v3934, 2147483648
        %v4096 = vxor.u32 %v3936, 2147483648
        %v4097 = vxor.u32 %v3938, 2147483648
        %v4098 = vxor.u32 %v3942, 2147483648
        %v4099 = vxor.u32 %v3944, 2147483648
        %v4100 = vxor.u32 %v3946, 2147483648
        %v4101 = vxor.u32 %v3948, 2147483648
        %v4102 = vxor.u32 %v3952, 2147483648
        %v4103 = vxor.u32 %v3954, 2147483648
        %v4104 = vxor.u32 %v3956, 2147483648
        %v4105 = vxor.u32 %v3958, 2147483648
        %v4106 = vxor.u32 %v3962, 2147483648
        %v4107 = vxor.u32 %v3964, 2147483648
        %v4108 = vxor.u32 %v3966, 2147483648
        %v4109 = vxor.u32 %v3968, 2147483648
        %v4110 = vxor.u32 %v3972, 2147483648
        %v4111 = vxor.u32 %v3974, 2147483648
        %v4112 = vxor.u32 %v3976, 2147483648
        %v4113 = vxor.u32 %v3978, 2147483648
        %v4114 = vxor.u32 %v3982, 2147483648
        %v4115 = vxor.u32 %v3984, 2147483648
        %v4116 = vxor.u32 %v3986, 2147483648
        %v4117 = vxor.u32 %v3988, 2147483648
        %v4118 = vmul.f32 %v3990, 1.442695
        %v4119 = vpow.pop %v4118
        %v4120 = vmul.f32 %v3991, 1.442695
        %v4121 = vpow.pop %v4120
        %v4122 = vmul.f32 %v3992, 1.442695
        %v4123 = vpow.pop %v4122
        %v4124 = vmul.f32 %v3993, 1.442695
        %v4125 = vpow.pop %v4124
        %v4126 = vmul.f32 %v3994, 1.442695
        %v4127 = vpow.pop %v4126
        %v4128 = vmul.f32 %v3995, 1.442695
        %v4129 = vpow.pop %v4128
        %v4130 = vmul.f32 %v3996, 1.442695
        %v4131 = vpow.pop %v4130
        %v4132 = vmul.f32 %v3997, 1.442695
        %v4133 = vpow.pop %v4132
        %v4134 = vmul.f32 %v3998, 1.442695
        %v4135 = vpow.pop %v4134
        %v4136 = vmul.f32 %v3999, 1.442695
        %v4137 = vpow.pop %v4136
        %v4138 = vmul.f32 %v4000, 1.442695
        %v4139 = vpow.pop %v4138
        %v4140 = vmul.f32 %v4001, 1.442695
        %v4141 = vpow.pop %v4140
        %v4142 = vmul.f32 %v4002, 1.442695
        %v4143 = vpow.pop %v4142
        %v4144 = vmul.f32 %v4003, 1.442695
        %v4145 = vpow.pop %v4144
        %v4146 = vmul.f32 %v4004, 1.442695
        %v4147 = vpow.pop %v4146
        %v4148 = vmul.f32 %v4005, 1.442695
        %v4149 = vpow.pop %v4148
        %v4150 = vmul.f32 %v4006, 1.442695
        %v4151 = vpow.pop %v4150
        %v4152 = vmul.f32 %v4007, 1.442695
        %v4153 = vpow.pop %v4152
        %v4154 = vmul.f32 %v4008, 1.442695
        %v4155 = vpow.pop %v4154
        %v4156 = vmul.f32 %v4009, 1.442695
        %v4157 = vpow.pop %v4156
        %v4158 = vmul.f32 %v4010, 1.442695
        %v4159 = vpow.pop %v4158
        %v4160 = vmul.f32 %v4011, 1.442695
        %v4161 = vpow.pop %v4160
        %v4162 = vmul.f32 %v4012, 1.442695
        %v4163 = vpow.pop %v4162
        %v4164 = vmul.f32 %v4013, 1.442695
        %v4165 = vpow.pop %v4164
        %v4166 = vmul.f32 %v4014, 1.442695
        %v4167 = vpow.pop %v4166
        %v4168 = vmul.f32 %v4015, 1.442695
        %v4169 = vpow.pop %v4168
        %v4170 = vmul.f32 %v4016, 1.442695
        %v4171 = vpow.pop %v4170
        %v4172 = vmul.f32 %v4017, 1.442695
        %v4173 = vpow.pop %v4172
        %v4174 = vmul.f32 %v4018, 1.442695
        %v4175 = vpow.pop %v4174
        %v4176 = vmul.f32 %v4019, 1.442695
        %v4177 = vpow.pop %v4176
        %v4178 = vmul.f32 %v4020, 1.442695
        %v4179 = vpow.pop %v4178
        %v4180 = vmul.f32 %v4021, 1.442695
        %v4181 = vpow.pop %v4180
        %v4182 = vmul.f32 %v4022, 1.442695
        %v4183 = vpow.pop %v4182
        %v4184 = vmul.f32 %v4023, 1.442695
        %v4185 = vpow.pop %v4184
        %v4186 = vmul.f32 %v4024, 1.442695
        %v4187 = vpow.pop %v4186
        %v4188 = vmul.f32 %v4025, 1.442695
        %v4189 = vpow.pop %v4188
        %v4190 = vmul.f32 %v4026, 1.442695
        %v4191 = vpow.pop %v4190
        %v4192 = vmul.f32 %v4027, 1.442695
        %v4193 = vpow.pop %v4192
        %v4194 = vmul.f32 %v4028, 1.442695
        %v4195 = vpow.pop %v4194
        %v4196 = vmul.f32 %v4029, 1.442695
        %v4197 = vpow.pop %v4196
        %v4198 = vmul.f32 %v4030, 1.442695
        %v4199 = vpow.pop %v4198
        %v4200 = vmul.f32 %v4031, 1.442695
        %v4201 = vpow.pop %v4200
        %v4202 = vmul.f32 %v4032, 1.442695
        %v4203 = vpow.pop %v4202
        %v4204 = vmul.f32 %v4033, 1.442695
        %v4205 = vpow.pop %v4204
        %v4206 = vmul.f32 %v4034, 1.442695
        %v4207 = vpow.pop %v4206
        %v4208 = vmul.f32 %v4035, 1.442695
        %v4209 = vpow.pop %v4208
        %v4210 = vmul.f32 %v4036, 1.442695
        %v4211 = vpow.pop %v4210
        %v4212 = vmul.f32 %v4037, 1.442695
        %v4213 = vpow.pop %v4212
        %v4214 = vmul.f32 %v4038, 1.442695
        %v4215 = vpow.pop %v4214
        %v4216 = vmul.f32 %v4039, 1.442695
        %v4217 = vpow.pop %v4216
        %v4218 = vmul.f32 %v4040, 1.442695
        %v4219 = vpow.pop %v4218
        %v4220 = vmul.f32 %v4041, 1.442695
        %v4221 = vpow.pop %v4220
        %v4222 = vmul.f32 %v4042, 1.442695
        %v4223 = vpow.pop %v4222
        %v4224 = vmul.f32 %v4043, 1.442695
        %v4225 = vpow.pop %v4224
        %v4226 = vmul.f32 %v4044, 1.442695
        %v4227 = vpow.pop %v4226
        %v4228 = vmul.f32 %v4045, 1.442695
        %v4229 = vpow.pop %v4228
        %v4230 = vmul.f32 %v4046, 1.442695
        %v4231 = vpow.pop %v4230
        %v4232 = vmul.f32 %v4047, 1.442695
        %v4233 = vpow.pop %v4232
        %v4234 = vmul.f32 %v4048, 1.442695
        %v4235 = vpow.pop %v4234
        %v4236 = vmul.f32 %v4049, 1.442695
        %v4237 = vpow.pop %v4236
        %v4238 = vmul.f32 %v4050, 1.442695
        %v4239 = vpow.pop %v4238
        %v4240 = vmul.f32 %v4051, 1.442695
        %v4241 = vpow.pop %v4240
        %v4242 = vmul.f32 %v4052, 1.442695
        %v4243 = vpow.pop %v4242
        %v4244 = vmul.f32 %v4053, 1.442695
        %v4245 = vpow.pop %v4244
        %v4246 = vmul.f32 %v4054, 1.442695
        %v4247 = vpow.pop %v4246
        %v4248 = vmul.f32 %v4055, 1.442695
        %v4249 = vpow.pop %v4248
        %v4250 = vmul.f32 %v4056, 1.442695
        %v4251 = vpow.pop %v4250
        %v4252 = vmul.f32 %v4057, 1.442695
        %v4253 = vpow.pop %v4252
        %v4254 = vmul.f32 %v4058, 1.442695
        %v4255 = vpow.pop %v4254
        %v4256 = vmul.f32 %v4059, 1.442695
        %v4257 = vpow.pop %v4256
        %v4258 = vmul.f32 %v4060, 1.442695
        %v4259 = vpow.pop %v4258
        %v4260 = vmul.f32 %v4061, 1.442695
        %v4261 = vpow.pop %v4260
        %v4262 = vmul.f32 %v4062, 1.442695
        %v4263 = vpow.pop %v4262
        %v4264 = vmul.f32 %v4063, 1.442695
        %v4265 = vpow.pop %v4264
        %v4266 = vmul.f32 %v4064, 1.442695
        %v4267 = vpow.pop %v4266
        %v4268 = vmul.f32 %v4065, 1.442695
        %v4269 = vpow.pop %v4268
        %v4270 = vmul.f32 %v4066, 1.442695
        %v4271 = vpow.pop %v4270
        %v4272 = vmul.f32 %v4067, 1.442695
        %v4273 = vpow.pop %v4272
        %v4274 = vmul.f32 %v4068, 1.442695
        %v4275 = vpow.pop %v4274
        %v4276 = vmul.f32 %v4069, 1.442695
        %v4277 = vpow.pop %v4276
        %v4278 = vmul.f32 %v4070, 1.442695
        %v4279 = vpow.pop %v4278
        %v4280 = vmul.f32 %v4071, 1.442695
        %v4281 = vpow.pop %v4280
        %v4282 = vmul.f32 %v4072, 1.442695
        %v4283 = vpow.pop %v4282
        %v4284 = vmul.f32 %v4073, 1.442695
        %v4285 = vpow.pop %v4284
        %v4286 = vmul.f32 %v4074, 1.442695
        %v4287 = vpow.pop %v4286
        %v4288 = vmul.f32 %v4075, 1.442695
        %v4289 = vpow.pop %v4288
        %v4290 = vmul.f32 %v4076, 1.442695
        %v4291 = vpow.pop %v4290
        %v4292 = vmul.f32 %v4077, 1.442695
        %v4293 = vpow.pop %v4292
        %v4294 = vmul.f32 %v4078, 1.442695
        %v4295 = vpow.pop %v4294
        %v4296 = vmul.f32 %v4079, 1.442695
        %v4297 = vpow.pop %v4296
        %v4298 = vmul.f32 %v4080, 1.442695
        %v4299 = vpow.pop %v4298
        %v4300 = vmul.f32 %v4081, 1.442695
        %v4301 = vpow.pop %v4300
        %v4302 = vmul.f32 %v4082, 1.442695
        %v4303 = vpow.pop %v4302
        %v4304 = vmul.f32 %v4083, 1.442695
        %v4305 = vpow.pop %v4304
        %v4306 = vmul.f32 %v4084, 1.442695
        %v4307 = vpow.pop %v4306
        %v4308 = vmul.f32 %v4085, 1.442695
        %v4309 = vpow.pop %v4308
        %v4310 = vmul.f32 %v4086, 1.442695
        %v4311 = vpow.pop %v4310
        %v4312 = vmul.f32 %v4087, 1.442695
        %v4313 = vpow.pop %v4312
        %v4314 = vmul.f32 %v4088, 1.442695
        %v4315 = vpow.pop %v4314
        %v4316 = vmul.f32 %v4089, 1.442695
        %v4317 = vpow.pop %v4316
        %v4318 = vmul.f32 %v4090, 1.442695
        %v4319 = vpow.pop %v4318
        %v4320 = vmul.f32 %v4091, 1.442695
        %v4321 = vpow.pop %v4320
        %v4322 = vmul.f32 %v4092, 1.442695
        %v4323 = vpow.pop %v4322
        %v4324 = vmul.f32 %v4093, 1.442695
        %v4325 = vpow.pop %v4324
        %v4326 = vmul.f32 %v4094, 1.442695
        %v4327 = vpow.pop %v4326
        %v4328 = vmul.f32 %v4095, 1.442695
        %v4329 = vpow.pop %v4328
        %v4330 = vmul.f32 %v4096, 1.442695
        %v4331 = vpow.pop %v4330
        %v4332 = vmul.f32 %v4097, 1.442695
        %v4333 = vpow.pop %v4332
        %v4334 = vmul.f32 %v4098, 1.442695
        %v4335 = vpow.pop %v4334
        %v4336 = vmul.f32 %v4099, 1.442695
        %v4337 = vpow.pop %v4336
        %v4338 = vmul.f32 %v4100, 1.442695
        %v4339 = vpow.pop %v4338
        %v4340 = vmul.f32 %v4101, 1.442695
        %v4341 = vpow.pop %v4340
        %v4342 = vmul.f32 %v4102, 1.442695
        %v4343 = vpow.pop %v4342
        %v4344 = vmul.f32 %v4103, 1.442695
        %v4345 = vpow.pop %v4344
        %v4346 = vmul.f32 %v4104, 1.442695
        %v4347 = vpow.pop %v4346
        %v4348 = vmul.f32 %v4105, 1.442695
        %v4349 = vpow.pop %v4348
        %v4350 = vmul.f32 %v4106, 1.442695
        %v4351 = vpow.pop %v4350
        %v4352 = vmul.f32 %v4107, 1.442695
        %v4353 = vpow.pop %v4352
        %v4354 = vmul.f32 %v4108, 1.442695
        %v4355 = vpow.pop %v4354
        %v4356 = vmul.f32 %v4109, 1.442695
        %v4357 = vpow.pop %v4356
        %v4358 = vmul.f32 %v4110, 1.442695
        %v4359 = vpow.pop %v4358
        %v4360 = vmul.f32 %v4111, 1.442695
        %v4361 = vpow.pop %v4360
        %v4362 = vmul.f32 %v4112, 1.442695
        %v4363 = vpow.pop %v4362
        %v4364 = vmul.f32 %v4113, 1.442695
        %v4365 = vpow.pop %v4364
        %v4366 = vmul.f32 %v4114, 1.442695
        %v4367 = vpow.pop %v4366
        %v4368 = vmul.f32 %v4115, 1.442695
        %v4369 = vpow.pop %v4368
        %v4370 = vmul.f32 %v4116, 1.442695
        %v4371 = vpow.pop %v4370
        %v4372 = vmul.f32 %v4117, 1.442695
        %v4373 = vpow.pop %v4372
        %v4374 = vadd.f32 %v4119, 1.0
        %v4375 = vadd.f32 %v4121, 1.0
        %v4376 = vadd.f32 %v4123, 1.0
        %v4377 = vadd.f32 %v4125, 1.0
        %v4378 = vadd.f32 %v4127, 1.0
        %v4379 = vadd.f32 %v4129, 1.0
        %v4380 = vadd.f32 %v4131, 1.0
        %v4381 = vadd.f32 %v4133, 1.0
        %v4382 = vadd.f32 %v4135, 1.0
        %v4383 = vadd.f32 %v4137, 1.0
        %v4384 = vadd.f32 %v4139, 1.0
        %v4385 = vadd.f32 %v4141, 1.0
        %v4386 = vadd.f32 %v4143, 1.0
        %v4387 = vadd.f32 %v4145, 1.0
        %v4388 = vadd.f32 %v4147, 1.0
        %v4389 = vadd.f32 %v4149, 1.0
        %v4390 = vadd.f32 %v4151, 1.0
        %v4391 = vadd.f32 %v4153, 1.0
        %v4392 = vadd.f32 %v4155, 1.0
        %v4393 = vadd.f32 %v4157, 1.0
        %v4394 = vadd.f32 %v4159, 1.0
        %v4395 = vadd.f32 %v4161, 1.0
        %v4396 = vadd.f32 %v4163, 1.0
        %v4397 = vadd.f32 %v4165, 1.0
        %v4398 = vadd.f32 %v4167, 1.0
        %v4399 = vadd.f32 %v4169, 1.0
        %v4400 = vadd.f32 %v4171, 1.0
        %v4401 = vadd.f32 %v4173, 1.0
        %v4402 = vadd.f32 %v4175, 1.0
        %v4403 = vadd.f32 %v4177, 1.0
        %v4404 = vadd.f32 %v4179, 1.0
        %v4405 = vadd.f32 %v4181, 1.0
        %v4406 = vadd.f32 %v4183, 1.0
        %v4407 = vadd.f32 %v4185, 1.0
        %v4408 = vadd.f32 %v4187, 1.0
        %v4409 = vadd.f32 %v4189, 1.0
        %v4410 = vadd.f32 %v4191, 1.0
        %v4411 = vadd.f32 %v4193, 1.0
        %v4412 = vadd.f32 %v4195, 1.0
        %v4413 = vadd.f32 %v4197, 1.0
        %v4414 = vadd.f32 %v4199, 1.0
        %v4415 = vadd.f32 %v4201, 1.0
        %v4416 = vadd.f32 %v4203, 1.0
        %v4417 = vadd.f32 %v4205, 1.0
        %v4418 = vadd.f32 %v4207, 1.0
        %v4419 = vadd.f32 %v4209, 1.0
        %v4420 = vadd.f32 %v4211, 1.0
        %v4421 = vadd.f32 %v4213, 1.0
        %v4422 = vadd.f32 %v4215, 1.0
        %v4423 = vadd.f32 %v4217, 1.0
        %v4424 = vadd.f32 %v4219, 1.0
        %v4425 = vadd.f32 %v4221, 1.0
        %v4426 = vadd.f32 %v4223, 1.0
        %v4427 = vadd.f32 %v4225, 1.0
        %v4428 = vadd.f32 %v4227, 1.0
        %v4429 = vadd.f32 %v4229, 1.0
        %v4430 = vadd.f32 %v4231, 1.0
        %v4431 = vadd.f32 %v4233, 1.0
        %v4432 = vadd.f32 %v4235, 1.0
        %v4433 = vadd.f32 %v4237, 1.0
        %v4434 = vadd.f32 %v4239, 1.0
        %v4435 = vadd.f32 %v4241, 1.0
        %v4436 = vadd.f32 %v4243, 1.0
        %v4437 = vadd.f32 %v4245, 1.0
        %v4438 = vadd.f32 %v4247, 1.0
        %v4439 = vadd.f32 %v4249, 1.0
        %v4440 = vadd.f32 %v4251, 1.0
        %v4441 = vadd.f32 %v4253, 1.0
        %v4442 = vadd.f32 %v4255, 1.0
        %v4443 = vadd.f32 %v4257, 1.0
        %v4444 = vadd.f32 %v4259, 1.0
        %v4445 = vadd.f32 %v4261, 1.0
        %v4446 = vadd.f32 %v4263, 1.0
        %v4447 = vadd.f32 %v4265, 1.0
        %v4448 = vadd.f32 %v4267, 1.0
        %v4449 = vadd.f32 %v4269, 1.0
        %v4450 = vadd.f32 %v4271, 1.0
        %v4451 = vadd.f32 %v4273, 1.0
        %v4452 = vadd.f32 %v4275, 1.0
        %v4453 = vadd.f32 %v4277, 1.0
        %v4454 = vadd.f32 %v4279, 1.0
        %v4455 = vadd.f32 %v4281, 1.0
        %v4456 = vadd.f32 %v4283, 1.0
        %v4457 = vadd.f32 %v4285, 1.0
        %v4458 = vadd.f32 %v4287, 1.0
        %v4459 = vadd.f32 %v4289, 1.0
        %v4460 = vadd.f32 %v4291, 1.0
        %v4461 = vadd.f32 %v4293, 1.0
        %v4462 = vadd.f32 %v4295, 1.0
        %v4463 = vadd.f32 %v4297, 1.0
        %v4464 = vadd.f32 %v4299, 1.0
        %v4465 = vadd.f32 %v4301, 1.0
        %v4466 = vadd.f32 %v4303, 1.0
        %v4467 = vadd.f32 %v4305, 1.0
        %v4468 = vadd.f32 %v4307, 1.0
        %v4469 = vadd.f32 %v4309, 1.0
        %v4470 = vadd.f32 %v4311, 1.0
        %v4471 = vadd.f32 %v4313, 1.0
        %v4472 = vadd.f32 %v4315, 1.0
        %v4473 = vadd.f32 %v4317, 1.0
        %v4474 = vadd.f32 %v4319, 1.0
        %v4475 = vadd.f32 %v4321, 1.0
        %v4476 = vadd.f32 %v4323, 1.0
        %v4477 = vadd.f32 %v4325, 1.0
        %v4478 = vadd.f32 %v4327, 1.0
        %v4479 = vadd.f32 %v4329, 1.0
        %v4480 = vadd.f32 %v4331, 1.0
        %v4481 = vadd.f32 %v4333, 1.0
        %v4482 = vadd.f32 %v4335, 1.0
        %v4483 = vadd.f32 %v4337, 1.0
        %v4484 = vadd.f32 %v4339, 1.0
        %v4485 = vadd.f32 %v4341, 1.0
        %v4486 = vadd.f32 %v4343, 1.0
        %v4487 = vadd.f32 %v4345, 1.0
        %v4488 = vadd.f32 %v4347, 1.0
        %v4489 = vadd.f32 %v4349, 1.0
        %v4490 = vadd.f32 %v4351, 1.0
        %v4491 = vadd.f32 %v4353, 1.0
        %v4492 = vadd.f32 %v4355, 1.0
        %v4493 = vadd.f32 %v4357, 1.0
        %v4494 = vadd.f32 %v4359, 1.0
        %v4495 = vadd.f32 %v4361, 1.0
        %v4496 = vadd.f32 %v4363, 1.0
        %v4497 = vadd.f32 %v4365, 1.0
        %v4498 = vadd.f32 %v4367, 1.0
        %v4499 = vadd.f32 %v4369, 1.0
        %v4500 = vadd.f32 %v4371, 1.0
        %v4501 = vadd.f32 %v4373, 1.0
        %v4502 = vrcp.pop %v4374
        %v4503 = vmul.f32 1.0, %v4502
        %v4504 = vrcp.pop %v4375
        %v4505 = vmul.f32 1.0, %v4504
        %v4506 = vrcp.pop %v4376
        %v4507 = vmul.f32 1.0, %v4506
        %v4508 = vrcp.pop %v4377
        %v4509 = vmul.f32 1.0, %v4508
        %v4510 = vrcp.pop %v4378
        %v4511 = vmul.f32 1.0, %v4510
        %v4512 = vrcp.pop %v4379
        %v4513 = vmul.f32 1.0, %v4512
        %v4514 = vrcp.pop %v4380
        %v4515 = vmul.f32 1.0, %v4514
        %v4516 = vrcp.pop %v4381
        %v4517 = vmul.f32 1.0, %v4516
        %v4518 = vrcp.pop %v4382
        %v4519 = vmul.f32 1.0, %v4518
        %v4520 = vrcp.pop %v4383
        %v4521 = vmul.f32 1.0, %v4520
        %v4522 = vrcp.pop %v4384
        %v4523 = vmul.f32 1.0, %v4522
        %v4524 = vrcp.pop %v4385
        %v4525 = vmul.f32 1.0, %v4524
        %v4526 = vrcp.pop %v4386
        %v4527 = vmul.f32 1.0, %v4526
        %v4528 = vrcp.pop %v4387
        %v4529 = vmul.f32 1.0, %v4528
        %v4530 = vrcp.pop %v4388
        %v4531 = vmul.f32 1.0, %v4530
        %v4532 = vrcp.pop %v4389
        %v4533 = vmul.f32 1.0, %v4532
        %v4534 = vrcp.pop %v4390
        %v4535 = vmul.f32 1.0, %v4534
        %v4536 = vrcp.pop %v4391
        %v4537 = vmul.f32 1.0, %v4536
        %v4538 = vrcp.pop %v4392
        %v4539 = vmul.f32 1.0, %v4538
        %v4540 = vrcp.pop %v4393
        %v4541 = vmul.f32 1.0, %v4540
        %v4542 = vrcp.pop %v4394
        %v4543 = vmul.f32 1.0, %v4542
        %v4544 = vrcp.pop %v4395
        %v4545 = vmul.f32 1.0, %v4544
        %v4546 = vrcp.pop %v4396
        %v4547 = vmul.f32 1.0, %v4546
        %v4548 = vrcp.pop %v4397
        %v4549 = vmul.f32 1.0, %v4548
        %v4550 = vrcp.pop %v4398
        %v4551 = vmul.f32 1.0, %v4550
        %v4552 = vrcp.pop %v4399
        %v4553 = vmul.f32 1.0, %v4552
        %v4554 = vrcp.pop %v4400
        %v4555 = vmul.f32 1.0, %v4554
        %v4556 = vrcp.pop %v4401
        %v4557 = vmul.f32 1.0, %v4556
        %v4558 = vrcp.pop %v4402
        %v4559 = vmul.f32 1.0, %v4558
        %v4560 = vrcp.pop %v4403
        %v4561 = vmul.f32 1.0, %v4560
        %v4562 = vrcp.pop %v4404
        %v4563 = vmul.f32 1.0, %v4562
        %v4564 = vrcp.pop %v4405
        %v4565 = vmul.f32 1.0, %v4564
        %v4566 = vrcp.pop %v4406
        %v4567 = vmul.f32 1.0, %v4566
        %v4568 = vrcp.pop %v4407
        %v4569 = vmul.f32 1.0, %v4568
        %v4570 = vrcp.pop %v4408
        %v4571 = vmul.f32 1.0, %v4570
        %v4572 = vrcp.pop %v4409
        %v4573 = vmul.f32 1.0, %v4572
        %v4574 = vrcp.pop %v4410
        %v4575 = vmul.f32 1.0, %v4574
        %v4576 = vrcp.pop %v4411
        %v4577 = vmul.f32 1.0, %v4576
        %v4578 = vrcp.pop %v4412
        %v4579 = vmul.f32 1.0, %v4578
        %v4580 = vrcp.pop %v4413
        %v4581 = vmul.f32 1.0, %v4580
        %v4582 = vrcp.pop %v4414
        %v4583 = vmul.f32 1.0, %v4582
        %v4584 = vrcp.pop %v4415
        %v4585 = vmul.f32 1.0, %v4584
        %v4586 = vrcp.pop %v4416
        %v4587 = vmul.f32 1.0, %v4586
        %v4588 = vrcp.pop %v4417
        %v4589 = vmul.f32 1.0, %v4588
        %v4590 = vrcp.pop %v4418
        %v4591 = vmul.f32 1.0, %v4590
        %v4592 = vrcp.pop %v4419
        %v4593 = vmul.f32 1.0, %v4592
        %v4594 = vrcp.pop %v4420
        %v4595 = vmul.f32 1.0, %v4594
        %v4596 = vrcp.pop %v4421
        %v4597 = vmul.f32 1.0, %v4596
        %v4598 = vrcp.pop %v4422
        %v4599 = vmul.f32 1.0, %v4598
        %v4600 = vrcp.pop %v4423
        %v4601 = vmul.f32 1.0, %v4600
        %v4602 = vrcp.pop %v4424
        %v4603 = vmul.f32 1.0, %v4602
        %v4604 = vrcp.pop %v4425
        %v4605 = vmul.f32 1.0, %v4604
        %v4606 = vrcp.pop %v4426
        %v4607 = vmul.f32 1.0, %v4606
        %v4608 = vrcp.pop %v4427
        %v4609 = vmul.f32 1.0, %v4608
        %v4610 = vrcp.pop %v4428
        %v4611 = vmul.f32 1.0, %v4610
        %v4612 = vrcp.pop %v4429
        %v4613 = vmul.f32 1.0, %v4612
        %v4614 = vrcp.pop %v4430
        %v4615 = vmul.f32 1.0, %v4614
        %v4616 = vrcp.pop %v4431
        %v4617 = vmul.f32 1.0, %v4616
        %v4618 = vrcp.pop %v4432
        %v4619 = vmul.f32 1.0, %v4618
        %v4620 = vrcp.pop %v4433
        %v4621 = vmul.f32 1.0, %v4620
        %v4622 = vrcp.pop %v4434
        %v4623 = vmul.f32 1.0, %v4622
        %v4624 = vrcp.pop %v4435
        %v4625 = vmul.f32 1.0, %v4624
        %v4626 = vrcp.pop %v4436
        %v4627 = vmul.f32 1.0, %v4626
        %v4628 = vrcp.pop %v4437
        %v4629 = vmul.f32 1.0, %v4628
        %v4630 = vrcp.pop %v4438
        %v4631 = vmul.f32 1.0, %v4630
        %v4632 = vrcp.pop %v4439
        %v4633 = vmul.f32 1.0, %v4632
        %v4634 = vrcp.pop %v4440
        %v4635 = vmul.f32 1.0, %v4634
        %v4636 = vrcp.pop %v4441
        %v4637 = vmul.f32 1.0, %v4636
        %v4638 = vrcp.pop %v4442
        %v4639 = vmul.f32 1.0, %v4638
        %v4640 = vrcp.pop %v4443
        %v4641 = vmul.f32 1.0, %v4640
        %v4642 = vrcp.pop %v4444
        %v4643 = vmul.f32 1.0, %v4642
        %v4644 = vrcp.pop %v4445
        %v4645 = vmul.f32 1.0, %v4644
        %v4646 = vrcp.pop %v4446
        %v4647 = vmul.f32 1.0, %v4646
        %v4648 = vrcp.pop %v4447
        %v4649 = vmul.f32 1.0, %v4648
        %v4650 = vrcp.pop %v4448
        %v4651 = vmul.f32 1.0, %v4650
        %v4652 = vrcp.pop %v4449
        %v4653 = vmul.f32 1.0, %v4652
        %v4654 = vrcp.pop %v4450
        %v4655 = vmul.f32 1.0, %v4654
        %v4656 = vrcp.pop %v4451
        %v4657 = vmul.f32 1.0, %v4656
        %v4658 = vrcp.pop %v4452
        %v4659 = vmul.f32 1.0, %v4658
        %v4660 = vrcp.pop %v4453
        %v4661 = vmul.f32 1.0, %v4660
        %v4662 = vrcp.pop %v4454
        %v4663 = vmul.f32 1.0, %v4662
        %v4664 = vrcp.pop %v4455
        %v4665 = vmul.f32 1.0, %v4664
        %v4666 = vrcp.pop %v4456
        %v4667 = vmul.f32 1.0, %v4666
        %v4668 = vrcp.pop %v4457
        %v4669 = vmul.f32 1.0, %v4668
        %v4670 = vrcp.pop %v4458
        %v4671 = vmul.f32 1.0, %v4670
        %v4672 = vrcp.pop %v4459
        %v4673 = vmul.f32 1.0, %v4672
        %v4674 = vrcp.pop %v4460
        %v4675 = vmul.f32 1.0, %v4674
        %v4676 = vrcp.pop %v4461
        %v4677 = vmul.f32 1.0, %v4676
        %v4678 = vrcp.pop %v4462
        %v4679 = vmul.f32 1.0, %v4678
        %v4680 = vrcp.pop %v4463
        %v4681 = vmul.f32 1.0, %v4680
        %v4682 = vrcp.pop %v4464
        %v4683 = vmul.f32 1.0, %v4682
        %v4684 = vrcp.pop %v4465
        %v4685 = vmul.f32 1.0, %v4684
        %v4686 = vrcp.pop %v4466
        %v4687 = vmul.f32 1.0, %v4686
        %v4688 = vrcp.pop %v4467
        %v4689 = vmul.f32 1.0, %v4688
        %v4690 = vrcp.pop %v4468
        %v4691 = vmul.f32 1.0, %v4690
        %v4692 = vrcp.pop %v4469
        %v4693 = vmul.f32 1.0, %v4692
        %v4694 = vrcp.pop %v4470
        %v4695 = vmul.f32 1.0, %v4694
        %v4696 = vrcp.pop %v4471
        %v4697 = vmul.f32 1.0, %v4696
        %v4698 = vrcp.pop %v4472
        %v4699 = vmul.f32 1.0, %v4698
        %v4700 = vrcp.pop %v4473
        %v4701 = vmul.f32 1.0, %v4700
        %v4702 = vrcp.pop %v4474
        %v4703 = vmul.f32 1.0, %v4702
        %v4704 = vrcp.pop %v4475
        %v4705 = vmul.f32 1.0, %v4704
        %v4706 = vrcp.pop %v4476
        %v4707 = vmul.f32 1.0, %v4706
        %v4708 = vrcp.pop %v4477
        %v4709 = vmul.f32 1.0, %v4708
        %v4710 = vrcp.pop %v4478
        %v4711 = vmul.f32 1.0, %v4710
        %v4712 = vrcp.pop %v4479
        %v4713 = vmul.f32 1.0, %v4712
        %v4714 = vrcp.pop %v4480
        %v4715 = vmul.f32 1.0, %v4714
        %v4716 = vrcp.pop %v4481
        %v4717 = vmul.f32 1.0, %v4716
        %v4718 = vrcp.pop %v4482
        %v4719 = vmul.f32 1.0, %v4718
        %v4720 = vrcp.pop %v4483
        %v4721 = vmul.f32 1.0, %v4720
        %v4722 = vrcp.pop %v4484
        %v4723 = vmul.f32 1.0, %v4722
        %v4724 = vrcp.pop %v4485
        %v4725 = vmul.f32 1.0, %v4724
        %v4726 = vrcp.pop %v4486
        %v4727 = vmul.f32 1.0, %v4726
        %v4728 = vrcp.pop %v4487
        %v4729 = vmul.f32 1.0, %v4728
        %v4730 = vrcp.pop %v4488
        %v4731 = vmul.f32 1.0, %v4730
        %v4732 = vrcp.pop %v4489
        %v4733 = vmul.f32 1.0, %v4732
        %v4734 = vrcp.pop %v4490
        %v4735 = vmul.f32 1.0, %v4734
        %v4736 = vrcp.pop %v4491
        %v4737 = vmul.f32 1.0, %v4736
        %v4738 = vrcp.pop %v4492
        %v4739 = vmul.f32 1.0, %v4738
        %v4740 = vrcp.pop %v4493
        %v4741 = vmul.f32 1.0, %v4740
        %v4742 = vrcp.pop %v4494
        %v4743 = vmul.f32 1.0, %v4742
        %v4744 = vrcp.pop %v4495
        %v4745 = vmul.f32 1.0, %v4744
        %v4746 = vrcp.pop %v4496
        %v4747 = vmul.f32 1.0, %v4746
        %v4748 = vrcp.pop %v4497
        %v4749 = vmul.f32 1.0, %v4748
        %v4750 = vrcp.pop %v4498
        %v4751 = vmul.f32 1.0, %v4750
        %v4752 = vrcp.pop %v4499
        %v4753 = vmul.f32 1.0, %v4752
        %v4754 = vrcp.pop %v4500
        %v4755 = vmul.f32 1.0, %v4754
        %v4756 = vrcp.pop %v4501
        %v4757 = vmul.f32 1.0, %v4756
        %v4758 = vpack.c.bf16 %v4507, %v4503
        %v4759 = vpack.c.bf16 %v4509, %v4505
        %v4760 = vpack.c.bf16 %v4515, %v4511
        %v4761 = vpack.c.bf16 %v4517, %v4513
        %v4762 = vpack.c.bf16 %v4523, %v4519
        %v4763 = vpack.c.bf16 %v4525, %v4521
        %v4764 = vpack.c.bf16 %v4531, %v4527
        %v4765 = vpack.c.bf16 %v4533, %v4529
        %v4766 = vpack.c.bf16 %v4539, %v4535
        %v4767 = vpack.c.bf16 %v4541, %v4537
        %v4768 = vpack.c.bf16 %v4547, %v4543
        %v4769 = vpack.c.bf16 %v4549, %v4545
        %v4770 = vpack.c.bf16 %v4555, %v4551
        %v4771 = vpack.c.bf16 %v4557, %v4553
        %v4772 = vpack.c.bf16 %v4563, %v4559
        %v4773 = vpack.c.bf16 %v4565, %v4561
        %v4774 = vpack.c.bf16 %v4571, %v4567
        %v4775 = vpack.c.bf16 %v4573, %v4569
        %v4776 = vpack.c.bf16 %v4579, %v4575
        %v4777 = vpack.c.bf16 %v4581, %v4577
        %v4778 = vpack.c.bf16 %v4587, %v4583
        %v4779 = vpack.c.bf16 %v4589, %v4585
        %v4780 = vpack.c.bf16 %v4595, %v4591
        %v4781 = vpack.c.bf16 %v4597, %v4593
        %v4782 = vpack.c.bf16 %v4603, %v4599
        %v4783 = vpack.c.bf16 %v4605, %v4601
        %v4784 = vpack.c.bf16 %v4611, %v4607
        %v4785 = vpack.c.bf16 %v4613, %v4609
        %v4786 = vpack.c.bf16 %v4619, %v4615
        %v4787 = vpack.c.bf16 %v4621, %v4617
        %v4788 = vpack.c.bf16 %v4627, %v4623
        %v4789 = vpack.c.bf16 %v4629, %v4625
        %v4790 = vpack.c.bf16 %v4635, %v4631
        %v4791 = vpack.c.bf16 %v4637, %v4633
        %v4792 = vpack.c.bf16 %v4643, %v4639
        %v4793 = vpack.c.bf16 %v4645, %v4641
        %v4794 = vpack.c.bf16 %v4651, %v4647
        %v4795 = vpack.c.bf16 %v4653, %v4649
        %v4796 = vpack.c.bf16 %v4659, %v4655
        %v4797 = vpack.c.bf16 %v4661, %v4657
        %v4798 = vpack.c.bf16 %v4667, %v4663
        %v4799 = vpack.c.bf16 %v4669, %v4665
        %v4800 = vpack.c.bf16 %v4675, %v4671
        %v4801 = vpack.c.bf16 %v4677, %v4673
        %v4802 = vpack.c.bf16 %v4683, %v4679
        %v4803 = vpack.c.bf16 %v4685, %v4681
        %v4804 = vpack.c.bf16 %v4691, %v4687
        %v4805 = vpack.c.bf16 %v4693, %v4689
        %v4806 = vpack.c.bf16 %v4699, %v4695
        %v4807 = vpack.c.bf16 %v4701, %v4697
        %v4808 = vpack.c.bf16 %v4707, %v4703
        %v4809 = vpack.c.bf16 %v4709, %v4705
        %v4810 = vpack.c.bf16 %v4715, %v4711
        %v4811 = vpack.c.bf16 %v4717, %v4713
        %v4812 = vpack.c.bf16 %v4723, %v4719
        %v4813 = vpack.c.bf16 %v4725, %v4721
        %v4814 = vpack.c.bf16 %v4731, %v4727
        %v4815 = vpack.c.bf16 %v4733, %v4729
        %v4816 = vpack.c.bf16 %v4739, %v4735
        %v4817 = vpack.c.bf16 %v4741, %v4737
        %v4818 = vpack.c.bf16 %v4747, %v4743
        %v4819 = vpack.c.bf16 %v4749, %v4745
        %v4820 = vpack.c.bf16 %v4755, %v4751
        %v4821 = vpack.c.bf16 %v4757, %v4753
        %v4886 = vunpack.c.l.b16 %v4758
        %v4887 = vunpack.c.l.b16 %v4759
        %v4888 = vunpack.c.h.b16 %v4758
        %v4889 = vunpack.c.h.b16 %v4759
        %v4890 = vunpack.c.l.b16 %v4760
        %v4891 = vunpack.c.l.b16 %v4761
        %v4892 = vunpack.c.h.b16 %v4760
        %v4893 = vunpack.c.h.b16 %v4761
        %v4894 = vunpack.c.l.b16 %v4762
        %v4895 = vunpack.c.l.b16 %v4763
        %v4896 = vunpack.c.h.b16 %v4762
        %v4897 = vunpack.c.h.b16 %v4763
        %v4898 = vunpack.c.l.b16 %v4764
        %v4899 = vunpack.c.l.b16 %v4765
        %v4900 = vunpack.c.h.b16 %v4764
        %v4901 = vunpack.c.h.b16 %v4765
        %v4902 = vunpack.c.l.b16 %v4766
        %v4903 = vunpack.c.l.b16 %v4767
        %v4904 = vunpack.c.h.b16 %v4766
        %v4905 = vunpack.c.h.b16 %v4767
        %v4906 = vunpack.c.l.b16 %v4768
        %v4907 = vunpack.c.l.b16 %v4769
        %v4908 = vunpack.c.h.b16 %v4768
        %v4909 = vunpack.c.h.b16 %v4769
        %v4910 = vunpack.c.l.b16 %v4770
        %v4911 = vunpack.c.l.b16 %v4771
        %v4912 = vunpack.c.h.b16 %v4770
        %v4913 = vunpack.c.h.b16 %v4771
        %v4914 = vunpack.c.l.b16 %v4772
        %v4915 = vunpack.c.l.b16 %v4773
        %v4916 = vunpack.c.h.b16 %v4772
        %v4917 = vunpack.c.h.b16 %v4773
        %v4918 = vunpack.c.l.b16 %v4774
        %v4919 = vunpack.c.l.b16 %v4775
        %v4920 = vunpack.c.h.b16 %v4774
        %v4921 = vunpack.c.h.b16 %v4775
        %v4922 = vunpack.c.l.b16 %v4776
        %v4923 = vunpack.c.l.b16 %v4777
        %v4924 = vunpack.c.h.b16 %v4776
        %v4925 = vunpack.c.h.b16 %v4777
        %v4926 = vunpack.c.l.b16 %v4778
        %v4927 = vunpack.c.l.b16 %v4779
        %v4928 = vunpack.c.h.b16 %v4778
        %v4929 = vunpack.c.h.b16 %v4779
        %v4930 = vunpack.c.l.b16 %v4780
        %v4931 = vunpack.c.l.b16 %v4781
        %v4932 = vunpack.c.h.b16 %v4780
        %v4933 = vunpack.c.h.b16 %v4781
        %v4934 = vunpack.c.l.b16 %v4782
        %v4935 = vunpack.c.l.b16 %v4783
        %v4936 = vunpack.c.h.b16 %v4782
        %v4937 = vunpack.c.h.b16 %v4783
        %v4938 = vunpack.c.l.b16 %v4784
        %v4939 = vunpack.c.l.b16 %v4785
        %v4940 = vunpack.c.h.b16 %v4784
        %v4941 = vunpack.c.h.b16 %v4785
        %v4942 = vunpack.c.l.b16 %v4786
        %v4943 = vunpack.c.l.b16 %v4787
        %v4944 = vunpack.c.h.b16 %v4786
        %v4945 = vunpack.c.h.b16 %v4787
        %v4946 = vunpack.c.l.b16 %v4788
        %v4947 = vunpack.c.l.b16 %v4789
        %v4948 = vunpack.c.h.b16 %v4788
        %v4949 = vunpack.c.h.b16 %v4789
        %v4950 = vunpack.c.l.b16 %v4790
        %v4951 = vunpack.c.l.b16 %v4791
        %v4952 = vunpack.c.h.b16 %v4790
        %v4953 = vunpack.c.h.b16 %v4791
        %v4954 = vunpack.c.l.b16 %v4792
        %v4955 = vunpack.c.l.b16 %v4793
        %v4956 = vunpack.c.h.b16 %v4792
        %v4957 = vunpack.c.h.b16 %v4793
        %v4958 = vunpack.c.l.b16 %v4794
        %v4959 = vunpack.c.l.b16 %v4795
        %v4960 = vunpack.c.h.b16 %v4794
        %v4961 = vunpack.c.h.b16 %v4795
        %v4962 = vunpack.c.l.b16 %v4796
        %v4963 = vunpack.c.l.b16 %v4797
        %v4964 = vunpack.c.h.b16 %v4796
        %v4965 = vunpack.c.h.b16 %v4797
        %v4966 = vunpack.c.l.b16 %v4798
        %v4967 = vunpack.c.l.b16 %v4799
        %v4968 = vunpack.c.h.b16 %v4798
        %v4969 = vunpack.c.h.b16 %v4799
        %v4970 = vunpack.c.l.b16 %v4800
        %v4971 = vunpack.c.l.b16 %v4801
        %v4972 = vunpack.c.h.b16 %v4800
        %v4973 = vunpack.c.h.b16 %v4801
        %v4974 = vunpack.c.l.b16 %v4802
        %v4975 = vunpack.c.l.b16 %v4803
        %v4976 = vunpack.c.h.b16 %v4802
        %v4977 = vunpack.c.h.b16 %v4803
        %v4978 = vunpack.c.l.b16 %v4804
        %v4979 = vunpack.c.l.b16 %v4805
        %v4980 = vunpack.c.h.b16 %v4804
        %v4981 = vunpack.c.h.b16 %v4805
        %v4982 = vunpack.c.l.b16 %v4806
        %v4983 = vunpack.c.l.b16 %v4807
        %v4984 = vunpack.c.h.b16 %v4806
        %v4985 = vunpack.c.h.b16 %v4807
        %v4986 = vunpack.c.l.b16 %v4808
        %v4987 = vunpack.c.l.b16 %v4809
        %v4988 = vunpack.c.h.b16 %v4808
        %v4989 = vunpack.c.h.b16 %v4809
        %v4990 = vunpack.c.l.b16 %v4810
        %v4991 = vunpack.c.l.b16 %v4811
        %v4992 = vunpack.c.h.b16 %v4810
        %v4993 = vunpack.c.h.b16 %v4811
        %v4994 = vunpack.c.l.b16 %v4812
        %v4995 = vunpack.c.l.b16 %v4813
        %v4996 = vunpack.c.h.b16 %v4812
        %v4997 = vunpack.c.h.b16 %v4813
        %v4998 = vunpack.c.l.b16 %v4814
        %v4999 = vunpack.c.l.b16 %v4815
        %v5000 = vunpack.c.h.b16 %v4814
        %v5001 = vunpack.c.h.b16 %v4815
        %v5002 = vunpack.c.l.b16 %v4816
        %v5003 = vunpack.c.l.b16 %v4817
        %v5004 = vunpack.c.h.b16 %v4816
        %v5005 = vunpack.c.h.b16 %v4817
        %v5006 = vunpack.c.l.b16 %v4818
        %v5007 = vunpack.c.l.b16 %v4819
        %v5008 = vunpack.c.h.b16 %v4818
        %v5009 = vunpack.c.h.b16 %v4819
        %v5010 = vunpack.c.l.b16 %v4820
        %v5011 = vunpack.c.l.b16 %v4821
        %v5012 = vunpack.c.h.b16 %v4820
        %v5013 = vunpack.c.h.b16 %v4821
        %v5014 = vpack.c.b16 %v4887, %v4886
        %v5015 = vpack.c.b16 %v4889, %v4888
        %v5016 = vpack.c.b16 %v4891, %v4890
        %v5017 = vpack.c.b16 %v4893, %v4892
        %v5018 = vpack.c.b16 %v4895, %v4894
        %v5019 = vpack.c.b16 %v4897, %v4896
        %v5020 = vpack.c.b16 %v4899, %v4898
        %v5021 = vpack.c.b16 %v4901, %v4900
        %v5022 = vpack.c.b16 %v4903, %v4902
        %v5023 = vpack.c.b16 %v4905, %v4904
        %v5024 = vpack.c.b16 %v4907, %v4906
        %v5025 = vpack.c.b16 %v4909, %v4908
        %v5026 = vpack.c.b16 %v4911, %v4910
        %v5027 = vpack.c.b16 %v4913, %v4912
        %v5028 = vpack.c.b16 %v4915, %v4914
        %v5029 = vpack.c.b16 %v4917, %v4916
        %v5030 = vpack.c.b16 %v4919, %v4918
        %v5031 = vpack.c.b16 %v4921, %v4920
        %v5032 = vpack.c.b16 %v4923, %v4922
        %v5033 = vpack.c.b16 %v4925, %v4924
        %v5034 = vpack.c.b16 %v4927, %v4926
        %v5035 = vpack.c.b16 %v4929, %v4928
        %v5036 = vpack.c.b16 %v4931, %v4930
        %v5037 = vpack.c.b16 %v4933, %v4932
        %v5038 = vpack.c.b16 %v4935, %v4934
        %v5039 = vpack.c.b16 %v4937, %v4936
        %v5040 = vpack.c.b16 %v4939, %v4938
        %v5041 = vpack.c.b16 %v4941, %v4940
        %v5042 = vpack.c.b16 %v4943, %v4942
        %v5043 = vpack.c.b16 %v4945, %v4944
        %v5044 = vpack.c.b16 %v4947, %v4946
        %v5045 = vpack.c.b16 %v4949, %v4948
        %v5046 = vpack.c.b16 %v4951, %v4950
        %v5047 = vpack.c.b16 %v4953, %v4952
        %v5048 = vpack.c.b16 %v4955, %v4954
        %v5049 = vpack.c.b16 %v4957, %v4956
        %v5050 = vpack.c.b16 %v4959, %v4958
        %v5051 = vpack.c.b16 %v4961, %v4960
        %v5052 = vpack.c.b16 %v4963, %v4962
        %v5053 = vpack.c.b16 %v4965, %v4964
        %v5054 = vpack.c.b16 %v4967, %v4966
        %v5055 = vpack.c.b16 %v4969, %v4968
        %v5056 = vpack.c.b16 %v4971, %v4970
        %v5057 = vpack.c.b16 %v4973, %v4972
        %v5058 = vpack.c.b16 %v4975, %v4974
        %v5059 = vpack.c.b16 %v4977, %v4976
        %v5060 = vpack.c.b16 %v4979, %v4978
        %v5061 = vpack.c.b16 %v4981, %v4980
        %v5062 = vpack.c.b16 %v4983, %v4982
        %v5063 = vpack.c.b16 %v4985, %v4984
        %v5064 = vpack.c.b16 %v4987, %v4986
        %v5065 = vpack.c.b16 %v4989, %v4988
        %v5066 = vpack.c.b16 %v4991, %v4990
        %v5067 = vpack.c.b16 %v4993, %v4992
        %v5068 = vpack.c.b16 %v4995, %v4994
        %v5069 = vpack.c.b16 %v4997, %v4996
        %v5070 = vpack.c.b16 %v4999, %v4998
        %v5071 = vpack.c.b16 %v5001, %v5000
        %v5072 = vpack.c.b16 %v5003, %v5002
        %v5073 = vpack.c.b16 %v5005, %v5004
        %v5074 = vpack.c.b16 %v5007, %v5006
        %v5075 = vpack.c.b16 %v5009, %v5008
        %v5076 = vpack.c.b16 %v5011, %v5010
        %v5077 = vpack.c.b16 %v5013, %v5012
        %5142 = vst [vmem:[%s514] sm:$0xff] %v5014
        %5143 = vst [vmem:[%s514 + $0x8] sm:$0xff] %v5015
        %5144 = vst [vmem:[%s514 + $0x10] sm:$0xff] %v5016
        %5145 = vst [vmem:[%s514 + $0x18] sm:$0xff] %v5017
        %5146 = vst [vmem:[%s514 + $0x20] sm:$0xff] %v5018
        %5147 = vst [vmem:[%s514 + $0x28] sm:$0xff] %v5019
        %5148 = vst [vmem:[%s514 + $0x30] sm:$0xff] %v5020
        %5149 = vst [vmem:[%s514 + $0x38] sm:$0xff] %v5021
        %5150 = vst [vmem:[%s514 + $0x40] sm:$0xff] %v5022
        %5151 = vst [vmem:[%s514 + $0x48] sm:$0xff] %v5023
        %5152 = vst [vmem:[%s514 + $0x50] sm:$0xff] %v5024
        %5153 = vst [vmem:[%s514 + $0x58] sm:$0xff] %v5025
        %5154 = vst [vmem:[%s514 + $0x60] sm:$0xff] %v5026
        %5155 = vst [vmem:[%s514 + $0x68] sm:$0xff] %v5027
        %5156 = vst [vmem:[%s514 + $0x70] sm:$0xff] %v5028
        %5157 = vst [vmem:[%s514 + $0x78] sm:$0xff] %v5029
        %5158 = vst [vmem:[%s514 + $0x80] sm:$0xff] %v5030
        %5159 = vst [vmem:[%s514 + $0x88] sm:$0xff] %v5031
        %5160 = vst [vmem:[%s514 + $0x90] sm:$0xff] %v5032
        %5161 = vst [vmem:[%s514 + $0x98] sm:$0xff] %v5033
        %5162 = vst [vmem:[%s514 + $0xa0] sm:$0xff] %v5034
        %5163 = vst [vmem:[%s514 + $0xa8] sm:$0xff] %v5035
        %5164 = vst [vmem:[%s514 + $0xb0] sm:$0xff] %v5036
        %5165 = vst [vmem:[%s514 + $0xb8] sm:$0xff] %v5037
        %5166 = vst [vmem:[%s514 + $0xc0] sm:$0xff] %v5038
        %5167 = vst [vmem:[%s514 + $0xc8] sm:$0xff] %v5039
        %5168 = vst [vmem:[%s514 + $0xd0] sm:$0xff] %v5040
        %5169 = vst [vmem:[%s514 + $0xd8] sm:$0xff] %v5041
        %5170 = vst [vmem:[%s514 + $0xe0] sm:$0xff] %v5042
        %5171 = vst [vmem:[%s514 + $0xe8] sm:$0xff] %v5043
        %5172 = vst [vmem:[%s514 + $0xf0] sm:$0xff] %v5044
        %5173 = vst [vmem:[%s514 + $0xf8] sm:$0xff] %v5045
        %5174 = vst [vmem:[%s514 + $0x100] sm:$0xff] %v5046
        %5175 = vst [vmem:[%s514 + $0x108] sm:$0xff] %v5047
        %5176 = vst [vmem:[%s514 + $0x110] sm:$0xff] %v5048
        %5177 = vst [vmem:[%s514 + $0x118] sm:$0xff] %v5049
        %5178 = vst [vmem:[%s514 + $0x120] sm:$0xff] %v5050
        %5179 = vst [vmem:[%s514 + $0x128] sm:$0xff] %v5051
        %5180 = vst [vmem:[%s514 + $0x130] sm:$0xff] %v5052
        %5181 = vst [vmem:[%s514 + $0x138] sm:$0xff] %v5053
        %5182 = vst [vmem:[%s514 + $0x140] sm:$0xff] %v5054
        %5183 = vst [vmem:[%s514 + $0x148] sm:$0xff] %v5055
        %5184 = vst [vmem:[%s514 + $0x150] sm:$0xff] %v5056
        %5185 = vst [vmem:[%s514 + $0x158] sm:$0xff] %v5057
        %5186 = vst [vmem:[%s514 + $0x160] sm:$0xff] %v5058
        %5187 = vst [vmem:[%s514 + $0x168] sm:$0xff] %v5059
        %5188 = vst [vmem:[%s514 + $0x170] sm:$0xff] %v5060
        %5189 = vst [vmem:[%s514 + $0x178] sm:$0xff] %v5061
        %5190 = vst [vmem:[%s514 + $0x180] sm:$0xff] %v5062
        %5191 = vst [vmem:[%s514 + $0x188] sm:$0xff] %v5063
        %5192 = vst [vmem:[%s514 + $0x190] sm:$0xff] %v5064
        %5193 = vst [vmem:[%s514 + $0x198] sm:$0xff] %v5065
        %5194 = vst [vmem:[%s514 + $0x1a0] sm:$0xff] %v5066
        %5195 = vst [vmem:[%s514 + $0x1a8] sm:$0xff] %v5067
        %5196 = vst [vmem:[%s514 + $0x1b0] sm:$0xff] %v5068
        %5197 = vst [vmem:[%s514 + $0x1b8] sm:$0xff] %v5069
        %5198 = vst [vmem:[%s514 + $0x1c0] sm:$0xff] %v5070
        %5199 = vst [vmem:[%s514 + $0x1c8] sm:$0xff] %v5071
        %5200 = vst [vmem:[%s514 + $0x1d0] sm:$0xff] %v5072
        %5201 = vst [vmem:[%s514 + $0x1d8] sm:$0xff] %v5073
        %5202 = vst [vmem:[%s514 + $0x1e0] sm:$0xff] %v5074
        %5203 = vst [vmem:[%s514 + $0x1e8] sm:$0xff] %v5075
        %5204 = vst [vmem:[%s514 + $0x1f0] sm:$0xff] %v5076
        %5205 = vst [vmem:[%s514 + $0x1f8] sm:$0xff] %v5077
        %vm5206 = vcmask 130048
        %5207 = vst.msk [vmem:[%s534] sm:$0xff] %vm5206, %v1648
        %5208 = vst.msk [vmem:[%s534 + $0x8] sm:$0xff] %vm5206, %v1651
        %5209 = vst.msk [vmem:[%s534 + $0x10] sm:$0xff] %vm5206, %v1656
        %5210 = vst.msk [vmem:[%s534 + $0x18] sm:$0xff] %vm5206, %v1659
        %5211 = vst.msk [vmem:[%s534 + $0x20] sm:$0xff] %vm5206, %v1664
        %5212 = vst.msk [vmem:[%s534 + $0x28] sm:$0xff] %vm5206, %v1667
        %5213 = vst.msk [vmem:[%s534 + $0x30] sm:$0xff] %vm5206, %v1672
        %5214 = vst.msk [vmem:[%s534 + $0x38] sm:$0xff] %vm5206, %v1675
        %5215 = vst.msk [vmem:[%s534 + $0x40] sm:$0xff] %vm5206, %v1680
        %5216 = vst.msk [vmem:[%s534 + $0x48] sm:$0xff] %vm5206, %v1683
        %5217 = vst.msk [vmem:[%s534 + $0x50] sm:$0xff] %vm5206, %v1688
        %5218 = vst.msk [vmem:[%s534 + $0x58] sm:$0xff] %vm5206, %v1691
        %5219 = vst.msk [vmem:[%s534 + $0x60] sm:$0xff] %vm5206, %v1696
        %5220 = vst.msk [vmem:[%s534 + $0x68] sm:$0xff] %vm5206, %v1699
        %5221 = vst.msk [vmem:[%s534 + $0x70] sm:$0xff] %vm5206, %v1704
        %5222 = vst.msk [vmem:[%s534 + $0x78] sm:$0xff] %vm5206, %v1707
        %5223 = vst.msk [vmem:[%s534 + $0x80] sm:$0xff] %vm5206, %v1712
        %5224 = vst.msk [vmem:[%s534 + $0x88] sm:$0xff] %vm5206, %v1715
        %5225 = vst.msk [vmem:[%s534 + $0x90] sm:$0xff] %vm5206, %v1720
        %5226 = vst.msk [vmem:[%s534 + $0x98] sm:$0xff] %vm5206, %v1723
        %5227 = vst.msk [vmem:[%s534 + $0xa0] sm:$0xff] %vm5206, %v1728
        %5228 = vst.msk [vmem:[%s534 + $0xa8] sm:$0xff] %vm5206, %v1731
        %5229 = vst.msk [vmem:[%s534 + $0xb0] sm:$0xff] %vm5206, %v1736
        %5230 = vst.msk [vmem:[%s534 + $0xb8] sm:$0xff] %vm5206, %v1739
        %5231 = vst.msk [vmem:[%s534 + $0xc0] sm:$0xff] %vm5206, %v1744
        %5232 = vst.msk [vmem:[%s534 + $0xc8] sm:$0xff] %vm5206, %v1747
        %5233 = vst.msk [vmem:[%s534 + $0xd0] sm:$0xff] %vm5206, %v1752
        %5234 = vst.msk [vmem:[%s534 + $0xd8] sm:$0xff] %vm5206, %v1755
        %5235 = vst.msk [vmem:[%s534 + $0xe0] sm:$0xff] %vm5206, %v1760
        %5236 = vst.msk [vmem:[%s534 + $0xe8] sm:$0xff] %vm5206, %v1763
        %5237 = vst.msk [vmem:[%s534 + $0xf0] sm:$0xff] %vm5206, %v1768
        %5238 = vst.msk [vmem:[%s534 + $0xf8] sm:$0xff] %vm5206, %v1771
        %5239 = vst.msk [vmem:[%s534 + $0x100] sm:$0xff] %vm5206, %v1776
        %5240 = vst.msk [vmem:[%s534 + $0x108] sm:$0xff] %vm5206, %v1779
        %5241 = vst.msk [vmem:[%s534 + $0x110] sm:$0xff] %vm5206, %v1784
        %5242 = vst.msk [vmem:[%s534 + $0x118] sm:$0xff] %vm5206, %v1787
        %5243 = vst.msk [vmem:[%s534 + $0x120] sm:$0xff] %vm5206, %v1792
        %5244 = vst.msk [vmem:[%s534 + $0x128] sm:$0xff] %vm5206, %v1795
        %5245 = vst.msk [vmem:[%s534 + $0x130] sm:$0xff] %vm5206, %v1800
        %5246 = vst.msk [vmem:[%s534 + $0x138] sm:$0xff] %vm5206, %v1803
        %5247 = vst.msk [vmem:[%s534 + $0x140] sm:$0xff] %vm5206, %v1808
        %5248 = vst.msk [vmem:[%s534 + $0x148] sm:$0xff] %vm5206, %v1811
        %5249 = vst.msk [vmem:[%s534 + $0x150] sm:$0xff] %vm5206, %v1816
        %5250 = vst.msk [vmem:[%s534 + $0x158] sm:$0xff] %vm5206, %v1819
        %5251 = vst.msk [vmem:[%s534 + $0x160] sm:$0xff] %vm5206, %v1824
        %5252 = vst.msk [vmem:[%s534 + $0x168] sm:$0xff] %vm5206, %v1827
        %5253 = vst.msk [vmem:[%s534 + $0x170] sm:$0xff] %vm5206, %v1832
        %5254 = vst.msk [vmem:[%s534 + $0x178] sm:$0xff] %vm5206, %v1835
        %5255 = vst.msk [vmem:[%s534 + $0x180] sm:$0xff] %vm5206, %v1840
        %5256 = vst.msk [vmem:[%s534 + $0x188] sm:$0xff] %vm5206, %v1843
        %5257 = vst.msk [vmem:[%s534 + $0x190] sm:$0xff] %vm5206, %v1848
        %5258 = vst.msk [vmem:[%s534 + $0x198] sm:$0xff] %vm5206, %v1851
        %5259 = vst.msk [vmem:[%s534 + $0x1a0] sm:$0xff] %vm5206, %v1856
        %5260 = vst.msk [vmem:[%s534 + $0x1a8] sm:$0xff] %vm5206, %v1859
        %5261 = vst.msk [vmem:[%s534 + $0x1b0] sm:$0xff] %vm5206, %v1864
        %5262 = vst.msk [vmem:[%s534 + $0x1b8] sm:$0xff] %vm5206, %v1867
        %5263 = vst.msk [vmem:[%s534 + $0x1c0] sm:$0xff] %vm5206, %v1872
        %5264 = vst.msk [vmem:[%s534 + $0x1c8] sm:$0xff] %vm5206, %v1875
        %5265 = vst.msk [vmem:[%s534 + $0x1d0] sm:$0xff] %vm5206, %v1880
        %5266 = vst.msk [vmem:[%s534 + $0x1d8] sm:$0xff] %vm5206, %v1883
        %5267 = vst.msk [vmem:[%s534 + $0x1e0] sm:$0xff] %vm5206, %v1888
        %5268 = vst.msk [vmem:[%s534 + $0x1e8] sm:$0xff] %vm5206, %v1891
        %5269 = vst.msk [vmem:[%s534 + $0x1f0] sm:$0xff] %vm5206, %v1896
        %5270 = vst.msk [vmem:[%s534 + $0x1f8] sm:$0xff] %vm5206, %v1899
        %s5271 = sand.u32 %s261, 1
        %s5272 = scalar_lea.sflag [#allocation4], %s5271
        %s5273 = sand.u32 %s261, 1
        %s5274 = smul.addr %s5273, 512
        %s5275 = scalar_lea.vmem [#allocation16], %s5274
        %s5276 = smul.u32 64, %s33
        %p5277 = scmp.lt.s32.totalorder %s5276, 255
        %s5278 = scalar_select %p5277, %s5276, 255
        %s5279 = smul.addr %s5278, 8
        %s5280 = scalar_lea.vmem %s11, %s5279
        // Predicated region
        $region93: #{tpu_custom_call.1} parent=59 // pred_check
          %p5281 = pneg %p271
        $region94: #{tpu_custom_call.1} parent=59 // pred_check_branch
          %5283 = sbr.rel (%p5281) target = $region96
        $region95: #{tpu_custom_call.1} parent=59 // pred_region
          %s5284 = smul.u32 64, %s33
          %s5286 = ssub.s32 8192, 8192
          %5287 = vsyncadd %s5272, %s5286
          %s5288 = smul.addr %s5284, 2
          %s5289 = smul.addr %s5288, 64
          %s5290 = scalar_lea.hbm %s10, %s5289
          %s5291 = sshll.u32 %s5275, 4
          %s5292 = int_to_ptr.vmem [resolvable:$true] %s5291
          %5297 = dma.vmem_to_hbm [thread:$0]  %s5292, 8192, %s5290, %s5272, 128, 128, 8
        $region96: #{tpu_custom_call.1} parent=59 // pred_fallthru
          _
        // Predicated region
        $region97: #{tpu_custom_call.1} parent=59 // pred_check
          %p5298 = pneg %p297
        $region98: #{tpu_custom_call.1} parent=59 // pred_check_branch
          %5300 = sbr.rel (%p5298) target = $region100
        $region99: #{tpu_custom_call.1} parent=59 // pred_region
          %s5301 = smul.u32 64, %s33
        $region100: #{tpu_custom_call.1} parent=59 // pred_fallthru
          _
      $region60: #{tpu_custom_call.1} parent=5 // pred_fallthru
        _
      %p5302 = scmp.le.s32.totalorder 2, %s28
      // Predicated region
      $region101: #{tpu_custom_call.1} parent=5 // pred_check
        %p5303 = pneg %p5302
      $region102: #{tpu_custom_call.1} parent=5 // pred_check_branch
        %5305 = sbr.rel (%p5303) target = $region104
      $region103: #{tpu_custom_call.1} parent=5 // pred_region
        %s5306 = ssub.s32 %s28, 2
        // Predicated region
        $region105: #{tpu_custom_call.1} parent=103 // pred_check
          %p5307 = pneg %p277
        $region106: #{tpu_custom_call.1} parent=103 // pred_check_branch
          %5309 = sbr.rel (%p5307) target = $region108
        $region107: #{tpu_custom_call.1} parent=103 // pred_region
          %s5310 = sand.u32 %s262, 1
          %s5311 = scalar_lea.sflag [#allocation4], %s5310
          %s5312 = sand.u32 %s262, 1
          %s5313 = smul.addr %s5312, 512
          %s5314 = scalar_lea.vmem [#allocation16], %s5313
          %5315 = dma.done %s5311, 8192
        $region108: #{tpu_custom_call.1} parent=103 // pred_fallthru
          _
        // Predicated region
        $region109: #{tpu_custom_call.1} parent=103 // pred_check
          %p5316 = pneg %p303
        $region110: #{tpu_custom_call.1} parent=103 // pred_check_branch
          %5318 = sbr.rel (%p5316) target = $region112
        $region111: #{tpu_custom_call.1} parent=103 // pred_region
          %s5319 = smul.u32 64, %s34
          %p5320 = scmp.lt.s32.totalorder %s5319, 255
          %s5321 = scalar_select %p5320, %s5319, 255
          %s5322 = smul.addr %s5321, 8
          %s5323 = scalar_lea.vmem %s11, %s5322
        $region112: #{tpu_custom_call.1} parent=103 // pred_fallthru
          _
      $region104: #{tpu_custom_call.1} parent=5 // pred_fallthru
        _
    $region6: #{tpu_custom_call.1} parent=1 // loop_footer
      %s32 = sadd.s32 1, %s28
    $region7: #{tpu_custom_call.1} parent=1 // loop_footer_branch
      %27 = sbr.rel target = $region3
    $region8: #{tpu_custom_call.1} parent=1 // loop_exit
      _
    %5324 = vsyncpa [#allocation3], 1
    %s5325 = scalar_lea.sflag [#allocation3], 1
    %5326 = vsyncpa %s5325, 1
    %5327 = vsyncpa [#allocation6], 1
    %5328 = vsyncpa [#allocation9], 1
    %5329 = vsyncpa [#allocation12], 1
    %5330 = vsyncpa [#allocation15], 1
    %5331 = vsyncpa [#allocation4], 1
    %s5332 = scalar_lea.sflag [#allocation4], 1
    %5333 = vsyncpa %s5332, 1

</llo_original>
